<compile_context>
chip_gen: v7x
topology: tpu7x:2x2x1
jax: 0.10.0
libtpu: 0.0.40
codegen_flags: <defaults>
</compile_context>

<pallas_src>
import math
from functools import partial

import jax
import jax.numpy as jnp
from jax.experimental import pallas as pl
from jax.experimental.pallas import tpu as pltpu


# ---------------------------------------------------------------------------
# Fused forward kernel (one grid step == one batch element, full sequence)
# ---------------------------------------------------------------------------

def _layer_norm(x, gamma, beta, eps=1e-5):
    mu = jnp.mean(x, axis=-1, keepdims=True)
    var = jnp.mean((x - mu) ** 2, axis=-1, keepdims=True)
    return (x - mu) * jax.lax.rsqrt(var + eps) * gamma + beta


def _mm(a, w):
    # bf16 operands on the MXU, f32 accumulation.
    return jnp.dot(a.astype(jnp.bfloat16), w.astype(jnp.bfloat16),
                   preferred_element_type=jnp.float32)


def _mm_nt(a, b):
    # a (m, d) contracted with b (n, d) over d -> (m, n), no explicit transpose.
    return jax.lax.dot_general(
        a.astype(jnp.bfloat16), b.astype(jnp.bfloat16),
        (((1,), (1,)), ((), ())),
        preferred_element_type=jnp.float32)


def fused_forward_kernel(x_ref, pe_ref, w_in_ref, b_in_ref,
                         wqkv_ref, bqkv_ref, wo_ref, bo_ref, g1_ref, be1_ref,
                         wpg_ref, bpg_ref, wfoc_ref, wfos_ref, wfog_ref,
                         bfo_ref, g2_ref, be2_ref,
                         w_out_ref, b_out_ref, o_ref,
                         *, nhead, num_layers, seq, p_dim):
    d_model = pe_ref.shape[1]
    hd = d_model // nhead
    scale = 1.0 / math.sqrt(hd)

    # ---- input_proj + positional encoding (one batch element: (S, in_dim)) ----
    h = _mm(x_ref[...], w_in_ref[...]) + b_in_ref[...] + pe_ref[...]   # (S, D) f32

    # Static unroll over encoder layers; every weight slice is VMEM-resident.
    for l in range(num_layers):
        # ---------------- multi-head self attention ----------------
        qkv = _mm(h, wqkv_ref[l]) + bqkv_ref[l]        # (S, 3D) fused QKV matmul
        wo_l = wo_ref[l]                               # (H, hd, D)

        attn = jnp.zeros((seq, d_model), jnp.float32)
        for hh in range(nhead):                        # static unroll over heads
            q_h = qkv[:, hh * hd:(hh + 1) * hd]
            k_h = qkv[:, d_model + hh * hd:d_model + (hh + 1) * hd]
            v_h = qkv[:, 2 * d_model + hh * hd:2 * d_model + (hh + 1) * hd]

            sc = _mm_nt(q_h, k_h) * scale              # (S, S) f32
            sc = sc - jnp.max(sc, axis=-1, keepdims=True)
            p = jnp.exp(sc)
            p = p * pl.reciprocal(jnp.sum(p, axis=-1, keepdims=True), approx=True)

            ctx_h = _mm(p, v_h)                        # (S, hd)
            # Accumulate through the per-head slice of the output projection
            # instead of concatenating heads along the lane axis.
            attn = attn + _mm(ctx_h, wo_l[hh])
        attn = attn + bo_ref[l]

        h1 = _layer_norm(h + attn, g1_ref[l], be1_ref[l])

        # ---------------- FAN phase-offset feed-forward ----------------
        pg = _mm(h1, wpg_ref[l]) + bpg_ref[l]          # (S, p_dim + g_dim) fused
        hp = pg[:, :p_dim]
        hg = pg[:, p_dim:]
        fan = (_mm(jnp.cos(hp), wfoc_ref[l])
               + _mm(jnp.sin(hp), wfos_ref[l])
               + _mm(jnp.maximum(hg, 0.0), wfog_ref[l])
               + bfo_ref[l])                           # split-weight accumulation

        h = _layer_norm(h1 + fan, g2_ref[l], be2_ref[l])

    # ---- last time step + output projection (fused in-kernel) ----
    last = h[seq - 1:seq, :]                           # (1, D)
    out = _mm(last, w_out_ref[...]) + b_out_ref[...]   # (1, horizon*output_dim)
    o_ref[...] = out.reshape(o_ref.shape)


# ---------------------------------------------------------------------------
# Wrapper: one pallas_call for the whole forward pass
# ---------------------------------------------------------------------------

def _full_spec(arr):
    nd = arr.ndim
    return pl.BlockSpec(arr.shape, lambda b, _nd=nd: (0,) * _nd)


def forward(x, packed, *, nhead, horizon, output_dim):
    B, S, in_dim = x.shape
    d_model = packed['pe'].shape[1]
    num_layers = packed['wqkv'].shape[0]
    p_dim = packed['wfo_c'].shape[1]
    HO = horizon * output_dim

    x2 = x.reshape(B * S, in_dim)          # 2-D activations, batch-major rows
    pe = packed['pe'][:S]                  # (S, D)

    weight_args = (packed['w_in'], packed['b_in'],
                   packed['wqkv'], packed['bqkv'], packed['wo'], packed['bo'],
                   packed['g1'], packed['be1'],
                   packed['wpg'], packed['bpg'],
                   packed['wfo_c'], packed['wfo_s'], packed['wfo_g'],
                   packed['bfo'], packed['g2'], packed['be2'],
                   packed['w_out'], packed['b_out'])

    in_specs = ([pl.BlockSpec((S, in_dim), lambda b: (b, 0)),   # this batch's rows
                 _full_spec(pe)]
                + [_full_spec(a) for a in weight_args])

    out = pl.pallas_call(
        partial(fused_forward_kernel, nhead=nhead, num_layers=num_layers,
                seq=S, p_dim=p_dim),
        grid=(B,),
        out_shape=jax.ShapeDtypeStruct((B, 1, HO), jnp.float32),
        in_specs=in_specs,
        out_specs=pl.BlockSpec((1, 1, HO), lambda b: (b, 0, 0)),
        compiler_params=pltpu.CompilerParams(
            dimension_semantics=("parallel",)),
    )(x2, pe, *weight_args)

    return out.reshape(B, horizon, output_dim)


# ---------------------------------------------------------------------------
# Parameter init (natural PyTorch-like layout) + packing for the fused kernel
# ---------------------------------------------------------------------------

def _linear(key, fan_in, fan_out):
    bound = 1.0 / math.sqrt(fan_in)
    kw, kb = jax.random.split(key)
    w = jax.random.uniform(kw, (fan_in, fan_out), jnp.float32, -bound, bound)
    b = jax.random.uniform(kb, (1, fan_out), jnp.float32, -bound, bound)
    return w, b


def _positional_encoding(max_len, d_model):
    pos = jnp.arange(max_len, dtype=jnp.float32)[:, None]
    div = jnp.exp(jnp.arange(0, d_model, 2, dtype=jnp.float32)
                  * (-math.log(10000.0) / d_model))
    ang = pos * div
    pe = jnp.zeros((max_len, d_model), jnp.float32)
    pe = pe.at[:, 0::2].set(jnp.sin(ang))
    pe = pe.at[:, 1::2].set(jnp.cos(ang))
    return pe


def init_params(key, *, input_dim, d_model, nhead, fan_dim, num_layers,
                horizon, output_dim, max_len=64):
    keys = iter(jax.random.split(key, 8 + 16 * num_layers))
    p_dim = fan_dim // 4
    g_dim = fan_dim - 2 * p_dim

    params = {}
    params['w_in'], params['b_in'] = _linear(next(keys), input_dim, d_model)
    params['pe'] = _positional_encoding(max_len, d_model)
    params['w_out'], params['b_out'] = _linear(next(keys), d_model,
                                               output_dim * horizon)
    layers = []
    for _ in range(num_layers):
        lp = {}
        lp['wq'], lp['bq'] = _linear(next(keys), d_model, d_model)
        lp['wk'], lp['bk'] = _linear(next(keys), d_model, d_model)
        lp['wv'], lp['bv'] = _linear(next(keys), d_model, d_model)
        lp['wo'], lp['bo'] = _linear(next(keys), d_model, d_model)
        lp['g1'] = jnp.ones((1, d_model), jnp.float32)
        lp['be1'] = jnp.zeros((1, d_model), jnp.float32)
        # FAN phase-offset layer (reconstructed; see TODO at top of file)
        lp['wp'], _ = _linear(next(keys), d_model, p_dim)
        lp['ph'] = 0.1 * jax.random.normal(next(keys), (1, p_dim), jnp.float32)
        lp['wg'], lp['bg'] = _linear(next(keys), d_model, g_dim)
        lp['wfo'], lp['bfo'] = _linear(next(keys), fan_dim, d_model)
        lp['g2'] = jnp.ones((1, d_model), jnp.float32)
        lp['be2'] = jnp.zeros((1, d_model), jnp.float32)
        layers.append(lp)
    params['layers'] = layers
    return params


def pack_params(params, *, nhead, fan_dim, compute_dtype=jnp.bfloat16):
    """Stack per-layer weights, fuse QKV / wp+wg, split wfo, cast matmul
    weights to the MXU compute dtype (biases / LN params stay f32)."""
    d_model = params['w_in'].shape[1]
    hd = d_model // nhead
    p_dim = fan_dim // 4
    L = params['layers']

    def stk(name):
        return jnp.stack([lp[name] for lp in L])

    packed = {
        'pe': params['pe'],
        'w_in': params['w_in'].astype(compute_dtype),
        'b_in': params['b_in'],
        'w_out': params['w_out'].astype(compute_dtype),
        'b_out': params['b_out'],
        # fused QKV projection: (Lyr, D, 3D)
        'wqkv': jnp.stack([jnp.concatenate([lp['wq'], lp['wk'], lp['wv']], axis=1)
                           for lp in L]).astype(compute_dtype),
        'bqkv': jnp.stack([jnp.concatenate([lp['bq'], lp['bk'], lp['bv']], axis=1)
                           for lp in L]),
        # attention out-proj split per head along its input rows: (Lyr, H, hd, D)
        'wo': jnp.stack([lp['wo'].reshape(nhead, hd, d_model)
                         for lp in L]).astype(compute_dtype),
        'bo': stk('bo'),
        'g1': stk('g1'), 'be1': stk('be1'),
        # fused FAN input projection (wp | wg): (Lyr, D, p+g)
        'wpg': jnp.stack([jnp.concatenate([lp['wp'], lp['wg']], axis=1)
                          for lp in L]).astype(compute_dtype),
        'bpg': jnp.stack([jnp.concatenate([lp['ph'], lp['bg']], axis=1)
                          for lp in L]),
        # FAN output projection split into cos / sin / gate row blocks
        'wfo_c': jnp.stack([lp['wfo'][:p_dim] for lp in L]).astype(compute_dtype),
        'wfo_s': jnp.stack([lp['wfo'][p_dim:2 * p_dim]
                            for lp in L]).astype(compute_dtype),
        'wfo_g': jnp.stack([lp['wfo'][2 * p_dim:] for lp in L]).astype(compute_dtype),
        'bfo': stk('bfo'),
        'g2': stk('g2'), 'be2': stk('be2'),
    }
    return packed


# ---------------------------------------------------------------------------

if __name__ == "__main__":
    B, S = 2, 8
    INPUT_DIM, D_MODEL, NHEAD, FAN_DIM = 4, 32, 4, 64
    NUM_LAYERS, HORIZON, OUTPUT_DIM = 2, 4, 1

    key = jax.random.PRNGKey(0)
    kx, kp = jax.random.split(key)
    x = jax.random.normal(kx, (B, S, INPUT_DIM), jnp.float32)

    params = init_params(kp, input_dim=INPUT_DIM, d_model=D_MODEL, nhead=NHEAD,
                         fan_dim=FAN_DIM, num_layers=NUM_LAYERS,
                         horizon=HORIZON, output_dim=OUTPUT_DIM, max_len=64)
    packed = pack_params(params, nhead=NHEAD, fan_dim=FAN_DIM)

    fwd = jax.jit(partial(forward, nhead=NHEAD, horizon=HORIZON,
                          output_dim=OUTPUT_DIM))
    y = fwd(x, packed)
    jax.block_until_ready(y)
    assert y.shape == (B, HORIZON, OUTPUT_DIM)
    assert bool(jnp.all(jnp.isfinite(y)))
    print("KERNEL_OK")
</pallas_src>

<mosaic_0001>
module attributes {stable_mosaic.version = 11 : i64} {
  func.func @fused_forward_kernel(%arg0: i32, %arg1: memref<8x4xf32, #tpu.memory_space<vmem>>, %arg2: memref<8x32xf32, #tpu.memory_space<vmem>>, %arg3: memref<4x32xbf16, #tpu.memory_space<vmem>>, %arg4: memref<1x32xf32, #tpu.memory_space<vmem>>, %arg5: memref<2x32x96xbf16, #tpu.memory_space<vmem>>, %arg6: memref<2x1x96xf32, #tpu.memory_space<vmem>>, %arg7: memref<2x4x8x32xbf16, #tpu.memory_space<vmem>>, %arg8: memref<2x1x32xf32, #tpu.memory_space<vmem>>, %arg9: memref<2x1x32xf32, #tpu.memory_space<vmem>>, %arg10: memref<2x1x32xf32, #tpu.memory_space<vmem>>, %arg11: memref<2x32x48xbf16, #tpu.memory_space<vmem>>, %arg12: memref<2x1x48xf32, #tpu.memory_space<vmem>>, %arg13: memref<2x16x32xbf16, #tpu.memory_space<vmem>>, %arg14: memref<2x16x32xbf16, #tpu.memory_space<vmem>>, %arg15: memref<2x32x32xbf16, #tpu.memory_space<vmem>>, %arg16: memref<2x1x32xf32, #tpu.memory_space<vmem>>, %arg17: memref<2x1x32xf32, #tpu.memory_space<vmem>>, %arg18: memref<2x1x32xf32, #tpu.memory_space<vmem>>, %arg19: memref<32x4xbf16, #tpu.memory_space<vmem>>, %arg20: memref<1x4xf32, #tpu.memory_space<vmem>>, %arg21: memref<1x1x4xf32, #tpu.memory_space<vmem>>) attributes {dimension_semantics = [#tpu.dimension_semantics<parallel>], iteration_bounds = array<i64: 2>, scalar_prefetch = 0 : i64, scratch_operands = 0 : i64, tpu.core_type = #tpu.core_type<tc>, window_params = [{transform_indices = @transform_0, window_bounds = array<i64: 8, 4>}, {pipeline_mode = #tpu.pipeline_mode<synchronous>, transform_indices = @transform_1, window_bounds = array<i64: 8, 32>}, {pipeline_mode = #tpu.pipeline_mode<synchronous>, transform_indices = @transform_2, window_bounds = array<i64: 4, 32>}, {pipeline_mode = #tpu.pipeline_mode<synchronous>, transform_indices = @transform_3, window_bounds = array<i64: 1, 32>}, {pipeline_mode = #tpu.pipeline_mode<synchronous>, transform_indices = @transform_4, window_bounds = array<i64: 2, 32, 96>}, {pipeline_mode = #tpu.pipeline_mode<synchronous>, transform_indices = @transform_5, window_bounds = array<i64: 2, 1, 96>}, {pipeline_mode = #tpu.pipeline_mode<synchronous>, transform_indices = @transform_6, window_bounds = array<i64: 2, 4, 8, 32>}, {pipeline_mode = #tpu.pipeline_mode<synchronous>, transform_indices = @transform_7, window_bounds = array<i64: 2, 1, 32>}, {pipeline_mode = #tpu.pipeline_mode<synchronous>, transform_indices = @transform_8, window_bounds = array<i64: 2, 1, 32>}, {pipeline_mode = #tpu.pipeline_mode<synchronous>, transform_indices = @transform_9, window_bounds = array<i64: 2, 1, 32>}, {pipeline_mode = #tpu.pipeline_mode<synchronous>, transform_indices = @transform_10, window_bounds = array<i64: 2, 32, 48>}, {pipeline_mode = #tpu.pipeline_mode<synchronous>, transform_indices = @transform_11, window_bounds = array<i64: 2, 1, 48>}, {pipeline_mode = #tpu.pipeline_mode<synchronous>, transform_indices = @transform_12, window_bounds = array<i64: 2, 16, 32>}, {pipeline_mode = #tpu.pipeline_mode<synchronous>, transform_indices = @transform_13, window_bounds = array<i64: 2, 16, 32>}, {pipeline_mode = #tpu.pipeline_mode<synchronous>, transform_indices = @transform_14, window_bounds = array<i64: 2, 32, 32>}, {pipeline_mode = #tpu.pipeline_mode<synchronous>, transform_indices = @transform_15, window_bounds = array<i64: 2, 1, 32>}, {pipeline_mode = #tpu.pipeline_mode<synchronous>, transform_indices = @transform_16, window_bounds = array<i64: 2, 1, 32>}, {pipeline_mode = #tpu.pipeline_mode<synchronous>, transform_indices = @transform_17, window_bounds = array<i64: 2, 1, 32>}, {pipeline_mode = #tpu.pipeline_mode<synchronous>, transform_indices = @transform_18, window_bounds = array<i64: 32, 4>}, {pipeline_mode = #tpu.pipeline_mode<synchronous>, transform_indices = @transform_19, window_bounds = array<i64: 1, 4>}, {transform_indices = @transform_20, window_bounds = array<i64: 1, 1, 4>}]} {
    %c0 = arith.constant 0 : index
    %c0_0 = arith.constant 0 : index
    %0 = vector.load %arg1[%c0, %c0_0] : memref<8x4xf32, #tpu.memory_space<vmem>>, vector<8x4xf32>
    %c0_1 = arith.constant 0 : index
    %c0_2 = arith.constant 0 : index
    %1 = vector.load %arg3[%c0_1, %c0_2] : memref<4x32xbf16, #tpu.memory_space<vmem>>, vector<4x32xbf16>
    %2 = arith.truncf %0 : vector<8x4xf32> to vector<8x4xbf16>
    %cst = arith.constant dense<0.000000e+00> : vector<8x32xf32>
    %3 = tpu.matmul %2, %1, %cst {dimension_numbers = #tpu.dot_dimension_numbers<[1], [0], [0], [1], [0, 0, 1, 1], [], []>} : vector<8x4xbf16>, vector<4x32xbf16>, vector<8x32xf32> -> vector<8x32xf32>
    %c0_3 = arith.constant 0 : index
    %c0_4 = arith.constant 0 : index
    %4 = vector.load %arg4[%c0_3, %c0_4] : memref<1x32xf32, #tpu.memory_space<vmem>>, vector<1x32xf32>
    %5 = vector.broadcast %4 : vector<1x32xf32> to vector<8x32xf32>
    %6 = arith.addf %3, %5 : vector<8x32xf32>
    %c0_5 = arith.constant 0 : index
    %c0_6 = arith.constant 0 : index
    %7 = vector.load %arg2[%c0_5, %c0_6] : memref<8x32xf32, #tpu.memory_space<vmem>>, vector<8x32xf32>
    %8 = arith.addf %6, %7 : vector<8x32xf32>
    %c0_7 = arith.constant 0 : index
    %c0_8 = arith.constant 0 : index
    %c0_9 = arith.constant 0 : index
    %9 = vector.load %arg5[%c0_7, %c0_8, %c0_9] : memref<2x32x96xbf16, #tpu.memory_space<vmem>>, vector<1x32x96xbf16>
    %10 = vector.shape_cast %9 : vector<1x32x96xbf16> to vector<32x96xbf16>
    %11 = arith.truncf %8 : vector<8x32xf32> to vector<8x32xbf16>
    %cst_10 = arith.constant dense<0.000000e+00> : vector<8x96xf32>
    %12 = tpu.matmul %11, %10, %cst_10 {dimension_numbers = #tpu.dot_dimension_numbers<[1], [0], [0], [1], [0, 0, 1, 1], [], []>} : vector<8x32xbf16>, vector<32x96xbf16>, vector<8x96xf32> -> vector<8x96xf32>
    %c0_11 = arith.constant 0 : index
    %c0_12 = arith.constant 0 : index
    %c0_13 = arith.constant 0 : index
    %13 = vector.load %arg6[%c0_11, %c0_12, %c0_13] : memref<2x1x96xf32, #tpu.memory_space<vmem>>, vector<1x1x96xf32>
    %14 = vector.shape_cast %13 : vector<1x1x96xf32> to vector<1x96xf32>
    %15 = vector.broadcast %14 : vector<1x96xf32> to vector<8x96xf32>
    %16 = arith.addf %12, %15 : vector<8x96xf32>
    %c0_14 = arith.constant 0 : index
    %c0_15 = arith.constant 0 : index
    %c0_16 = arith.constant 0 : index
    %c0_17 = arith.constant 0 : index
    %17 = vector.load %arg7[%c0_14, %c0_15, %c0_16, %c0_17] : memref<2x4x8x32xbf16, #tpu.memory_space<vmem>>, vector<1x4x8x32xbf16>
    %18 = vector.shape_cast %17 : vector<1x4x8x32xbf16> to vector<4x8x32xbf16>
    %cst_18 = arith.constant 0.000000e+00 : f32
    %19 = vector.broadcast %cst_18 : f32 to vector<8x32xf32>
    %20 = vector.extract_strided_slice %16 {offsets = [0, 0], sizes = [8, 8], strides = [1, 1]} : vector<8x96xf32> to vector<8x8xf32>
    %21 = vector.extract_strided_slice %16 {offsets = [0, 32], sizes = [8, 8], strides = [1, 1]} : vector<8x96xf32> to vector<8x8xf32>
    %22 = vector.extract_strided_slice %16 {offsets = [0, 64], sizes = [8, 8], strides = [1, 1]} : vector<8x96xf32> to vector<8x8xf32>
    %23 = arith.truncf %20 : vector<8x8xf32> to vector<8x8xbf16>
    %24 = arith.truncf %21 : vector<8x8xf32> to vector<8x8xbf16>
    %cst_19 = arith.constant dense<0.000000e+00> : vector<8x8xf32>
    %25 = tpu.matmul %23, %24, %cst_19 {dimension_numbers = #tpu.dot_dimension_numbers<[1], [1], [0], [0], [0, 0, 1, 0], [], []>} : vector<8x8xbf16>, vector<8x8xbf16>, vector<8x8xf32> -> vector<8x8xf32>
    %cst_20 = arith.constant 0.353553385 : f32
    %26 = vector.broadcast %cst_20 : f32 to vector<8x8xf32>
    %27 = arith.mulf %25, %26 : vector<8x8xf32>
    %cst_21 = arith.constant dense<0xFF800000> : vector<8xf32>
    %28 = vector.multi_reduction <maximumf>, %27, %cst_21 [1] : vector<8x8xf32> to vector<8xf32>
    %29 = vector.shape_cast %28 : vector<8xf32> to vector<8x1xf32>
    %30 = vector.broadcast %29 : vector<8x1xf32> to vector<8x8xf32>
    %31 = arith.subf %27, %30 : vector<8x8xf32>
    %32 = math.exp %31 : vector<8x8xf32>
    %cst_22 = arith.constant dense<0.000000e+00> : vector<8xf32>
    %33 = vector.multi_reduction <add>, %32, %cst_22 [1] : vector<8x8xf32> to vector<8xf32>
    %34 = vector.shape_cast %33 : vector<8xf32> to vector<8x1xf32>
    %35 = tpu.reciprocal %34 {approx = true} : vector<8x1xf32> -> vector<8x1xf32>
    %36 = vector.broadcast %35 : vector<8x1xf32> to vector<8x8xf32>
    %37 = arith.mulf %32, %36 : vector<8x8xf32>
    %38 = arith.truncf %37 : vector<8x8xf32> to vector<8x8xbf16>
    %39 = arith.truncf %22 : vector<8x8xf32> to vector<8x8xbf16>
    %cst_23 = arith.constant dense<0.000000e+00> : vector<8x8xf32>
    %40 = tpu.matmul %38, %39, %cst_23 {dimension_numbers = #tpu.dot_dimension_numbers<[1], [0], [0], [1], [0, 0, 1, 1], [], []>} : vector<8x8xbf16>, vector<8x8xbf16>, vector<8x8xf32> -> vector<8x8xf32>
    %41 = vector.extract_strided_slice %18 {offsets = [0, 0, 0], sizes = [1, 8, 32], strides = [1, 1, 1]} : vector<4x8x32xbf16> to vector<1x8x32xbf16>
    %42 = vector.shape_cast %41 : vector<1x8x32xbf16> to vector<8x32xbf16>
    %43 = arith.truncf %40 : vector<8x8xf32> to vector<8x8xbf16>
    %cst_24 = arith.constant dense<0.000000e+00> : vector<8x32xf32>
    %44 = tpu.matmul %43, %42, %cst_24 {dimension_numbers = #tpu.dot_dimension_numbers<[1], [0], [0], [1], [0, 0, 1, 1], [], []>} : vector<8x8xbf16>, vector<8x32xbf16>, vector<8x32xf32> -> vector<8x32xf32>
    %45 = arith.addf %19, %44 : vector<8x32xf32>
    %46 = vector.extract_strided_slice %16 {offsets = [0, 8], sizes = [8, 8], strides = [1, 1]} : vector<8x96xf32> to vector<8x8xf32>
    %47 = vector.extract_strided_slice %16 {offsets = [0, 40], sizes = [8, 8], strides = [1, 1]} : vector<8x96xf32> to vector<8x8xf32>
    %48 = vector.extract_strided_slice %16 {offsets = [0, 72], sizes = [8, 8], strides = [1, 1]} : vector<8x96xf32> to vector<8x8xf32>
    %49 = arith.truncf %46 : vector<8x8xf32> to vector<8x8xbf16>
    %50 = arith.truncf %47 : vector<8x8xf32> to vector<8x8xbf16>
    %cst_25 = arith.constant dense<0.000000e+00> : vector<8x8xf32>
    %51 = tpu.matmul %49, %50, %cst_25 {dimension_numbers = #tpu.dot_dimension_numbers<[1], [1], [0], [0], [0, 0, 1, 0], [], []>} : vector<8x8xbf16>, vector<8x8xbf16>, vector<8x8xf32> -> vector<8x8xf32>
    %cst_26 = arith.constant 0.353553385 : f32
    %52 = vector.broadcast %cst_26 : f32 to vector<8x8xf32>
    %53 = arith.mulf %51, %52 : vector<8x8xf32>
    %cst_27 = arith.constant dense<0xFF800000> : vector<8xf32>
    %54 = vector.multi_reduction <maximumf>, %53, %cst_27 [1] : vector<8x8xf32> to vector<8xf32>
    %55 = vector.shape_cast %54 : vector<8xf32> to vector<8x1xf32>
    %56 = vector.broadcast %55 : vector<8x1xf32> to vector<8x8xf32>
    %57 = arith.subf %53, %56 : vector<8x8xf32>
    %58 = math.exp %57 : vector<8x8xf32>
    %cst_28 = arith.constant dense<0.000000e+00> : vector<8xf32>
    %59 = vector.multi_reduction <add>, %58, %cst_28 [1] : vector<8x8xf32> to vector<8xf32>
    %60 = vector.shape_cast %59 : vector<8xf32> to vector<8x1xf32>
    %61 = tpu.reciprocal %60 {approx = true} : vector<8x1xf32> -> vector<8x1xf32>
    %62 = vector.broadcast %61 : vector<8x1xf32> to vector<8x8xf32>
    %63 = arith.mulf %58, %62 : vector<8x8xf32>
    %64 = arith.truncf %63 : vector<8x8xf32> to vector<8x8xbf16>
    %65 = arith.truncf %48 : vector<8x8xf32> to vector<8x8xbf16>
    %cst_29 = arith.constant dense<0.000000e+00> : vector<8x8xf32>
    %66 = tpu.matmul %64, %65, %cst_29 {dimension_numbers = #tpu.dot_dimension_numbers<[1], [0], [0], [1], [0, 0, 1, 1], [], []>} : vector<8x8xbf16>, vector<8x8xbf16>, vector<8x8xf32> -> vector<8x8xf32>
    %67 = vector.extract_strided_slice %18 {offsets = [1, 0, 0], sizes = [1, 8, 32], strides = [1, 1, 1]} : vector<4x8x32xbf16> to vector<1x8x32xbf16>
    %68 = vector.shape_cast %67 : vector<1x8x32xbf16> to vector<8x32xbf16>
    %69 = arith.truncf %66 : vector<8x8xf32> to vector<8x8xbf16>
    %cst_30 = arith.constant dense<0.000000e+00> : vector<8x32xf32>
    %70 = tpu.matmul %69, %68, %cst_30 {dimension_numbers = #tpu.dot_dimension_numbers<[1], [0], [0], [1], [0, 0, 1, 1], [], []>} : vector<8x8xbf16>, vector<8x32xbf16>, vector<8x32xf32> -> vector<8x32xf32>
    %71 = arith.addf %45, %70 : vector<8x32xf32>
    %72 = vector.extract_strided_slice %16 {offsets = [0, 16], sizes = [8, 8], strides = [1, 1]} : vector<8x96xf32> to vector<8x8xf32>
    %73 = vector.extract_strided_slice %16 {offsets = [0, 48], sizes = [8, 8], strides = [1, 1]} : vector<8x96xf32> to vector<8x8xf32>
    %74 = vector.extract_strided_slice %16 {offsets = [0, 80], sizes = [8, 8], strides = [1, 1]} : vector<8x96xf32> to vector<8x8xf32>
    %75 = arith.truncf %72 : vector<8x8xf32> to vector<8x8xbf16>
    %76 = arith.truncf %73 : vector<8x8xf32> to vector<8x8xbf16>
    %cst_31 = arith.constant dense<0.000000e+00> : vector<8x8xf32>
    %77 = tpu.matmul %75, %76, %cst_31 {dimension_numbers = #tpu.dot_dimension_numbers<[1], [1], [0], [0], [0, 0, 1, 0], [], []>} : vector<8x8xbf16>, vector<8x8xbf16>, vector<8x8xf32> -> vector<8x8xf32>
    %cst_32 = arith.constant 0.353553385 : f32
    %78 = vector.broadcast %cst_32 : f32 to vector<8x8xf32>
    %79 = arith.mulf %77, %78 : vector<8x8xf32>
    %cst_33 = arith.constant dense<0xFF800000> : vector<8xf32>
    %80 = vector.multi_reduction <maximumf>, %79, %cst_33 [1] : vector<8x8xf32> to vector<8xf32>
    %81 = vector.shape_cast %80 : vector<8xf32> to vector<8x1xf32>
    %82 = vector.broadcast %81 : vector<8x1xf32> to vector<8x8xf32>
    %83 = arith.subf %79, %82 : vector<8x8xf32>
    %84 = math.exp %83 : vector<8x8xf32>
    %cst_34 = arith.constant dense<0.000000e+00> : vector<8xf32>
    %85 = vector.multi_reduction <add>, %84, %cst_34 [1] : vector<8x8xf32> to vector<8xf32>
    %86 = vector.shape_cast %85 : vector<8xf32> to vector<8x1xf32>
    %87 = tpu.reciprocal %86 {approx = true} : vector<8x1xf32> -> vector<8x1xf32>
    %88 = vector.broadcast %87 : vector<8x1xf32> to vector<8x8xf32>
    %89 = arith.mulf %84, %88 : vector<8x8xf32>
    %90 = arith.truncf %89 : vector<8x8xf32> to vector<8x8xbf16>
    %91 = arith.truncf %74 : vector<8x8xf32> to vector<8x8xbf16>
    %cst_35 = arith.constant dense<0.000000e+00> : vector<8x8xf32>
    %92 = tpu.matmul %90, %91, %cst_35 {dimension_numbers = #tpu.dot_dimension_numbers<[1], [0], [0], [1], [0, 0, 1, 1], [], []>} : vector<8x8xbf16>, vector<8x8xbf16>, vector<8x8xf32> -> vector<8x8xf32>
    %93 = vector.extract_strided_slice %18 {offsets = [2, 0, 0], sizes = [1, 8, 32], strides = [1, 1, 1]} : vector<4x8x32xbf16> to vector<1x8x32xbf16>
    %94 = vector.shape_cast %93 : vector<1x8x32xbf16> to vector<8x32xbf16>
    %95 = arith.truncf %92 : vector<8x8xf32> to vector<8x8xbf16>
    %cst_36 = arith.constant dense<0.000000e+00> : vector<8x32xf32>
    %96 = tpu.matmul %95, %94, %cst_36 {dimension_numbers = #tpu.dot_dimension_numbers<[1], [0], [0], [1], [0, 0, 1, 1], [], []>} : vector<8x8xbf16>, vector<8x32xbf16>, vector<8x32xf32> -> vector<8x32xf32>
    %97 = arith.addf %71, %96 : vector<8x32xf32>
    %98 = vector.extract_strided_slice %16 {offsets = [0, 24], sizes = [8, 8], strides = [1, 1]} : vector<8x96xf32> to vector<8x8xf32>
    %99 = vector.extract_strided_slice %16 {offsets = [0, 56], sizes = [8, 8], strides = [1, 1]} : vector<8x96xf32> to vector<8x8xf32>
    %100 = vector.extract_strided_slice %16 {offsets = [0, 88], sizes = [8, 8], strides = [1, 1]} : vector<8x96xf32> to vector<8x8xf32>
    %101 = arith.truncf %98 : vector<8x8xf32> to vector<8x8xbf16>
    %102 = arith.truncf %99 : vector<8x8xf32> to vector<8x8xbf16>
    %cst_37 = arith.constant dense<0.000000e+00> : vector<8x8xf32>
    %103 = tpu.matmul %101, %102, %cst_37 {dimension_numbers = #tpu.dot_dimension_numbers<[1], [1], [0], [0], [0, 0, 1, 0], [], []>} : vector<8x8xbf16>, vector<8x8xbf16>, vector<8x8xf32> -> vector<8x8xf32>
    %cst_38 = arith.constant 0.353553385 : f32
    %104 = vector.broadcast %cst_38 : f32 to vector<8x8xf32>
    %105 = arith.mulf %103, %104 : vector<8x8xf32>
    %cst_39 = arith.constant dense<0xFF800000> : vector<8xf32>
    %106 = vector.multi_reduction <maximumf>, %105, %cst_39 [1] : vector<8x8xf32> to vector<8xf32>
    %107 = vector.shape_cast %106 : vector<8xf32> to vector<8x1xf32>
    %108 = vector.broadcast %107 : vector<8x1xf32> to vector<8x8xf32>
    %109 = arith.subf %105, %108 : vector<8x8xf32>
    %110 = math.exp %109 : vector<8x8xf32>
    %cst_40 = arith.constant dense<0.000000e+00> : vector<8xf32>
    %111 = vector.multi_reduction <add>, %110, %cst_40 [1] : vector<8x8xf32> to vector<8xf32>
    %112 = vector.shape_cast %111 : vector<8xf32> to vector<8x1xf32>
    %113 = tpu.reciprocal %112 {approx = true} : vector<8x1xf32> -> vector<8x1xf32>
    %114 = vector.broadcast %113 : vector<8x1xf32> to vector<8x8xf32>
    %115 = arith.mulf %110, %114 : vector<8x8xf32>
    %116 = arith.truncf %115 : vector<8x8xf32> to vector<8x8xbf16>
    %117 = arith.truncf %100 : vector<8x8xf32> to vector<8x8xbf16>
    %cst_41 = arith.constant dense<0.000000e+00> : vector<8x8xf32>
    %118 = tpu.matmul %116, %117, %cst_41 {dimension_numbers = #tpu.dot_dimension_numbers<[1], [0], [0], [1], [0, 0, 1, 1], [], []>} : vector<8x8xbf16>, vector<8x8xbf16>, vector<8x8xf32> -> vector<8x8xf32>
    %119 = vector.extract_strided_slice %18 {offsets = [3, 0, 0], sizes = [1, 8, 32], strides = [1, 1, 1]} : vector<4x8x32xbf16> to vector<1x8x32xbf16>
    %120 = vector.shape_cast %119 : vector<1x8x32xbf16> to vector<8x32xbf16>
    %121 = arith.truncf %118 : vector<8x8xf32> to vector<8x8xbf16>
    %cst_42 = arith.constant dense<0.000000e+00> : vector<8x32xf32>
    %122 = tpu.matmul %121, %120, %cst_42 {dimension_numbers = #tpu.dot_dimension_numbers<[1], [0], [0], [1], [0, 0, 1, 1], [], []>} : vector<8x8xbf16>, vector<8x32xbf16>, vector<8x32xf32> -> vector<8x32xf32>
    %123 = arith.addf %97, %122 : vector<8x32xf32>
    %c0_43 = arith.constant 0 : index
    %c0_44 = arith.constant 0 : index
    %c0_45 = arith.constant 0 : index
    %124 = vector.load %arg8[%c0_43, %c0_44, %c0_45] : memref<2x1x32xf32, #tpu.memory_space<vmem>>, vector<1x1x32xf32>
    %125 = vector.shape_cast %124 : vector<1x1x32xf32> to vector<1x32xf32>
    %126 = vector.broadcast %125 : vector<1x32xf32> to vector<8x32xf32>
    %127 = arith.addf %123, %126 : vector<8x32xf32>
    %128 = arith.addf %8, %127 : vector<8x32xf32>
    %c0_46 = arith.constant 0 : index
    %c0_47 = arith.constant 0 : index
    %c0_48 = arith.constant 0 : index
    %129 = vector.load %arg9[%c0_46, %c0_47, %c0_48] : memref<2x1x32xf32, #tpu.memory_space<vmem>>, vector<1x1x32xf32>
    %130 = vector.shape_cast %129 : vector<1x1x32xf32> to vector<1x32xf32>
    %c0_49 = arith.constant 0 : index
    %c0_50 = arith.constant 0 : index
    %c0_51 = arith.constant 0 : index
    %131 = vector.load %arg10[%c0_49, %c0_50, %c0_51] : memref<2x1x32xf32, #tpu.memory_space<vmem>>, vector<1x1x32xf32>
    %132 = vector.shape_cast %131 : vector<1x1x32xf32> to vector<1x32xf32>
    %cst_52 = arith.constant dense<0.000000e+00> : vector<8xf32>
    %133 = vector.multi_reduction <add>, %128, %cst_52 [1] : vector<8x32xf32> to vector<8xf32>
    %134 = vector.shape_cast %133 : vector<8xf32> to vector<8x1xf32>
    %cst_53 = arith.constant 3.200000e+01 : f32
    %135 = vector.broadcast %cst_53 : f32 to vector<8x1xf32>
    %136 = arith.divf %134, %135 : vector<8x1xf32>
    %137 = vector.broadcast %136 : vector<8x1xf32> to vector<8x32xf32>
    %138 = arith.subf %128, %137 : vector<8x32xf32>
    %139 = arith.mulf %138, %138 : vector<8x32xf32>
    %cst_54 = arith.constant dense<0.000000e+00> : vector<8xf32>
    %140 = vector.multi_reduction <add>, %139, %cst_54 [1] : vector<8x32xf32> to vector<8xf32>
    %141 = vector.shape_cast %140 : vector<8xf32> to vector<8x1xf32>
    %cst_55 = arith.constant 3.200000e+01 : f32
    %142 = vector.broadcast %cst_55 : f32 to vector<8x1xf32>
    %143 = arith.divf %141, %142 : vector<8x1xf32>
    %144 = vector.broadcast %136 : vector<8x1xf32> to vector<8x32xf32>
    %145 = arith.subf %128, %144 : vector<8x32xf32>
    %cst_56 = arith.constant 9.99999974E-6 : f32
    %146 = vector.broadcast %cst_56 : f32 to vector<8x1xf32>
    %147 = arith.addf %143, %146 : vector<8x1xf32>
    %148 = math.rsqrt %147 : vector<8x1xf32>
    %149 = vector.broadcast %148 : vector<8x1xf32> to vector<8x32xf32>
    %150 = arith.mulf %145, %149 : vector<8x32xf32>
    %151 = vector.broadcast %130 : vector<1x32xf32> to vector<8x32xf32>
    %152 = arith.mulf %150, %151 : vector<8x32xf32>
    %153 = vector.broadcast %132 : vector<1x32xf32> to vector<8x32xf32>
    %154 = arith.addf %152, %153 : vector<8x32xf32>
    %c0_57 = arith.constant 0 : index
    %c0_58 = arith.constant 0 : index
    %c0_59 = arith.constant 0 : index
    %155 = vector.load %arg11[%c0_57, %c0_58, %c0_59] : memref<2x32x48xbf16, #tpu.memory_space<vmem>>, vector<1x32x48xbf16>
    %156 = vector.shape_cast %155 : vector<1x32x48xbf16> to vector<32x48xbf16>
    %157 = arith.truncf %154 : vector<8x32xf32> to vector<8x32xbf16>
    %cst_60 = arith.constant dense<0.000000e+00> : vector<8x48xf32>
    %158 = tpu.matmul %157, %156, %cst_60 {dimension_numbers = #tpu.dot_dimension_numbers<[1], [0], [0], [1], [0, 0, 1, 1], [], []>} : vector<8x32xbf16>, vector<32x48xbf16>, vector<8x48xf32> -> vector<8x48xf32>
    %c0_61 = arith.constant 0 : index
    %c0_62 = arith.constant 0 : index
    %c0_63 = arith.constant 0 : index
    %159 = vector.load %arg12[%c0_61, %c0_62, %c0_63] : memref<2x1x48xf32, #tpu.memory_space<vmem>>, vector<1x1x48xf32>
    %160 = vector.shape_cast %159 : vector<1x1x48xf32> to vector<1x48xf32>
    %161 = vector.broadcast %160 : vector<1x48xf32> to vector<8x48xf32>
    %162 = arith.addf %158, %161 : vector<8x48xf32>
    %163 = vector.extract_strided_slice %162 {offsets = [0, 0], sizes = [8, 16], strides = [1, 1]} : vector<8x48xf32> to vector<8x16xf32>
    %164 = vector.extract_strided_slice %162 {offsets = [0, 16], sizes = [8, 32], strides = [1, 1]} : vector<8x48xf32> to vector<8x32xf32>
    %165 = math.cos %163 : vector<8x16xf32>
    %c0_64 = arith.constant 0 : index
    %c0_65 = arith.constant 0 : index
    %c0_66 = arith.constant 0 : index
    %166 = vector.load %arg13[%c0_64, %c0_65, %c0_66] : memref<2x16x32xbf16, #tpu.memory_space<vmem>>, vector<1x16x32xbf16>
    %167 = vector.shape_cast %166 : vector<1x16x32xbf16> to vector<16x32xbf16>
    %168 = arith.truncf %165 : vector<8x16xf32> to vector<8x16xbf16>
    %cst_67 = arith.constant dense<0.000000e+00> : vector<8x32xf32>
    %169 = tpu.matmul %168, %167, %cst_67 {dimension_numbers = #tpu.dot_dimension_numbers<[1], [0], [0], [1], [0, 0, 1, 1], [], []>} : vector<8x16xbf16>, vector<16x32xbf16>, vector<8x32xf32> -> vector<8x32xf32>
    %170 = math.sin %163 : vector<8x16xf32>
    %c0_68 = arith.constant 0 : index
    %c0_69 = arith.constant 0 : index
    %c0_70 = arith.constant 0 : index
    %171 = vector.load %arg14[%c0_68, %c0_69, %c0_70] : memref<2x16x32xbf16, #tpu.memory_space<vmem>>, vector<1x16x32xbf16>
    %172 = vector.shape_cast %171 : vector<1x16x32xbf16> to vector<16x32xbf16>
    %173 = arith.truncf %170 : vector<8x16xf32> to vector<8x16xbf16>
    %cst_71 = arith.constant dense<0.000000e+00> : vector<8x32xf32>
    %174 = tpu.matmul %173, %172, %cst_71 {dimension_numbers = #tpu.dot_dimension_numbers<[1], [0], [0], [1], [0, 0, 1, 1], [], []>} : vector<8x16xbf16>, vector<16x32xbf16>, vector<8x32xf32> -> vector<8x32xf32>
    %175 = arith.addf %169, %174 : vector<8x32xf32>
    %cst_72 = arith.constant 0.000000e+00 : f32
    %176 = vector.broadcast %cst_72 : f32 to vector<8x32xf32>
    %177 = arith.maximumf %164, %176 : vector<8x32xf32>
    %c0_73 = arith.constant 0 : index
    %c0_74 = arith.constant 0 : index
    %c0_75 = arith.constant 0 : index
    %178 = vector.load %arg15[%c0_73, %c0_74, %c0_75] : memref<2x32x32xbf16, #tpu.memory_space<vmem>>, vector<1x32x32xbf16>
    %179 = vector.shape_cast %178 : vector<1x32x32xbf16> to vector<32x32xbf16>
    %180 = arith.truncf %177 : vector<8x32xf32> to vector<8x32xbf16>
    %cst_76 = arith.constant dense<0.000000e+00> : vector<8x32xf32>
    %181 = tpu.matmul %180, %179, %cst_76 {dimension_numbers = #tpu.dot_dimension_numbers<[1], [0], [0], [1], [0, 0, 1, 1], [], []>} : vector<8x32xbf16>, vector<32x32xbf16>, vector<8x32xf32> -> vector<8x32xf32>
    %182 = arith.addf %175, %181 : vector<8x32xf32>
    %c0_77 = arith.constant 0 : index
    %c0_78 = arith.constant 0 : index
    %c0_79 = arith.constant 0 : index
    %183 = vector.load %arg16[%c0_77, %c0_78, %c0_79] : memref<2x1x32xf32, #tpu.memory_space<vmem>>, vector<1x1x32xf32>
    %184 = vector.shape_cast %183 : vector<1x1x32xf32> to vector<1x32xf32>
    %185 = vector.broadcast %184 : vector<1x32xf32> to vector<8x32xf32>
    %186 = arith.addf %182, %185 : vector<8x32xf32>
    %187 = arith.addf %154, %186 : vector<8x32xf32>
    %c0_80 = arith.constant 0 : index
    %c0_81 = arith.constant 0 : index
    %c0_82 = arith.constant 0 : index
    %188 = vector.load %arg17[%c0_80, %c0_81, %c0_82] : memref<2x1x32xf32, #tpu.memory_space<vmem>>, vector<1x1x32xf32>
    %189 = vector.shape_cast %188 : vector<1x1x32xf32> to vector<1x32xf32>
    %c0_83 = arith.constant 0 : index
    %c0_84 = arith.constant 0 : index
    %c0_85 = arith.constant 0 : index
    %190 = vector.load %arg18[%c0_83, %c0_84, %c0_85] : memref<2x1x32xf32, #tpu.memory_space<vmem>>, vector<1x1x32xf32>
    %191 = vector.shape_cast %190 : vector<1x1x32xf32> to vector<1x32xf32>
    %cst_86 = arith.constant dense<0.000000e+00> : vector<8xf32>
    %192 = vector.multi_reduction <add>, %187, %cst_86 [1] : vector<8x32xf32> to vector<8xf32>
    %193 = vector.shape_cast %192 : vector<8xf32> to vector<8x1xf32>
    %cst_87 = arith.constant 3.200000e+01 : f32
    %194 = vector.broadcast %cst_87 : f32 to vector<8x1xf32>
    %195 = arith.divf %193, %194 : vector<8x1xf32>
    %196 = vector.broadcast %195 : vector<8x1xf32> to vector<8x32xf32>
    %197 = arith.subf %187, %196 : vector<8x32xf32>
    %198 = arith.mulf %197, %197 : vector<8x32xf32>
    %cst_88 = arith.constant dense<0.000000e+00> : vector<8xf32>
    %199 = vector.multi_reduction <add>, %198, %cst_88 [1] : vector<8x32xf32> to vector<8xf32>
    %200 = vector.shape_cast %199 : vector<8xf32> to vector<8x1xf32>
    %cst_89 = arith.constant 3.200000e+01 : f32
    %201 = vector.broadcast %cst_89 : f32 to vector<8x1xf32>
    %202 = arith.divf %200, %201 : vector<8x1xf32>
    %203 = vector.broadcast %195 : vector<8x1xf32> to vector<8x32xf32>
    %204 = arith.subf %187, %203 : vector<8x32xf32>
    %cst_90 = arith.constant 9.99999974E-6 : f32
    %205 = vector.broadcast %cst_90 : f32 to vector<8x1xf32>
    %206 = arith.addf %202, %205 : vector<8x1xf32>
    %207 = math.rsqrt %206 : vector<8x1xf32>
    %208 = vector.broadcast %207 : vector<8x1xf32> to vector<8x32xf32>
    %209 = arith.mulf %204, %208 : vector<8x32xf32>
    %210 = vector.broadcast %189 : vector<1x32xf32> to vector<8x32xf32>
    %211 = arith.mulf %209, %210 : vector<8x32xf32>
    %212 = vector.broadcast %191 : vector<1x32xf32> to vector<8x32xf32>
    %213 = arith.addf %211, %212 : vector<8x32xf32>
    %c1 = arith.constant 1 : index
    %c0_91 = arith.constant 0 : index
    %c0_92 = arith.constant 0 : index
    %214 = vector.load %arg5[%c1, %c0_91, %c0_92] : memref<2x32x96xbf16, #tpu.memory_space<vmem>>, vector<1x32x96xbf16>
    %215 = vector.shape_cast %214 : vector<1x32x96xbf16> to vector<32x96xbf16>
    %216 = arith.truncf %213 : vector<8x32xf32> to vector<8x32xbf16>
    %cst_93 = arith.constant dense<0.000000e+00> : vector<8x96xf32>
    %217 = tpu.matmul %216, %215, %cst_93 {dimension_numbers = #tpu.dot_dimension_numbers<[1], [0], [0], [1], [0, 0, 1, 1], [], []>} : vector<8x32xbf16>, vector<32x96xbf16>, vector<8x96xf32> -> vector<8x96xf32>
    %c1_94 = arith.constant 1 : index
    %c0_95 = arith.constant 0 : index
    %c0_96 = arith.constant 0 : index
    %218 = vector.load %arg6[%c1_94, %c0_95, %c0_96] : memref<2x1x96xf32, #tpu.memory_space<vmem>>, vector<1x1x96xf32>
    %219 = vector.shape_cast %218 : vector<1x1x96xf32> to vector<1x96xf32>
    %220 = vector.broadcast %219 : vector<1x96xf32> to vector<8x96xf32>
    %221 = arith.addf %217, %220 : vector<8x96xf32>
    %c1_97 = arith.constant 1 : index
    %c0_98 = arith.constant 0 : index
    %c0_99 = arith.constant 0 : index
    %c0_100 = arith.constant 0 : index
    %222 = vector.load %arg7[%c1_97, %c0_98, %c0_99, %c0_100] : memref<2x4x8x32xbf16, #tpu.memory_space<vmem>>, vector<1x4x8x32xbf16>
    %223 = vector.shape_cast %222 : vector<1x4x8x32xbf16> to vector<4x8x32xbf16>
    %cst_101 = arith.constant 0.000000e+00 : f32
    %224 = vector.broadcast %cst_101 : f32 to vector<8x32xf32>
    %225 = vector.extract_strided_slice %221 {offsets = [0, 0], sizes = [8, 8], strides = [1, 1]} : vector<8x96xf32> to vector<8x8xf32>
    %226 = vector.extract_strided_slice %221 {offsets = [0, 32], sizes = [8, 8], strides = [1, 1]} : vector<8x96xf32> to vector<8x8xf32>
    %227 = vector.extract_strided_slice %221 {offsets = [0, 64], sizes = [8, 8], strides = [1, 1]} : vector<8x96xf32> to vector<8x8xf32>
    %228 = arith.truncf %225 : vector<8x8xf32> to vector<8x8xbf16>
    %229 = arith.truncf %226 : vector<8x8xf32> to vector<8x8xbf16>
    %cst_102 = arith.constant dense<0.000000e+00> : vector<8x8xf32>
    %230 = tpu.matmul %228, %229, %cst_102 {dimension_numbers = #tpu.dot_dimension_numbers<[1], [1], [0], [0], [0, 0, 1, 0], [], []>} : vector<8x8xbf16>, vector<8x8xbf16>, vector<8x8xf32> -> vector<8x8xf32>
    %cst_103 = arith.constant 0.353553385 : f32
    %231 = vector.broadcast %cst_103 : f32 to vector<8x8xf32>
    %232 = arith.mulf %230, %231 : vector<8x8xf32>
    %cst_104 = arith.constant dense<0xFF800000> : vector<8xf32>
    %233 = vector.multi_reduction <maximumf>, %232, %cst_104 [1] : vector<8x8xf32> to vector<8xf32>
    %234 = vector.shape_cast %233 : vector<8xf32> to vector<8x1xf32>
    %235 = vector.broadcast %234 : vector<8x1xf32> to vector<8x8xf32>
    %236 = arith.subf %232, %235 : vector<8x8xf32>
    %237 = math.exp %236 : vector<8x8xf32>
    %cst_105 = arith.constant dense<0.000000e+00> : vector<8xf32>
    %238 = vector.multi_reduction <add>, %237, %cst_105 [1] : vector<8x8xf32> to vector<8xf32>
    %239 = vector.shape_cast %238 : vector<8xf32> to vector<8x1xf32>
    %240 = tpu.reciprocal %239 {approx = true} : vector<8x1xf32> -> vector<8x1xf32>
    %241 = vector.broadcast %240 : vector<8x1xf32> to vector<8x8xf32>
    %242 = arith.mulf %237, %241 : vector<8x8xf32>
    %243 = arith.truncf %242 : vector<8x8xf32> to vector<8x8xbf16>
    %244 = arith.truncf %227 : vector<8x8xf32> to vector<8x8xbf16>
    %cst_106 = arith.constant dense<0.000000e+00> : vector<8x8xf32>
    %245 = tpu.matmul %243, %244, %cst_106 {dimension_numbers = #tpu.dot_dimension_numbers<[1], [0], [0], [1], [0, 0, 1, 1], [], []>} : vector<8x8xbf16>, vector<8x8xbf16>, vector<8x8xf32> -> vector<8x8xf32>
    %246 = vector.extract_strided_slice %223 {offsets = [0, 0, 0], sizes = [1, 8, 32], strides = [1, 1, 1]} : vector<4x8x32xbf16> to vector<1x8x32xbf16>
    %247 = vector.shape_cast %246 : vector<1x8x32xbf16> to vector<8x32xbf16>
    %248 = arith.truncf %245 : vector<8x8xf32> to vector<8x8xbf16>
    %cst_107 = arith.constant dense<0.000000e+00> : vector<8x32xf32>
    %249 = tpu.matmul %248, %247, %cst_107 {dimension_numbers = #tpu.dot_dimension_numbers<[1], [0], [0], [1], [0, 0, 1, 1], [], []>} : vector<8x8xbf16>, vector<8x32xbf16>, vector<8x32xf32> -> vector<8x32xf32>
    %250 = arith.addf %224, %249 : vector<8x32xf32>
    %251 = vector.extract_strided_slice %221 {offsets = [0, 8], sizes = [8, 8], strides = [1, 1]} : vector<8x96xf32> to vector<8x8xf32>
    %252 = vector.extract_strided_slice %221 {offsets = [0, 40], sizes = [8, 8], strides = [1, 1]} : vector<8x96xf32> to vector<8x8xf32>
    %253 = vector.extract_strided_slice %221 {offsets = [0, 72], sizes = [8, 8], strides = [1, 1]} : vector<8x96xf32> to vector<8x8xf32>
    %254 = arith.truncf %251 : vector<8x8xf32> to vector<8x8xbf16>
    %255 = arith.truncf %252 : vector<8x8xf32> to vector<8x8xbf16>
    %cst_108 = arith.constant dense<0.000000e+00> : vector<8x8xf32>
    %256 = tpu.matmul %254, %255, %cst_108 {dimension_numbers = #tpu.dot_dimension_numbers<[1], [1], [0], [0], [0, 0, 1, 0], [], []>} : vector<8x8xbf16>, vector<8x8xbf16>, vector<8x8xf32> -> vector<8x8xf32>
    %cst_109 = arith.constant 0.353553385 : f32
    %257 = vector.broadcast %cst_109 : f32 to vector<8x8xf32>
    %258 = arith.mulf %256, %257 : vector<8x8xf32>
    %cst_110 = arith.constant dense<0xFF800000> : vector<8xf32>
    %259 = vector.multi_reduction <maximumf>, %258, %cst_110 [1] : vector<8x8xf32> to vector<8xf32>
    %260 = vector.shape_cast %259 : vector<8xf32> to vector<8x1xf32>
    %261 = vector.broadcast %260 : vector<8x1xf32> to vector<8x8xf32>
    %262 = arith.subf %258, %261 : vector<8x8xf32>
    %263 = math.exp %262 : vector<8x8xf32>
    %cst_111 = arith.constant dense<0.000000e+00> : vector<8xf32>
    %264 = vector.multi_reduction <add>, %263, %cst_111 [1] : vector<8x8xf32> to vector<8xf32>
    %265 = vector.shape_cast %264 : vector<8xf32> to vector<8x1xf32>
    %266 = tpu.reciprocal %265 {approx = true} : vector<8x1xf32> -> vector<8x1xf32>
    %267 = vector.broadcast %266 : vector<8x1xf32> to vector<8x8xf32>
    %268 = arith.mulf %263, %267 : vector<8x8xf32>
    %269 = arith.truncf %268 : vector<8x8xf32> to vector<8x8xbf16>
    %270 = arith.truncf %253 : vector<8x8xf32> to vector<8x8xbf16>
    %cst_112 = arith.constant dense<0.000000e+00> : vector<8x8xf32>
    %271 = tpu.matmul %269, %270, %cst_112 {dimension_numbers = #tpu.dot_dimension_numbers<[1], [0], [0], [1], [0, 0, 1, 1], [], []>} : vector<8x8xbf16>, vector<8x8xbf16>, vector<8x8xf32> -> vector<8x8xf32>
    %272 = vector.extract_strided_slice %223 {offsets = [1, 0, 0], sizes = [1, 8, 32], strides = [1, 1, 1]} : vector<4x8x32xbf16> to vector<1x8x32xbf16>
    %273 = vector.shape_cast %272 : vector<1x8x32xbf16> to vector<8x32xbf16>
    %274 = arith.truncf %271 : vector<8x8xf32> to vector<8x8xbf16>
    %cst_113 = arith.constant dense<0.000000e+00> : vector<8x32xf32>
    %275 = tpu.matmul %274, %273, %cst_113 {dimension_numbers = #tpu.dot_dimension_numbers<[1], [0], [0], [1], [0, 0, 1, 1], [], []>} : vector<8x8xbf16>, vector<8x32xbf16>, vector<8x32xf32> -> vector<8x32xf32>
    %276 = arith.addf %250, %275 : vector<8x32xf32>
    %277 = vector.extract_strided_slice %221 {offsets = [0, 16], sizes = [8, 8], strides = [1, 1]} : vector<8x96xf32> to vector<8x8xf32>
    %278 = vector.extract_strided_slice %221 {offsets = [0, 48], sizes = [8, 8], strides = [1, 1]} : vector<8x96xf32> to vector<8x8xf32>
    %279 = vector.extract_strided_slice %221 {offsets = [0, 80], sizes = [8, 8], strides = [1, 1]} : vector<8x96xf32> to vector<8x8xf32>
    %280 = arith.truncf %277 : vector<8x8xf32> to vector<8x8xbf16>
    %281 = arith.truncf %278 : vector<8x8xf32> to vector<8x8xbf16>
    %cst_114 = arith.constant dense<0.000000e+00> : vector<8x8xf32>
    %282 = tpu.matmul %280, %281, %cst_114 {dimension_numbers = #tpu.dot_dimension_numbers<[1], [1], [0], [0], [0, 0, 1, 0], [], []>} : vector<8x8xbf16>, vector<8x8xbf16>, vector<8x8xf32> -> vector<8x8xf32>
    %cst_115 = arith.constant 0.353553385 : f32
    %283 = vector.broadcast %cst_115 : f32 to vector<8x8xf32>
    %284 = arith.mulf %282, %283 : vector<8x8xf32>
    %cst_116 = arith.constant dense<0xFF800000> : vector<8xf32>
    %285 = vector.multi_reduction <maximumf>, %284, %cst_116 [1] : vector<8x8xf32> to vector<8xf32>
    %286 = vector.shape_cast %285 : vector<8xf32> to vector<8x1xf32>
    %287 = vector.broadcast %286 : vector<8x1xf32> to vector<8x8xf32>
    %288 = arith.subf %284, %287 : vector<8x8xf32>
    %289 = math.exp %288 : vector<8x8xf32>
    %cst_117 = arith.constant dense<0.000000e+00> : vector<8xf32>
    %290 = vector.multi_reduction <add>, %289, %cst_117 [1] : vector<8x8xf32> to vector<8xf32>
    %291 = vector.shape_cast %290 : vector<8xf32> to vector<8x1xf32>
    %292 = tpu.reciprocal %291 {approx = true} : vector<8x1xf32> -> vector<8x1xf32>
    %293 = vector.broadcast %292 : vector<8x1xf32> to vector<8x8xf32>
    %294 = arith.mulf %289, %293 : vector<8x8xf32>
    %295 = arith.truncf %294 : vector<8x8xf32> to vector<8x8xbf16>
    %296 = arith.truncf %279 : vector<8x8xf32> to vector<8x8xbf16>
    %cst_118 = arith.constant dense<0.000000e+00> : vector<8x8xf32>
    %297 = tpu.matmul %295, %296, %cst_118 {dimension_numbers = #tpu.dot_dimension_numbers<[1], [0], [0], [1], [0, 0, 1, 1], [], []>} : vector<8x8xbf16>, vector<8x8xbf16>, vector<8x8xf32> -> vector<8x8xf32>
    %298 = vector.extract_strided_slice %223 {offsets = [2, 0, 0], sizes = [1, 8, 32], strides = [1, 1, 1]} : vector<4x8x32xbf16> to vector<1x8x32xbf16>
    %299 = vector.shape_cast %298 : vector<1x8x32xbf16> to vector<8x32xbf16>
    %300 = arith.truncf %297 : vector<8x8xf32> to vector<8x8xbf16>
    %cst_119 = arith.constant dense<0.000000e+00> : vector<8x32xf32>
    %301 = tpu.matmul %300, %299, %cst_119 {dimension_numbers = #tpu.dot_dimension_numbers<[1], [0], [0], [1], [0, 0, 1, 1], [], []>} : vector<8x8xbf16>, vector<8x32xbf16>, vector<8x32xf32> -> vector<8x32xf32>
    %302 = arith.addf %276, %301 : vector<8x32xf32>
    %303 = vector.extract_strided_slice %221 {offsets = [0, 24], sizes = [8, 8], strides = [1, 1]} : vector<8x96xf32> to vector<8x8xf32>
    %304 = vector.extract_strided_slice %221 {offsets = [0, 56], sizes = [8, 8], strides = [1, 1]} : vector<8x96xf32> to vector<8x8xf32>
    %305 = vector.extract_strided_slice %221 {offsets = [0, 88], sizes = [8, 8], strides = [1, 1]} : vector<8x96xf32> to vector<8x8xf32>
    %306 = arith.truncf %303 : vector<8x8xf32> to vector<8x8xbf16>
    %307 = arith.truncf %304 : vector<8x8xf32> to vector<8x8xbf16>
    %cst_120 = arith.constant dense<0.000000e+00> : vector<8x8xf32>
    %308 = tpu.matmul %306, %307, %cst_120 {dimension_numbers = #tpu.dot_dimension_numbers<[1], [1], [0], [0], [0, 0, 1, 0], [], []>} : vector<8x8xbf16>, vector<8x8xbf16>, vector<8x8xf32> -> vector<8x8xf32>
    %cst_121 = arith.constant 0.353553385 : f32
    %309 = vector.broadcast %cst_121 : f32 to vector<8x8xf32>
    %310 = arith.mulf %308, %309 : vector<8x8xf32>
    %cst_122 = arith.constant dense<0xFF800000> : vector<8xf32>
    %311 = vector.multi_reduction <maximumf>, %310, %cst_122 [1] : vector<8x8xf32> to vector<8xf32>
    %312 = vector.shape_cast %311 : vector<8xf32> to vector<8x1xf32>
    %313 = vector.broadcast %312 : vector<8x1xf32> to vector<8x8xf32>
    %314 = arith.subf %310, %313 : vector<8x8xf32>
    %315 = math.exp %314 : vector<8x8xf32>
    %cst_123 = arith.constant dense<0.000000e+00> : vector<8xf32>
    %316 = vector.multi_reduction <add>, %315, %cst_123 [1] : vector<8x8xf32> to vector<8xf32>
    %317 = vector.shape_cast %316 : vector<8xf32> to vector<8x1xf32>
    %318 = tpu.reciprocal %317 {approx = true} : vector<8x1xf32> -> vector<8x1xf32>
    %319 = vector.broadcast %318 : vector<8x1xf32> to vector<8x8xf32>
    %320 = arith.mulf %315, %319 : vector<8x8xf32>
    %321 = arith.truncf %320 : vector<8x8xf32> to vector<8x8xbf16>
    %322 = arith.truncf %305 : vector<8x8xf32> to vector<8x8xbf16>
    %cst_124 = arith.constant dense<0.000000e+00> : vector<8x8xf32>
    %323 = tpu.matmul %321, %322, %cst_124 {dimension_numbers = #tpu.dot_dimension_numbers<[1], [0], [0], [1], [0, 0, 1, 1], [], []>} : vector<8x8xbf16>, vector<8x8xbf16>, vector<8x8xf32> -> vector<8x8xf32>
    %324 = vector.extract_strided_slice %223 {offsets = [3, 0, 0], sizes = [1, 8, 32], strides = [1, 1, 1]} : vector<4x8x32xbf16> to vector<1x8x32xbf16>
    %325 = vector.shape_cast %324 : vector<1x8x32xbf16> to vector<8x32xbf16>
    %326 = arith.truncf %323 : vector<8x8xf32> to vector<8x8xbf16>
    %cst_125 = arith.constant dense<0.000000e+00> : vector<8x32xf32>
    %327 = tpu.matmul %326, %325, %cst_125 {dimension_numbers = #tpu.dot_dimension_numbers<[1], [0], [0], [1], [0, 0, 1, 1], [], []>} : vector<8x8xbf16>, vector<8x32xbf16>, vector<8x32xf32> -> vector<8x32xf32>
    %328 = arith.addf %302, %327 : vector<8x32xf32>
    %c1_126 = arith.constant 1 : index
    %c0_127 = arith.constant 0 : index
    %c0_128 = arith.constant 0 : index
    %329 = vector.load %arg8[%c1_126, %c0_127, %c0_128] : memref<2x1x32xf32, #tpu.memory_space<vmem>>, vector<1x1x32xf32>
    %330 = vector.shape_cast %329 : vector<1x1x32xf32> to vector<1x32xf32>
    %331 = vector.broadcast %330 : vector<1x32xf32> to vector<8x32xf32>
    %332 = arith.addf %328, %331 : vector<8x32xf32>
    %333 = arith.addf %213, %332 : vector<8x32xf32>
    %c1_129 = arith.constant 1 : index
    %c0_130 = arith.constant 0 : index
    %c0_131 = arith.constant 0 : index
    %334 = vector.load %arg9[%c1_129, %c0_130, %c0_131] : memref<2x1x32xf32, #tpu.memory_space<vmem>>, vector<1x1x32xf32>
    %335 = vector.shape_cast %334 : vector<1x1x32xf32> to vector<1x32xf32>
    %c1_132 = arith.constant 1 : index
    %c0_133 = arith.constant 0 : index
    %c0_134 = arith.constant 0 : index
    %336 = vector.load %arg10[%c1_132, %c0_133, %c0_134] : memref<2x1x32xf32, #tpu.memory_space<vmem>>, vector<1x1x32xf32>
    %337 = vector.shape_cast %336 : vector<1x1x32xf32> to vector<1x32xf32>
    %cst_135 = arith.constant dense<0.000000e+00> : vector<8xf32>
    %338 = vector.multi_reduction <add>, %333, %cst_135 [1] : vector<8x32xf32> to vector<8xf32>
    %339 = vector.shape_cast %338 : vector<8xf32> to vector<8x1xf32>
    %cst_136 = arith.constant 3.200000e+01 : f32
    %340 = vector.broadcast %cst_136 : f32 to vector<8x1xf32>
    %341 = arith.divf %339, %340 : vector<8x1xf32>
    %342 = vector.broadcast %341 : vector<8x1xf32> to vector<8x32xf32>
    %343 = arith.subf %333, %342 : vector<8x32xf32>
    %344 = arith.mulf %343, %343 : vector<8x32xf32>
    %cst_137 = arith.constant dense<0.000000e+00> : vector<8xf32>
    %345 = vector.multi_reduction <add>, %344, %cst_137 [1] : vector<8x32xf32> to vector<8xf32>
    %346 = vector.shape_cast %345 : vector<8xf32> to vector<8x1xf32>
    %cst_138 = arith.constant 3.200000e+01 : f32
    %347 = vector.broadcast %cst_138 : f32 to vector<8x1xf32>
    %348 = arith.divf %346, %347 : vector<8x1xf32>
    %349 = vector.broadcast %341 : vector<8x1xf32> to vector<8x32xf32>
    %350 = arith.subf %333, %349 : vector<8x32xf32>
    %cst_139 = arith.constant 9.99999974E-6 : f32
    %351 = vector.broadcast %cst_139 : f32 to vector<8x1xf32>
    %352 = arith.addf %348, %351 : vector<8x1xf32>
    %353 = math.rsqrt %352 : vector<8x1xf32>
    %354 = vector.broadcast %353 : vector<8x1xf32> to vector<8x32xf32>
    %355 = arith.mulf %350, %354 : vector<8x32xf32>
    %356 = vector.broadcast %335 : vector<1x32xf32> to vector<8x32xf32>
    %357 = arith.mulf %355, %356 : vector<8x32xf32>
    %358 = vector.broadcast %337 : vector<1x32xf32> to vector<8x32xf32>
    %359 = arith.addf %357, %358 : vector<8x32xf32>
    %c1_140 = arith.constant 1 : index
    %c0_141 = arith.constant 0 : index
    %c0_142 = arith.constant 0 : index
    %360 = vector.load %arg11[%c1_140, %c0_141, %c0_142] : memref<2x32x48xbf16, #tpu.memory_space<vmem>>, vector<1x32x48xbf16>
    %361 = vector.shape_cast %360 : vector<1x32x48xbf16> to vector<32x48xbf16>
    %362 = arith.truncf %359 : vector<8x32xf32> to vector<8x32xbf16>
    %cst_143 = arith.constant dense<0.000000e+00> : vector<8x48xf32>
    %363 = tpu.matmul %362, %361, %cst_143 {dimension_numbers = #tpu.dot_dimension_numbers<[1], [0], [0], [1], [0, 0, 1, 1], [], []>} : vector<8x32xbf16>, vector<32x48xbf16>, vector<8x48xf32> -> vector<8x48xf32>
    %c1_144 = arith.constant 1 : index
    %c0_145 = arith.constant 0 : index
    %c0_146 = arith.constant 0 : index
    %364 = vector.load %arg12[%c1_144, %c0_145, %c0_146] : memref<2x1x48xf32, #tpu.memory_space<vmem>>, vector<1x1x48xf32>
    %365 = vector.shape_cast %364 : vector<1x1x48xf32> to vector<1x48xf32>
    %366 = vector.broadcast %365 : vector<1x48xf32> to vector<8x48xf32>
    %367 = arith.addf %363, %366 : vector<8x48xf32>
    %368 = vector.extract_strided_slice %367 {offsets = [0, 0], sizes = [8, 16], strides = [1, 1]} : vector<8x48xf32> to vector<8x16xf32>
    %369 = vector.extract_strided_slice %367 {offsets = [0, 16], sizes = [8, 32], strides = [1, 1]} : vector<8x48xf32> to vector<8x32xf32>
    %370 = math.cos %368 : vector<8x16xf32>
    %c1_147 = arith.constant 1 : index
    %c0_148 = arith.constant 0 : index
    %c0_149 = arith.constant 0 : index
    %371 = vector.load %arg13[%c1_147, %c0_148, %c0_149] : memref<2x16x32xbf16, #tpu.memory_space<vmem>>, vector<1x16x32xbf16>
    %372 = vector.shape_cast %371 : vector<1x16x32xbf16> to vector<16x32xbf16>
    %373 = arith.truncf %370 : vector<8x16xf32> to vector<8x16xbf16>
    %cst_150 = arith.constant dense<0.000000e+00> : vector<8x32xf32>
    %374 = tpu.matmul %373, %372, %cst_150 {dimension_numbers = #tpu.dot_dimension_numbers<[1], [0], [0], [1], [0, 0, 1, 1], [], []>} : vector<8x16xbf16>, vector<16x32xbf16>, vector<8x32xf32> -> vector<8x32xf32>
    %375 = math.sin %368 : vector<8x16xf32>
    %c1_151 = arith.constant 1 : index
    %c0_152 = arith.constant 0 : index
    %c0_153 = arith.constant 0 : index
    %376 = vector.load %arg14[%c1_151, %c0_152, %c0_153] : memref<2x16x32xbf16, #tpu.memory_space<vmem>>, vector<1x16x32xbf16>
    %377 = vector.shape_cast %376 : vector<1x16x32xbf16> to vector<16x32xbf16>
    %378 = arith.truncf %375 : vector<8x16xf32> to vector<8x16xbf16>
    %cst_154 = arith.constant dense<0.000000e+00> : vector<8x32xf32>
    %379 = tpu.matmul %378, %377, %cst_154 {dimension_numbers = #tpu.dot_dimension_numbers<[1], [0], [0], [1], [0, 0, 1, 1], [], []>} : vector<8x16xbf16>, vector<16x32xbf16>, vector<8x32xf32> -> vector<8x32xf32>
    %380 = arith.addf %374, %379 : vector<8x32xf32>
    %cst_155 = arith.constant 0.000000e+00 : f32
    %381 = vector.broadcast %cst_155 : f32 to vector<8x32xf32>
    %382 = arith.maximumf %369, %381 : vector<8x32xf32>
    %c1_156 = arith.constant 1 : index
    %c0_157 = arith.constant 0 : index
    %c0_158 = arith.constant 0 : index
    %383 = vector.load %arg15[%c1_156, %c0_157, %c0_158] : memref<2x32x32xbf16, #tpu.memory_space<vmem>>, vector<1x32x32xbf16>
    %384 = vector.shape_cast %383 : vector<1x32x32xbf16> to vector<32x32xbf16>
    %385 = arith.truncf %382 : vector<8x32xf32> to vector<8x32xbf16>
    %cst_159 = arith.constant dense<0.000000e+00> : vector<8x32xf32>
    %386 = tpu.matmul %385, %384, %cst_159 {dimension_numbers = #tpu.dot_dimension_numbers<[1], [0], [0], [1], [0, 0, 1, 1], [], []>} : vector<8x32xbf16>, vector<32x32xbf16>, vector<8x32xf32> -> vector<8x32xf32>
    %387 = arith.addf %380, %386 : vector<8x32xf32>
    %c1_160 = arith.constant 1 : index
    %c0_161 = arith.constant 0 : index
    %c0_162 = arith.constant 0 : index
    %388 = vector.load %arg16[%c1_160, %c0_161, %c0_162] : memref<2x1x32xf32, #tpu.memory_space<vmem>>, vector<1x1x32xf32>
    %389 = vector.shape_cast %388 : vector<1x1x32xf32> to vector<1x32xf32>
    %390 = vector.broadcast %389 : vector<1x32xf32> to vector<8x32xf32>
    %391 = arith.addf %387, %390 : vector<8x32xf32>
    %392 = arith.addf %359, %391 : vector<8x32xf32>
    %c1_163 = arith.constant 1 : index
    %c0_164 = arith.constant 0 : index
    %c0_165 = arith.constant 0 : index
    %393 = vector.load %arg17[%c1_163, %c0_164, %c0_165] : memref<2x1x32xf32, #tpu.memory_space<vmem>>, vector<1x1x32xf32>
    %394 = vector.shape_cast %393 : vector<1x1x32xf32> to vector<1x32xf32>
    %c1_166 = arith.constant 1 : index
    %c0_167 = arith.constant 0 : index
    %c0_168 = arith.constant 0 : index
    %395 = vector.load %arg18[%c1_166, %c0_167, %c0_168] : memref<2x1x32xf32, #tpu.memory_space<vmem>>, vector<1x1x32xf32>
    %396 = vector.shape_cast %395 : vector<1x1x32xf32> to vector<1x32xf32>
    %cst_169 = arith.constant dense<0.000000e+00> : vector<8xf32>
    %397 = vector.multi_reduction <add>, %392, %cst_169 [1] : vector<8x32xf32> to vector<8xf32>
    %398 = vector.shape_cast %397 : vector<8xf32> to vector<8x1xf32>
    %cst_170 = arith.constant 3.200000e+01 : f32
    %399 = vector.broadcast %cst_170 : f32 to vector<8x1xf32>
    %400 = arith.divf %398, %399 : vector<8x1xf32>
    %401 = vector.broadcast %400 : vector<8x1xf32> to vector<8x32xf32>
    %402 = arith.subf %392, %401 : vector<8x32xf32>
    %403 = arith.mulf %402, %402 : vector<8x32xf32>
    %cst_171 = arith.constant dense<0.000000e+00> : vector<8xf32>
    %404 = vector.multi_reduction <add>, %403, %cst_171 [1] : vector<8x32xf32> to vector<8xf32>
    %405 = vector.shape_cast %404 : vector<8xf32> to vector<8x1xf32>
    %cst_172 = arith.constant 3.200000e+01 : f32
    %406 = vector.broadcast %cst_172 : f32 to vector<8x1xf32>
    %407 = arith.divf %405, %406 : vector<8x1xf32>
    %408 = vector.broadcast %400 : vector<8x1xf32> to vector<8x32xf32>
    %409 = arith.subf %392, %408 : vector<8x32xf32>
    %cst_173 = arith.constant 9.99999974E-6 : f32
    %410 = vector.broadcast %cst_173 : f32 to vector<8x1xf32>
    %411 = arith.addf %407, %410 : vector<8x1xf32>
    %412 = math.rsqrt %411 : vector<8x1xf32>
    %413 = vector.broadcast %412 : vector<8x1xf32> to vector<8x32xf32>
    %414 = arith.mulf %409, %413 : vector<8x32xf32>
    %415 = vector.broadcast %394 : vector<1x32xf32> to vector<8x32xf32>
    %416 = arith.mulf %414, %415 : vector<8x32xf32>
    %417 = vector.broadcast %396 : vector<1x32xf32> to vector<8x32xf32>
    %418 = arith.addf %416, %417 : vector<8x32xf32>
    %419 = vector.extract_strided_slice %418 {offsets = [7, 0], sizes = [1, 32], strides = [1, 1]} : vector<8x32xf32> to vector<1x32xf32>
    %c0_174 = arith.constant 0 : index
    %c0_175 = arith.constant 0 : index
    %420 = vector.load %arg19[%c0_174, %c0_175] : memref<32x4xbf16, #tpu.memory_space<vmem>>, vector<32x4xbf16>
    %421 = arith.truncf %419 : vector<1x32xf32> to vector<1x32xbf16>
    %cst_176 = arith.constant dense<0.000000e+00> : vector<1x4xf32>
    %422 = tpu.matmul %421, %420, %cst_176 {dimension_numbers = #tpu.dot_dimension_numbers<[1], [0], [0], [1], [0, 0, 1, 1], [], []>} : vector<1x32xbf16>, vector<32x4xbf16>, vector<1x4xf32> -> vector<1x4xf32>
    %c0_177 = arith.constant 0 : index
    %c0_178 = arith.constant 0 : index
    %423 = vector.load %arg20[%c0_177, %c0_178] : memref<1x4xf32, #tpu.memory_space<vmem>>, vector<1x4xf32>
    %424 = arith.addf %422, %423 : vector<1x4xf32>
    %425 = vector.shape_cast %424 : vector<1x4xf32> to vector<1x1x4xf32>
    %c0_179 = arith.constant 0 : index
    %c0_180 = arith.constant 0 : index
    %c0_181 = arith.constant 0 : index
    %426 = vector.load %arg21[%c0_179, %c0_180, %c0_181] : memref<1x1x4xf32, #tpu.memory_space<vmem>>, vector<1x1x4xf32>
    tpu.vector_store %arg21[%c0_179, %c0_180, %c0_181], %425 {strides = array<i32>} : memref<1x1x4xf32, #tpu.memory_space<vmem>>, vector<1x1x4xf32>,
    return
  }
  func.func @transform_0(%arg0: i32) -> (i32, i32) {
    %c0_i32 = arith.constant 0 : i32
    %c0_i32_0 = arith.constant 0 : i32
    return %arg0, %c0_i32 : i32, i32
  }
  func.func @transform_1(%arg0: i32) -> (i32, i32) {
    %c0_i32 = arith.constant 0 : i32
    %c0_i32_0 = arith.constant 0 : i32
    %c0_i32_1 = arith.constant 0 : i32
    return %c0_i32, %c0_i32_0 : i32, i32
  }
  func.func @transform_2(%arg0: i32) -> (i32, i32) {
    %c0_i32 = arith.constant 0 : i32
    %c0_i32_0 = arith.constant 0 : i32
    %c0_i32_1 = arith.constant 0 : i32
    return %c0_i32, %c0_i32_0 : i32, i32
  }
  func.func @transform_3(%arg0: i32) -> (i32, i32) {
    %c0_i32 = arith.constant 0 : i32
    %c0_i32_0 = arith.constant 0 : i32
    %c0_i32_1 = arith.constant 0 : i32
    return %c0_i32, %c0_i32_0 : i32, i32
  }
  func.func @transform_4(%arg0: i32) -> (i32, i32, i32) {
    %c0_i32 = arith.constant 0 : i32
    %c0_i32_0 = arith.constant 0 : i32
    %c0_i32_1 = arith.constant 0 : i32
    %c0_i32_2 = arith.constant 0 : i32
    return %c0_i32, %c0_i32_0, %c0_i32_1 : i32, i32, i32
  }
  func.func @transform_5(%arg0: i32) -> (i32, i32, i32) {
    %c0_i32 = arith.constant 0 : i32
    %c0_i32_0 = arith.constant 0 : i32
    %c0_i32_1 = arith.constant 0 : i32
    %c0_i32_2 = arith.constant 0 : i32
    return %c0_i32, %c0_i32_0, %c0_i32_1 : i32, i32, i32
  }
  func.func @transform_6(%arg0: i32) -> (i32, i32, i32, i32) {
    %c0_i32 = arith.constant 0 : i32
    %c0_i32_0 = arith.constant 0 : i32
    %c0_i32_1 = arith.constant 0 : i32
    %c0_i32_2 = arith.constant 0 : i32
    %c0_i32_3 = arith.constant 0 : i32
    return %c0_i32, %c0_i32_0, %c0_i32_1, %c0_i32_2 : i32, i32, i32, i32
  }
  func.func @transform_7(%arg0: i32) -> (i32, i32, i32) {
    %c0_i32 = arith.constant 0 : i32
    %c0_i32_0 = arith.constant 0 : i32
    %c0_i32_1 = arith.constant 0 : i32
    %c0_i32_2 = arith.constant 0 : i32
    return %c0_i32, %c0_i32_0, %c0_i32_1 : i32, i32, i32
  }
  func.func @transform_8(%arg0: i32) -> (i32, i32, i32) {
    %c0_i32 = arith.constant 0 : i32
    %c0_i32_0 = arith.constant 0 : i32
    %c0_i32_1 = arith.constant 0 : i32
    %c0_i32_2 = arith.constant 0 : i32
    return %c0_i32, %c0_i32_0, %c0_i32_1 : i32, i32, i32
  }
  func.func @transform_9(%arg0: i32) -> (i32, i32, i32) {
    %c0_i32 = arith.constant 0 : i32
    %c0_i32_0 = arith.constant 0 : i32
    %c0_i32_1 = arith.constant 0 : i32
    %c0_i32_2 = arith.constant 0 : i32
    return %c0_i32, %c0_i32_0, %c0_i32_1 : i32, i32, i32
  }
  func.func @transform_10(%arg0: i32) -> (i32, i32, i32) {
    %c0_i32 = arith.constant 0 : i32
    %c0_i32_0 = arith.constant 0 : i32
    %c0_i32_1 = arith.constant 0 : i32
    %c0_i32_2 = arith.constant 0 : i32
    return %c0_i32, %c0_i32_0, %c0_i32_1 : i32, i32, i32
  }
  func.func @transform_11(%arg0: i32) -> (i32, i32, i32) {
    %c0_i32 = arith.constant 0 : i32
    %c0_i32_0 = arith.constant 0 : i32
    %c0_i32_1 = arith.constant 0 : i32
    %c0_i32_2 = arith.constant 0 : i32
    return %c0_i32, %c0_i32_0, %c0_i32_1 : i32, i32, i32
  }
  func.func @transform_12(%arg0: i32) -> (i32, i32, i32) {
    %c0_i32 = arith.constant 0 : i32
    %c0_i32_0 = arith.constant 0 : i32
    %c0_i32_1 = arith.constant 0 : i32
    %c0_i32_2 = arith.constant 0 : i32
    return %c0_i32, %c0_i32_0, %c0_i32_1 : i32, i32, i32
  }
  func.func @transform_13(%arg0: i32) -> (i32, i32, i32) {
    %c0_i32 = arith.constant 0 : i32
    %c0_i32_0 = arith.constant 0 : i32
    %c0_i32_1 = arith.constant 0 : i32
    %c0_i32_2 = arith.constant 0 : i32
    return %c0_i32, %c0_i32_0, %c0_i32_1 : i32, i32, i32
  }
  func.func @transform_14(%arg0: i32) -> (i32, i32, i32) {
    %c0_i32 = arith.constant 0 : i32
    %c0_i32_0 = arith.constant 0 : i32
    %c0_i32_1 = arith.constant 0 : i32
    %c0_i32_2 = arith.constant 0 : i32
    return %c0_i32, %c0_i32_0, %c0_i32_1 : i32, i32, i32
  }
  func.func @transform_15(%arg0: i32) -> (i32, i32, i32) {
    %c0_i32 = arith.constant 0 : i32
    %c0_i32_0 = arith.constant 0 : i32
    %c0_i32_1 = arith.constant 0 : i32
    %c0_i32_2 = arith.constant 0 : i32
    return %c0_i32, %c0_i32_0, %c0_i32_1 : i32, i32, i32
  }
  func.func @transform_16(%arg0: i32) -> (i32, i32, i32) {
    %c0_i32 = arith.constant 0 : i32
    %c0_i32_0 = arith.constant 0 : i32
    %c0_i32_1 = arith.constant 0 : i32
    %c0_i32_2 = arith.constant 0 : i32
    return %c0_i32, %c0_i32_0, %c0_i32_1 : i32, i32, i32
  }
  func.func @transform_17(%arg0: i32) -> (i32, i32, i32) {
    %c0_i32 = arith.constant 0 : i32
    %c0_i32_0 = arith.constant 0 : i32
    %c0_i32_1 = arith.constant 0 : i32
    %c0_i32_2 = arith.constant 0 : i32
    return %c0_i32, %c0_i32_0, %c0_i32_1 : i32, i32, i32
  }
  func.func @transform_18(%arg0: i32) -> (i32, i32) {
    %c0_i32 = arith.constant 0 : i32
    %c0_i32_0 = arith.constant 0 : i32
    %c0_i32_1 = arith.constant 0 : i32
    return %c0_i32, %c0_i32_0 : i32, i32
  }
  func.func @transform_19(%arg0: i32) -> (i32, i32) {
    %c0_i32 = arith.constant 0 : i32
    %c0_i32_0 = arith.constant 0 : i32
    %c0_i32_1 = arith.constant 0 : i32
    return %c0_i32, %c0_i32_0 : i32, i32
  }
  func.func @transform_20(%arg0: i32) -> (i32, i32, i32) {
    %c0_i32 = arith.constant 0 : i32
    %c0_i32_0 = arith.constant 0 : i32
    %c0_i32_1 = arith.constant 0 : i32
    return %arg0, %c0_i32, %c0_i32_0 : i32, i32, i32
  }
}

</mosaic_0001>

<llo_original>
// kernel: forward.1
$region0: #{forward.1}
  #allocation0 [shape = 'u32[]', space=smem, size = 0x4, offset = 0x4, fixed_abs, tag = 'smem constant byte address 0x4 - core index']
  #allocation1 [shape = 'u32[144,128]{1,0:T(1,128)}', space=vmem, size = 0x12000, scoped, tag = 'internal scratch']
  %s0 = inlined_call_operand.vmem [shape: f32[16,4], index: 0, kind: input, shape index: {}]
  %s1 = inlined_call_operand.vmem [shape: f32[8,32], index: 1, kind: input, shape index: {}]
  %s2 = inlined_call_operand.vmem [shape: bf16[4,32], index: 2, kind: input, shape index: {}]
  %s3 = inlined_call_operand.hbm [shape: f32[1,32], index: 3, kind: input, shape index: {}]
  %s4 = inlined_call_operand.vmem [shape: bf16[2,32,96], index: 4, kind: input, shape index: {}]
  %s5 = inlined_call_operand.hbm [shape: f32[2,1,96], index: 5, kind: input, shape index: {}]
  %s6 = inlined_call_operand.vmem [shape: bf16[2,4,8,32], index: 6, kind: input, shape index: {}]
  %s7 = inlined_call_operand.hbm [shape: f32[2,1,32], index: 7, kind: input, shape index: {}]
  %s8 = inlined_call_operand.hbm [shape: f32[2,1,32], index: 8, kind: input, shape index: {}]
  %s9 = inlined_call_operand.hbm [shape: f32[2,1,32], index: 9, kind: input, shape index: {}]
  %s10 = inlined_call_operand.vmem [shape: bf16[2,32,48], index: 10, kind: input, shape index: {}]
  %s11 = inlined_call_operand.hbm [shape: f32[2,1,48], index: 11, kind: input, shape index: {}]
  %s12 = inlined_call_operand.hbm [shape: bf16[2,16,32], index: 12, kind: input, shape index: {}]
  %s13 = inlined_call_operand.vmem [shape: bf16[2,16,32], index: 13, kind: input, shape index: {}]
  %s14 = inlined_call_operand.vmem [shape: bf16[2,32,32], index: 14, kind: input, shape index: {}]
  %s15 = inlined_call_operand.hbm [shape: f32[2,1,32], index: 15, kind: input, shape index: {}]
  %s16 = inlined_call_operand.hbm [shape: f32[2,1,32], index: 16, kind: input, shape index: {}]
  %s17 = inlined_call_operand.hbm [shape: f32[2,1,32], index: 17, kind: input, shape index: {}]
  %s18 = inlined_call_operand.vmem [shape: bf16[32,4], index: 18, kind: input, shape index: {}]
  %s19 = inlined_call_operand.hbm [shape: f32[1,4], index: 19, kind: input, shape index: {}]
  %s20 = inlined_call_operand.hbm [shape: f32[2,1,4], index: 20, kind: output, shape index: {}]
  %s21 = sld [smem:[#allocation0]]
  $region157: #{forward.1} parent=0
    _
  %s23 = ssub.s32 1, %s21
  %s24 = scalar_select 0, %s23, %s21
  $region1: #{forward.1} parent=0
    #allocation2 [shape = 'u8[512]{0}', space=vmem, size = 0x400, scoped, tag = 'input window, operand 3, single buffered']
    #allocation3 [shape = 's32[2]{0}', space=sflag, size = 0x8, scoped, tag = 'scoped memory for forward.1']
    #allocation4 [shape = 's32[2]{0}', space=sflag, size = 0x8, scoped, tag = 'scoped memory for forward.1']
    #allocation5 [shape = 'u8[1024]{0}', space=vmem, size = 0x400, scoped, tag = 'input window, operand 5, single buffered']
    #allocation6 [shape = 's32[1]{0}', space=sflag, size = 0x4, scoped, tag = 'scoped memory for forward.1']
    #allocation7 [shape = 'u8[1024]{0}', space=vmem, size = 0x400, scoped, tag = 'input window, operand 7, single buffered']
    #allocation8 [shape = 'u8[1024]{0}', space=vmem, size = 0x400, scoped, tag = 'input window, operand 8, single buffered']
    #allocation9 [shape = 's32[1]{0}', space=sflag, size = 0x4, scoped, tag = 'scoped memory for forward.1']
    #allocation10 [shape = 'u8[1024]{0}', space=vmem, size = 0x400, scoped, tag = 'input window, operand 9, single buffered']
    #allocation11 [shape = 'u8[1024]{0}', space=vmem, size = 0x400, scoped, tag = 'input window, operand 11, single buffered']
    #allocation12 [shape = 's32[1]{0}', space=sflag, size = 0x4, scoped, tag = 'scoped memory for forward.1']
    #allocation13 [shape = 'u8[8192]{0}', space=vmem, size = 0x2000, scoped, tag = 'input window, operand 12, single buffered']
    #allocation14 [shape = 'u8[1024]{0}', space=vmem, size = 0x400, scoped, tag = 'input window, operand 15, single buffered']
    #allocation15 [shape = 's32[1]{0}', space=sflag, size = 0x4, scoped, tag = 'scoped memory for forward.1']
    #allocation16 [shape = 'u8[1024]{0}', space=vmem, size = 0x400, scoped, tag = 'input window, operand 16, single buffered']
    #allocation17 [shape = 'u8[1024]{0}', space=vmem, size = 0x400, scoped, tag = 'input window, operand 17, single buffered']
    #allocation18 [shape = 's32[1]{0}', space=sflag, size = 0x4, scoped, tag = 'scoped memory for forward.1']
    #allocation19 [shape = 'u8[512]{0}', space=vmem, size = 0x400, scoped, tag = 'input window, operand 19, single buffered']
    #allocation20 [shape = 'u8[1024]{0}', space=vmem, size = 0x400, scoped, tag = 'output window, operand 0']
    %25 = vsyncpa [#allocation3], 0
    %26 = vsyncpa [#allocation6], 0
    %27 = vsyncpa [#allocation9], 0
    %28 = vsyncpa [#allocation12], 0
    %29 = vsyncpa [#allocation15], 0
    %30 = vsyncpa [#allocation18], 0
    %31 = vsyncpa [#allocation4], 0
    %s32 = scalar_lea.sflag [#allocation4], 1
    %33 = vsyncpa %s32, 0
    loop: start=0, step=1, limit=4
    $region2: #{forward.1} parent=1 // loop_pre_header
      _
    $region3: #{forward.1} parent=1 // loop_header
      %s35 = sphi 0, %s39
      %p36 = scmp.ge.s32.totalorder %s35, 4
      %s45 = sphi 0, %s47
      %s48 = sphi 0, %s45
      %s49 = sphi 0, %s48
      %s65 = sphi 0, %s49
      %s69 = sphi 0, %s69
      %s71 = sphi 0, %s69
      %s72 = sphi 0, %s71
      %s86 = sphi 0, %s72
      %s90 = sphi 0, %s90
      %s92 = sphi 0, %s90
      %s93 = sphi 0, %s92
      %s107 = sphi 0, %s93
      %s111 = sphi 0, %s111
      %s113 = sphi 0, %s111
      %s114 = sphi 0, %s113
      %s128 = sphi 0, %s114
      %s132 = sphi 0, %s132
      %s134 = sphi 0, %s132
      %s135 = sphi 0, %s134
      %s149 = sphi 0, %s135
      %s153 = sphi 0, %s153
      %s155 = sphi 0, %s153
      %s156 = sphi 0, %s155
      %s170 = sphi 0, %s156
      %s174 = sphi 0, %s174
      %s176 = sphi 0, %s174
      %s177 = sphi 0, %s176
      %s191 = sphi 0, %s177
      %s195 = sphi 0, %s195
      %s197 = sphi 0, %s195
      %s198 = sphi 0, %s197
      %s212 = sphi 0, %s198
      %s216 = sphi 0, %s216
      %s218 = sphi 0, %s216
      %s219 = sphi 0, %s218
      %s233 = sphi 0, %s219
      %s237 = sphi 0, %s237
      %s239 = sphi 0, %s237
      %s240 = sphi 0, %s239
      %s254 = sphi 0, %s240
      %s258 = sphi 0, %s258
      %s260 = sphi 0, %s258
      %s261 = sphi 0, %s260
      %s275 = sphi 0, %s261
      %s279 = sphi 0, %s279
      %s281 = sphi 0, %s279
      %s282 = sphi 0, %s281
      %s296 = sphi 0, %s282
      %s300 = sphi 0, %s300
      %s302 = sphi 0, %s300
      %s303 = sphi 0, %s302
      %s317 = sphi 0, %s303
      %s321 = sphi 0, %s321
      %s323 = sphi 0, %s321
      %s324 = sphi 0, %s323
      %s338 = sphi 0, %s324
      %s342 = sphi 0, %s342
      %s344 = sphi 0, %s342
      %s345 = sphi 0, %s344
      %s359 = sphi 0, %s345
      %s363 = sphi 0, %s363
      %s365 = sphi 0, %s363
      %s366 = sphi 0, %s365
      %s380 = sphi 0, %s366
      %s384 = sphi 0, %s384
      %s386 = sphi 0, %s384
      %s387 = sphi 0, %s386
      %s401 = sphi 0, %s387
      %s405 = sphi 0, %s405
      %s407 = sphi 0, %s405
      %s408 = sphi 0, %s407
      %s422 = sphi 0, %s408
      %s426 = sphi 0, %s426
      %s428 = sphi 0, %s426
      %s429 = sphi 0, %s428
      %s443 = sphi 0, %s429
      %s447 = sphi 0, %s447
      %s449 = sphi 0, %s447
      %s450 = sphi 0, %s449
      %s464 = sphi 0, %s450
      %s470 = sphi 0, %s472
      %s473 = sphi 0, %s470
      %s474 = sphi 0, %s473
      %s490 = sphi 0, %s474
    $region4: #{forward.1} parent=1 // loop_header_branch
      %38 = sbr.rel (%p36) target = $region8
    $region5: #{forward.1} parent=1 // loop_body
      %s40 = ssub.s32 %s35, 1
      %s41 = ssub.s32 %s35, 2
      %s42 = sadd.s32 %s35, 1
      %s43 = ssub.s32 %s35, %s42
      %p44 = scmp.eq.s32.totalorder %s43, 0
      %s46 = sadd.s32 %s45, 1
      %s47 = scalar_select %p44, %s45, %s46
      %p50 = pneg %p44
      %p51 = scmp.eq.s32.totalorder %s35, 1
      %p52 = por %p50, %p51
      %p53 = scmp.ne.s32.totalorder %s45, %s48
      %p54 = scmp.eq.s32.totalorder %s35, 0
      %p55 = por %p53, %p54
      %p56 = scmp.ne.s32.totalorder %s45, %s48
      %p57 = scmp.eq.s32.totalorder %s40, 1
      %p58 = por %p56, %p57
      %p59 = scmp.ne.s32.totalorder %s48, %s49
      %p60 = scmp.eq.s32.totalorder %s40, 0
      %p61 = por %p59, %p60
      %p62 = scmp.ne.s32.totalorder %s48, %s49
      %p63 = scmp.eq.s32.totalorder %s41, 1
      %p64 = por %p62, %p63
      %p66 = scmp.ne.s32.totalorder %s49, %s65
      %p67 = scmp.eq.s32.totalorder %s41, 0
      %p68 = por %p66, %p67
      %s70 = sadd.s32 %s69, 1
      %p73 = scmp.eq.s32.totalorder %s35, 1
      %p74 = scmp.ne.s32.totalorder %s69, %s71
      %p75 = scmp.eq.s32.totalorder %s35, 0
      %p76 = por %p74, %p75
      %p77 = scmp.ne.s32.totalorder %s69, %s71
      %p78 = scmp.eq.s32.totalorder %s40, 1
      %p79 = por %p77, %p78
      %p80 = scmp.ne.s32.totalorder %s71, %s72
      %p81 = scmp.eq.s32.totalorder %s40, 0
      %p82 = por %p80, %p81
      %p83 = scmp.ne.s32.totalorder %s71, %s72
      %p84 = scmp.eq.s32.totalorder %s41, 1
      %p85 = por %p83, %p84
      %p87 = scmp.ne.s32.totalorder %s72, %s86
      %p88 = scmp.eq.s32.totalorder %s41, 0
      %p89 = por %p87, %p88
      %s91 = sadd.s32 %s90, 1
      %p94 = scmp.eq.s32.totalorder %s35, 1
      %p95 = scmp.ne.s32.totalorder %s90, %s92
      %p96 = scmp.eq.s32.totalorder %s35, 0
      %p97 = por %p95, %p96
      %p98 = scmp.ne.s32.totalorder %s90, %s92
      %p99 = scmp.eq.s32.totalorder %s40, 1
      %p100 = por %p98, %p99
      %p101 = scmp.ne.s32.totalorder %s92, %s93
      %p102 = scmp.eq.s32.totalorder %s40, 0
      %p103 = por %p101, %p102
      %p104 = scmp.ne.s32.totalorder %s92, %s93
      %p105 = scmp.eq.s32.totalorder %s41, 1
      %p106 = por %p104, %p105
      %p108 = scmp.ne.s32.totalorder %s93, %s107
      %p109 = scmp.eq.s32.totalorder %s41, 0
      %p110 = por %p108, %p109
      %s112 = sadd.s32 %s111, 1
      %p115 = scmp.eq.s32.totalorder %s35, 1
      %p116 = scmp.ne.s32.totalorder %s111, %s113
      %p117 = scmp.eq.s32.totalorder %s35, 0
      %p118 = por %p116, %p117
      %p119 = scmp.ne.s32.totalorder %s111, %s113
      %p120 = scmp.eq.s32.totalorder %s40, 1
      %p121 = por %p119, %p120
      %p122 = scmp.ne.s32.totalorder %s113, %s114
      %p123 = scmp.eq.s32.totalorder %s40, 0
      %p124 = por %p122, %p123
      %p125 = scmp.ne.s32.totalorder %s113, %s114
      %p126 = scmp.eq.s32.totalorder %s41, 1
      %p127 = por %p125, %p126
      %p129 = scmp.ne.s32.totalorder %s114, %s128
      %p130 = scmp.eq.s32.totalorder %s41, 0
      %p131 = por %p129, %p130
      %s133 = sadd.s32 %s132, 1
      %p136 = scmp.eq.s32.totalorder %s35, 1
      %p137 = scmp.ne.s32.totalorder %s132, %s134
      %p138 = scmp.eq.s32.totalorder %s35, 0
      %p139 = por %p137, %p138
      %p140 = scmp.ne.s32.totalorder %s132, %s134
      %p141 = scmp.eq.s32.totalorder %s40, 1
      %p142 = por %p140, %p141
      %p143 = scmp.ne.s32.totalorder %s134, %s135
      %p144 = scmp.eq.s32.totalorder %s40, 0
      %p145 = por %p143, %p144
      %p146 = scmp.ne.s32.totalorder %s134, %s135
      %p147 = scmp.eq.s32.totalorder %s41, 1
      %p148 = por %p146, %p147
      %p150 = scmp.ne.s32.totalorder %s135, %s149
      %p151 = scmp.eq.s32.totalorder %s41, 0
      %p152 = por %p150, %p151
      %s154 = sadd.s32 %s153, 1
      %p157 = scmp.eq.s32.totalorder %s35, 1
      %p158 = scmp.ne.s32.totalorder %s153, %s155
      %p159 = scmp.eq.s32.totalorder %s35, 0
      %p160 = por %p158, %p159
      %p161 = scmp.ne.s32.totalorder %s153, %s155
      %p162 = scmp.eq.s32.totalorder %s40, 1
      %p163 = por %p161, %p162
      %p164 = scmp.ne.s32.totalorder %s155, %s156
      %p165 = scmp.eq.s32.totalorder %s40, 0
      %p166 = por %p164, %p165
      %p167 = scmp.ne.s32.totalorder %s155, %s156
      %p168 = scmp.eq.s32.totalorder %s41, 1
      %p169 = por %p167, %p168
      %p171 = scmp.ne.s32.totalorder %s156, %s170
      %p172 = scmp.eq.s32.totalorder %s41, 0
      %p173 = por %p171, %p172
      %s175 = sadd.s32 %s174, 1
      %p178 = scmp.eq.s32.totalorder %s35, 1
      %p179 = scmp.ne.s32.totalorder %s174, %s176
      %p180 = scmp.eq.s32.totalorder %s35, 0
      %p181 = por %p179, %p180
      %p182 = scmp.ne.s32.totalorder %s174, %s176
      %p183 = scmp.eq.s32.totalorder %s40, 1
      %p184 = por %p182, %p183
      %p185 = scmp.ne.s32.totalorder %s176, %s177
      %p186 = scmp.eq.s32.totalorder %s40, 0
      %p187 = por %p185, %p186
      %p188 = scmp.ne.s32.totalorder %s176, %s177
      %p189 = scmp.eq.s32.totalorder %s41, 1
      %p190 = por %p188, %p189
      %p192 = scmp.ne.s32.totalorder %s177, %s191
      %p193 = scmp.eq.s32.totalorder %s41, 0
      %p194 = por %p192, %p193
      %s196 = sadd.s32 %s195, 1
      %p199 = scmp.eq.s32.totalorder %s35, 1
      %p200 = scmp.ne.s32.totalorder %s195, %s197
      %p201 = scmp.eq.s32.totalorder %s35, 0
      %p202 = por %p200, %p201
      %p203 = scmp.ne.s32.totalorder %s195, %s197
      %p204 = scmp.eq.s32.totalorder %s40, 1
      %p205 = por %p203, %p204
      %p206 = scmp.ne.s32.totalorder %s197, %s198
      %p207 = scmp.eq.s32.totalorder %s40, 0
      %p208 = por %p206, %p207
      %p209 = scmp.ne.s32.totalorder %s197, %s198
      %p210 = scmp.eq.s32.totalorder %s41, 1
      %p211 = por %p209, %p210
      %p213 = scmp.ne.s32.totalorder %s198, %s212
      %p214 = scmp.eq.s32.totalorder %s41, 0
      %p215 = por %p213, %p214
      %s217 = sadd.s32 %s216, 1
      %p220 = scmp.eq.s32.totalorder %s35, 1
      %p221 = scmp.ne.s32.totalorder %s216, %s218
      %p222 = scmp.eq.s32.totalorder %s35, 0
      %p223 = por %p221, %p222
      %p224 = scmp.ne.s32.totalorder %s216, %s218
      %p225 = scmp.eq.s32.totalorder %s40, 1
      %p226 = por %p224, %p225
      %p227 = scmp.ne.s32.totalorder %s218, %s219
      %p228 = scmp.eq.s32.totalorder %s40, 0
      %p229 = por %p227, %p228
      %p230 = scmp.ne.s32.totalorder %s218, %s219
      %p231 = scmp.eq.s32.totalorder %s41, 1
      %p232 = por %p230, %p231
      %p234 = scmp.ne.s32.totalorder %s219, %s233
      %p235 = scmp.eq.s32.totalorder %s41, 0
      %p236 = por %p234, %p235
      %s238 = sadd.s32 %s237, 1
      %p241 = scmp.eq.s32.totalorder %s35, 1
      %p242 = scmp.ne.s32.totalorder %s237, %s239
      %p243 = scmp.eq.s32.totalorder %s35, 0
      %p244 = por %p242, %p243
      %p245 = scmp.ne.s32.totalorder %s237, %s239
      %p246 = scmp.eq.s32.totalorder %s40, 1
      %p247 = por %p245, %p246
      %p248 = scmp.ne.s32.totalorder %s239, %s240
      %p249 = scmp.eq.s32.totalorder %s40, 0
      %p250 = por %p248, %p249
      %p251 = scmp.ne.s32.totalorder %s239, %s240
      %p252 = scmp.eq.s32.totalorder %s41, 1
      %p253 = por %p251, %p252
      %p255 = scmp.ne.s32.totalorder %s240, %s254
      %p256 = scmp.eq.s32.totalorder %s41, 0
      %p257 = por %p255, %p256
      %s259 = sadd.s32 %s258, 1
      %p262 = scmp.eq.s32.totalorder %s35, 1
      %p263 = scmp.ne.s32.totalorder %s258, %s260
      %p264 = scmp.eq.s32.totalorder %s35, 0
      %p265 = por %p263, %p264
      %p266 = scmp.ne.s32.totalorder %s258, %s260
      %p267 = scmp.eq.s32.totalorder %s40, 1
      %p268 = por %p266, %p267
      %p269 = scmp.ne.s32.totalorder %s260, %s261
      %p270 = scmp.eq.s32.totalorder %s40, 0
      %p271 = por %p269, %p270
      %p272 = scmp.ne.s32.totalorder %s260, %s261
      %p273 = scmp.eq.s32.totalorder %s41, 1
      %p274 = por %p272, %p273
      %p276 = scmp.ne.s32.totalorder %s261, %s275
      %p277 = scmp.eq.s32.totalorder %s41, 0
      %p278 = por %p276, %p277
      %s280 = sadd.s32 %s279, 1
      %p283 = scmp.eq.s32.totalorder %s35, 1
      %p284 = scmp.ne.s32.totalorder %s279, %s281
      %p285 = scmp.eq.s32.totalorder %s35, 0
      %p286 = por %p284, %p285
      %p287 = scmp.ne.s32.totalorder %s279, %s281
      %p288 = scmp.eq.s32.totalorder %s40, 1
      %p289 = por %p287, %p288
      %p290 = scmp.ne.s32.totalorder %s281, %s282
      %p291 = scmp.eq.s32.totalorder %s40, 0
      %p292 = por %p290, %p291
      %p293 = scmp.ne.s32.totalorder %s281, %s282
      %p294 = scmp.eq.s32.totalorder %s41, 1
      %p295 = por %p293, %p294
      %p297 = scmp.ne.s32.totalorder %s282, %s296
      %p298 = scmp.eq.s32.totalorder %s41, 0
      %p299 = por %p297, %p298
      %s301 = sadd.s32 %s300, 1
      %p304 = scmp.eq.s32.totalorder %s35, 1
      %p305 = scmp.ne.s32.totalorder %s300, %s302
      %p306 = scmp.eq.s32.totalorder %s35, 0
      %p307 = por %p305, %p306
      %p308 = scmp.ne.s32.totalorder %s300, %s302
      %p309 = scmp.eq.s32.totalorder %s40, 1
      %p310 = por %p308, %p309
      %p311 = scmp.ne.s32.totalorder %s302, %s303
      %p312 = scmp.eq.s32.totalorder %s40, 0
      %p313 = por %p311, %p312
      %p314 = scmp.ne.s32.totalorder %s302, %s303
      %p315 = scmp.eq.s32.totalorder %s41, 1
      %p316 = por %p314, %p315
      %p318 = scmp.ne.s32.totalorder %s303, %s317
      %p319 = scmp.eq.s32.totalorder %s41, 0
      %p320 = por %p318, %p319
      %s322 = sadd.s32 %s321, 1
      %p325 = scmp.eq.s32.totalorder %s35, 1
      %p326 = scmp.ne.s32.totalorder %s321, %s323
      %p327 = scmp.eq.s32.totalorder %s35, 0
      %p328 = por %p326, %p327
      %p329 = scmp.ne.s32.totalorder %s321, %s323
      %p330 = scmp.eq.s32.totalorder %s40, 1
      %p331 = por %p329, %p330
      %p332 = scmp.ne.s32.totalorder %s323, %s324
      %p333 = scmp.eq.s32.totalorder %s40, 0
      %p334 = por %p332, %p333
      %p335 = scmp.ne.s32.totalorder %s323, %s324
      %p336 = scmp.eq.s32.totalorder %s41, 1
      %p337 = por %p335, %p336
      %p339 = scmp.ne.s32.totalorder %s324, %s338
      %p340 = scmp.eq.s32.totalorder %s41, 0
      %p341 = por %p339, %p340
      %s343 = sadd.s32 %s342, 1
      %p346 = scmp.eq.s32.totalorder %s35, 1
      %p347 = scmp.ne.s32.totalorder %s342, %s344
      %p348 = scmp.eq.s32.totalorder %s35, 0
      %p349 = por %p347, %p348
      %p350 = scmp.ne.s32.totalorder %s342, %s344
      %p351 = scmp.eq.s32.totalorder %s40, 1
      %p352 = por %p350, %p351
      %p353 = scmp.ne.s32.totalorder %s344, %s345
      %p354 = scmp.eq.s32.totalorder %s40, 0
      %p355 = por %p353, %p354
      %p356 = scmp.ne.s32.totalorder %s344, %s345
      %p357 = scmp.eq.s32.totalorder %s41, 1
      %p358 = por %p356, %p357
      %p360 = scmp.ne.s32.totalorder %s345, %s359
      %p361 = scmp.eq.s32.totalorder %s41, 0
      %p362 = por %p360, %p361
      %s364 = sadd.s32 %s363, 1
      %p367 = scmp.eq.s32.totalorder %s35, 1
      %p368 = scmp.ne.s32.totalorder %s363, %s365
      %p369 = scmp.eq.s32.totalorder %s35, 0
      %p370 = por %p368, %p369
      %p371 = scmp.ne.s32.totalorder %s363, %s365
      %p372 = scmp.eq.s32.totalorder %s40, 1
      %p373 = por %p371, %p372
      %p374 = scmp.ne.s32.totalorder %s365, %s366
      %p375 = scmp.eq.s32.totalorder %s40, 0
      %p376 = por %p374, %p375
      %p377 = scmp.ne.s32.totalorder %s365, %s366
      %p378 = scmp.eq.s32.totalorder %s41, 1
      %p379 = por %p377, %p378
      %p381 = scmp.ne.s32.totalorder %s366, %s380
      %p382 = scmp.eq.s32.totalorder %s41, 0
      %p383 = por %p381, %p382
      %s385 = sadd.s32 %s384, 1
      %p388 = scmp.eq.s32.totalorder %s35, 1
      %p389 = scmp.ne.s32.totalorder %s384, %s386
      %p390 = scmp.eq.s32.totalorder %s35, 0
      %p391 = por %p389, %p390
      %p392 = scmp.ne.s32.totalorder %s384, %s386
      %p393 = scmp.eq.s32.totalorder %s40, 1
      %p394 = por %p392, %p393
      %p395 = scmp.ne.s32.totalorder %s386, %s387
      %p396 = scmp.eq.s32.totalorder %s40, 0
      %p397 = por %p395, %p396
      %p398 = scmp.ne.s32.totalorder %s386, %s387
      %p399 = scmp.eq.s32.totalorder %s41, 1
      %p400 = por %p398, %p399
      %p402 = scmp.ne.s32.totalorder %s387, %s401
      %p403 = scmp.eq.s32.totalorder %s41, 0
      %p404 = por %p402, %p403
      %s406 = sadd.s32 %s405, 1
      %p409 = scmp.eq.s32.totalorder %s35, 1
      %p410 = scmp.ne.s32.totalorder %s405, %s407
      %p411 = scmp.eq.s32.totalorder %s35, 0
      %p412 = por %p410, %p411
      %p413 = scmp.ne.s32.totalorder %s405, %s407
      %p414 = scmp.eq.s32.totalorder %s40, 1
      %p415 = por %p413, %p414
      %p416 = scmp.ne.s32.totalorder %s407, %s408
      %p417 = scmp.eq.s32.totalorder %s40, 0
      %p418 = por %p416, %p417
      %p419 = scmp.ne.s32.totalorder %s407, %s408
      %p420 = scmp.eq.s32.totalorder %s41, 1
      %p421 = por %p419, %p420
      %p423 = scmp.ne.s32.totalorder %s408, %s422
      %p424 = scmp.eq.s32.totalorder %s41, 0
      %p425 = por %p423, %p424
      %s427 = sadd.s32 %s426, 1
      %p430 = scmp.eq.s32.totalorder %s35, 1
      %p431 = scmp.ne.s32.totalorder %s426, %s428
      %p432 = scmp.eq.s32.totalorder %s35, 0
      %p433 = por %p431, %p432
      %p434 = scmp.ne.s32.totalorder %s426, %s428
      %p435 = scmp.eq.s32.totalorder %s40, 1
      %p436 = por %p434, %p435
      %p437 = scmp.ne.s32.totalorder %s428, %s429
      %p438 = scmp.eq.s32.totalorder %s40, 0
      %p439 = por %p437, %p438
      %p440 = scmp.ne.s32.totalorder %s428, %s429
      %p441 = scmp.eq.s32.totalorder %s41, 1
      %p442 = por %p440, %p441
      %p444 = scmp.ne.s32.totalorder %s429, %s443
      %p445 = scmp.eq.s32.totalorder %s41, 0
      %p446 = por %p444, %p445
      %s448 = sadd.s32 %s447, 1
      %p451 = scmp.eq.s32.totalorder %s35, 1
      %p452 = scmp.ne.s32.totalorder %s447, %s449
      %p453 = scmp.eq.s32.totalorder %s35, 0
      %p454 = por %p452, %p453
      %p455 = scmp.ne.s32.totalorder %s447, %s449
      %p456 = scmp.eq.s32.totalorder %s40, 1
      %p457 = por %p455, %p456
      %p458 = scmp.ne.s32.totalorder %s449, %s450
      %p459 = scmp.eq.s32.totalorder %s40, 0
      %p460 = por %p458, %p459
      %p461 = scmp.ne.s32.totalorder %s449, %s450
      %p462 = scmp.eq.s32.totalorder %s41, 1
      %p463 = por %p461, %p462
      %p465 = scmp.ne.s32.totalorder %s450, %s464
      %p466 = scmp.eq.s32.totalorder %s41, 0
      %p467 = por %p465, %p466
      %s468 = ssub.s32 %s35, %s42
      %p469 = scmp.eq.s32.totalorder %s468, 0
      %s471 = sadd.s32 %s470, 1
      %s472 = scalar_select %p469, %s470, %s471
      %p475 = pneg %p469
      %p476 = scmp.eq.s32.totalorder %s35, 1
      %p477 = por %p475, %p476
      %p478 = scmp.ne.s32.totalorder %s470, %s473
      %p479 = scmp.eq.s32.totalorder %s35, 0
      %p480 = por %p478, %p479
      %p481 = scmp.ne.s32.totalorder %s470, %s473
      %p482 = scmp.eq.s32.totalorder %s40, 1
      %p483 = por %p481, %p482
      %p484 = scmp.ne.s32.totalorder %s473, %s474
      %p485 = scmp.eq.s32.totalorder %s40, 0
      %p486 = por %p484, %p485
      %p487 = scmp.ne.s32.totalorder %s473, %s474
      %p488 = scmp.eq.s32.totalorder %s41, 1
      %p489 = por %p487, %p488
      %p491 = scmp.ne.s32.totalorder %s474, %s490
      %p492 = scmp.eq.s32.totalorder %s41, 0
      %p493 = por %p491, %p492
      %p494 = scmp.le.s32.totalorder 1, %s35
      %p495 = scmp.lt.s32.totalorder %s35, 3
      %p496 = pnand %p494, %p495
      %p497 = pneg %p496
      // Predicated region
      $region9: #{forward.1} parent=5 // pred_check
        _
      $region10: #{forward.1} parent=5 // pred_check_branch
        %499 = sbr.rel (%p496) target = $region12
      $region11: #{forward.1} parent=5 // pred_region
        %s500 = ssub.s32 %s35, 1
        // Predicated region
        $region13: #{forward.1} parent=11 // pred_check
          %p501 = pneg %p82
        $region14: #{forward.1} parent=11 // pred_check_branch
          %503 = sbr.rel (%p501) target = $region16
        $region15: #{forward.1} parent=11 // pred_region
          _
        $region16: #{forward.1} parent=11 // pred_fallthru
          _
        // Predicated region
        $region17: #{forward.1} parent=11 // pred_check
          %p504 = pneg %p103
        $region18: #{forward.1} parent=11 // pred_check_branch
          %506 = sbr.rel (%p504) target = $region20
        $region19: #{forward.1} parent=11 // pred_region
          _
        $region20: #{forward.1} parent=11 // pred_fallthru
          _
        // Predicated region
        $region21: #{forward.1} parent=11 // pred_check
          %p507 = pneg %p124
        $region22: #{forward.1} parent=11 // pred_check_branch
          %509 = sbr.rel (%p507) target = $region24
        $region23: #{forward.1} parent=11 // pred_region
          %s511 = ssub.s32 16, 16
          %512 = vsyncadd [#allocation3], %s511
          %s514 = sshll.u32 [#allocation2], 4
          %s515 = int_to_ptr.vmem [resolvable:$true] %s514
          %517 = dma.hbm_to_vmem [thread:$0]  %s3, 16, %s515, [#allocation3]
        $region24: #{forward.1} parent=11 // pred_fallthru
          _
        // Predicated region
        $region25: #{forward.1} parent=11 // pred_check
          %p518 = pneg %p145
        $region26: #{forward.1} parent=11 // pred_check_branch
          %520 = sbr.rel (%p518) target = $region28
        $region27: #{forward.1} parent=11 // pred_region
          _
        $region28: #{forward.1} parent=11 // pred_fallthru
          _
        // Predicated region
        $region29: #{forward.1} parent=11 // pred_check
          %p521 = pneg %p166
        $region30: #{forward.1} parent=11 // pred_check_branch
          %523 = sbr.rel (%p521) target = $region32
        $region31: #{forward.1} parent=11 // pred_region
          %s525 = ssub.s32 32, 32
          %526 = vsyncadd [#allocation6], %s525
          %s527 = sshll.u32 [#allocation5], 4
          %s528 = int_to_ptr.vmem [resolvable:$true] %s527
          %533 = dma.hbm_to_vmem [thread:$0]  %s5, 32, %s528, [#allocation6], 16, 16, 1
        $region32: #{forward.1} parent=11 // pred_fallthru
          _
        // Predicated region
        $region33: #{forward.1} parent=11 // pred_check
          %p534 = pneg %p187
        $region34: #{forward.1} parent=11 // pred_check_branch
          %536 = sbr.rel (%p534) target = $region36
        $region35: #{forward.1} parent=11 // pred_region
          _
        $region36: #{forward.1} parent=11 // pred_fallthru
          _
        // Predicated region
        $region37: #{forward.1} parent=11 // pred_check
          %p537 = pneg %p208
        $region38: #{forward.1} parent=11 // pred_check_branch
          %539 = sbr.rel (%p537) target = $region40
        $region39: #{forward.1} parent=11 // pred_region
          %s541 = ssub.s32 32, 32
          %542 = vsyncadd [#allocation6], %s541
          %s543 = sshll.u32 [#allocation7], 4
          %s544 = int_to_ptr.vmem [resolvable:$true] %s543
          %549 = dma.hbm_to_vmem [thread:$0]  %s7, 32, %s544, [#allocation6], 16, 16, 1
        $region40: #{forward.1} parent=11 // pred_fallthru
          _
        // Predicated region
        $region41: #{forward.1} parent=11 // pred_check
          %p550 = pneg %p229
        $region42: #{forward.1} parent=11 // pred_check_branch
          %552 = sbr.rel (%p550) target = $region44
        $region43: #{forward.1} parent=11 // pred_region
          %s554 = ssub.s32 32, 32
          %555 = vsyncadd [#allocation9], %s554
          %s556 = sshll.u32 [#allocation8], 4
          %s557 = int_to_ptr.vmem [resolvable:$true] %s556
          %562 = dma.hbm_to_vmem [thread:$0]  %s8, 32, %s557, [#allocation9], 16, 16, 1
        $region44: #{forward.1} parent=11 // pred_fallthru
          _
        // Predicated region
        $region45: #{forward.1} parent=11 // pred_check
          %p563 = pneg %p250
        $region46: #{forward.1} parent=11 // pred_check_branch
          %565 = sbr.rel (%p563) target = $region48
        $region47: #{forward.1} parent=11 // pred_region
          %s567 = ssub.s32 32, 32
          %568 = vsyncadd [#allocation9], %s567
          %s569 = sshll.u32 [#allocation10], 4
          %s570 = int_to_ptr.vmem [resolvable:$true] %s569
          %575 = dma.hbm_to_vmem [thread:$0]  %s9, 32, %s570, [#allocation9], 16, 16, 1
        $region48: #{forward.1} parent=11 // pred_fallthru
          _
        // Predicated region
        $region49: #{forward.1} parent=11 // pred_check
          %p576 = pneg %p271
        $region50: #{forward.1} parent=11 // pred_check_branch
          %578 = sbr.rel (%p576) target = $region52
        $region51: #{forward.1} parent=11 // pred_region
          _
        $region52: #{forward.1} parent=11 // pred_fallthru
          _
        // Predicated region
        $region53: #{forward.1} parent=11 // pred_check
          %p579 = pneg %p292
        $region54: #{forward.1} parent=11 // pred_check_branch
          %581 = sbr.rel (%p579) target = $region56
        $region55: #{forward.1} parent=11 // pred_region
          %s583 = ssub.s32 32, 32
          %584 = vsyncadd [#allocation12], %s583
          %s585 = sshll.u32 [#allocation11], 4
          %s586 = int_to_ptr.vmem [resolvable:$true] %s585
          %591 = dma.hbm_to_vmem [thread:$0]  %s11, 32, %s586, [#allocation12], 16, 16, 1
        $region56: #{forward.1} parent=11 // pred_fallthru
          _
        // Predicated region
        $region57: #{forward.1} parent=11 // pred_check
          %p592 = pneg %p313
        $region58: #{forward.1} parent=11 // pred_check_branch
          %594 = sbr.rel (%p592) target = $region60
        $region59: #{forward.1} parent=11 // pred_region
          %s596 = ssub.s32 256, 256
          %597 = vsyncadd [#allocation12], %s596
          %s598 = sshll.u32 [#allocation13], 4
          %s599 = int_to_ptr.vmem [resolvable:$true] %s598
          %604 = dma.hbm_to_vmem [thread:$0]  %s12, 256, %s599, [#allocation12], 64, 64, 4
        $region60: #{forward.1} parent=11 // pred_fallthru
          _
        // Predicated region
        $region61: #{forward.1} parent=11 // pred_check
          %p605 = pneg %p334
        $region62: #{forward.1} parent=11 // pred_check_branch
          %607 = sbr.rel (%p605) target = $region64
        $region63: #{forward.1} parent=11 // pred_region
          _
        $region64: #{forward.1} parent=11 // pred_fallthru
          _
        // Predicated region
        $region65: #{forward.1} parent=11 // pred_check
          %p608 = pneg %p355
        $region66: #{forward.1} parent=11 // pred_check_branch
          %610 = sbr.rel (%p608) target = $region68
        $region67: #{forward.1} parent=11 // pred_region
          _
        $region68: #{forward.1} parent=11 // pred_fallthru
          _
        // Predicated region
        $region69: #{forward.1} parent=11 // pred_check
          %p611 = pneg %p376
        $region70: #{forward.1} parent=11 // pred_check_branch
          %613 = sbr.rel (%p611) target = $region72
        $region71: #{forward.1} parent=11 // pred_region
          %s615 = ssub.s32 32, 32
          %616 = vsyncadd [#allocation15], %s615
          %s617 = sshll.u32 [#allocation14], 4
          %s618 = int_to_ptr.vmem [resolvable:$true] %s617
          %623 = dma.hbm_to_vmem [thread:$0]  %s15, 32, %s618, [#allocation15], 16, 16, 1
        $region72: #{forward.1} parent=11 // pred_fallthru
          _
        // Predicated region
        $region73: #{forward.1} parent=11 // pred_check
          %p624 = pneg %p397
        $region74: #{forward.1} parent=11 // pred_check_branch
          %626 = sbr.rel (%p624) target = $region76
        $region75: #{forward.1} parent=11 // pred_region
          %s628 = ssub.s32 32, 32
          %629 = vsyncadd [#allocation15], %s628
          %s630 = sshll.u32 [#allocation16], 4
          %s631 = int_to_ptr.vmem [resolvable:$true] %s630
          %636 = dma.hbm_to_vmem [thread:$0]  %s16, 32, %s631, [#allocation15], 16, 16, 1
        $region76: #{forward.1} parent=11 // pred_fallthru
          _
        // Predicated region
        $region77: #{forward.1} parent=11 // pred_check
          %p637 = pneg %p418
        $region78: #{forward.1} parent=11 // pred_check_branch
          %639 = sbr.rel (%p637) target = $region80
        $region79: #{forward.1} parent=11 // pred_region
          %s641 = ssub.s32 32, 32
          %642 = vsyncadd [#allocation18], %s641
          %s643 = sshll.u32 [#allocation17], 4
          %s644 = int_to_ptr.vmem [resolvable:$true] %s643
          %649 = dma.hbm_to_vmem [thread:$0]  %s17, 32, %s644, [#allocation18], 16, 16, 1
        $region80: #{forward.1} parent=11 // pred_fallthru
          _
        // Predicated region
        $region81: #{forward.1} parent=11 // pred_check
          %p650 = pneg %p439
        $region82: #{forward.1} parent=11 // pred_check_branch
          %652 = sbr.rel (%p650) target = $region84
        $region83: #{forward.1} parent=11 // pred_region
          _
        $region84: #{forward.1} parent=11 // pred_fallthru
          _
        // Predicated region
        $region85: #{forward.1} parent=11 // pred_check
          %p653 = pneg %p460
        $region86: #{forward.1} parent=11 // pred_check_branch
          %655 = sbr.rel (%p653) target = $region88
        $region87: #{forward.1} parent=11 // pred_region
          %s657 = ssub.s32 16, 16
          %658 = vsyncadd [#allocation18], %s657
          %s660 = sshll.u32 [#allocation19], 4
          %s661 = int_to_ptr.vmem [resolvable:$true] %s660
          %663 = dma.hbm_to_vmem [thread:$0]  %s19, 16, %s661, [#allocation18]
        $region88: #{forward.1} parent=11 // pred_fallthru
          _
      $region12: #{forward.1} parent=5 // pred_fallthru
        _
      %p664 = scmp.lt.s32.totalorder %s35, 2
      // Predicated region
      $region89: #{forward.1} parent=5 // pred_check
        %p665 = pneg %p664
      $region90: #{forward.1} parent=5 // pred_check_branch
        %667 = sbr.rel (%p665) target = $region92
      $region91: #{forward.1} parent=5 // pred_region
        // Predicated region
        $region93: #{forward.1} parent=91 // pred_check
          %p668 = pneg %p55
        $region94: #{forward.1} parent=91 // pred_check_branch
          %670 = sbr.rel (%p668) target = $region96
        $region95: #{forward.1} parent=91 // pred_region
          %p671 = scmp.lt.s32.totalorder %s35, 1
          %s672 = scalar_select %p671, %s35, 1
          %s673 = smul.addr %s672, 8
          %s674 = scalar_lea.vmem %s0, %s673
        $region96: #{forward.1} parent=91 // pred_fallthru
          _
      $region92: #{forward.1} parent=5 // pred_fallthru
        _
      %p675 = scmp.le.s32.totalorder 1, %s35
      %p676 = scmp.lt.s32.totalorder %s35, 3
      %p677 = pnand %p675, %p676
      %p678 = pneg %p677
      // Predicated region
      $region97: #{forward.1} parent=5 // pred_check
        _
      $region98: #{forward.1} parent=5 // pred_check_branch
        %680 = sbr.rel (%p677) target = $region100
      $region99: #{forward.1} parent=5 // pred_region
        %s681 = ssub.s32 %s35, 1
        // Predicated region
        $region101: #{forward.1} parent=99 // pred_check
          %p682 = pneg %p124
        $region102: #{forward.1} parent=99 // pred_check_branch
          %684 = sbr.rel (%p682) target = $region104
        $region103: #{forward.1} parent=99 // pred_region
          %685 = dma.done [#allocation3], 16
        $region104: #{forward.1} parent=99 // pred_fallthru
          _
        // Predicated region
        $region105: #{forward.1} parent=99 // pred_check
          %p686 = pneg %p166
        $region106: #{forward.1} parent=99 // pred_check_branch
          %688 = sbr.rel (%p686) target = $region108
        $region107: #{forward.1} parent=99 // pred_region
          %689 = dma.done [#allocation6], 32
        $region108: #{forward.1} parent=99 // pred_fallthru
          _
        // Predicated region
        $region109: #{forward.1} parent=99 // pred_check
          %p690 = pneg %p208
        $region110: #{forward.1} parent=99 // pred_check_branch
          %692 = sbr.rel (%p690) target = $region112
        $region111: #{forward.1} parent=99 // pred_region
          %693 = dma.done [#allocation6], 32
        $region112: #{forward.1} parent=99 // pred_fallthru
          _
        // Predicated region
        $region113: #{forward.1} parent=99 // pred_check
          %p694 = pneg %p229
        $region114: #{forward.1} parent=99 // pred_check_branch
          %696 = sbr.rel (%p694) target = $region116
        $region115: #{forward.1} parent=99 // pred_region
          %697 = dma.done [#allocation9], 32
        $region116: #{forward.1} parent=99 // pred_fallthru
          _
        // Predicated region
        $region117: #{forward.1} parent=99 // pred_check
          %p698 = pneg %p250
        $region118: #{forward.1} parent=99 // pred_check_branch
          %700 = sbr.rel (%p698) target = $region120
        $region119: #{forward.1} parent=99 // pred_region
          %701 = dma.done [#allocation9], 32
        $region120: #{forward.1} parent=99 // pred_fallthru
          _
        // Predicated region
        $region121: #{forward.1} parent=99 // pred_check
          %p702 = pneg %p292
        $region122: #{forward.1} parent=99 // pred_check_branch
          %704 = sbr.rel (%p702) target = $region124
        $region123: #{forward.1} parent=99 // pred_region
          %705 = dma.done [#allocation12], 32
        $region124: #{forward.1} parent=99 // pred_fallthru
          _
        // Predicated region
        $region125: #{forward.1} parent=99 // pred_check
          %p706 = pneg %p313
        $region126: #{forward.1} parent=99 // pred_check_branch
          %708 = sbr.rel (%p706) target = $region128
        $region127: #{forward.1} parent=99 // pred_region
          %709 = dma.done [#allocation12], 256
        $region128: #{forward.1} parent=99 // pred_fallthru
          _
        // Predicated region
        $region129: #{forward.1} parent=99 // pred_check
          %p710 = pneg %p376
        $region130: #{forward.1} parent=99 // pred_check_branch
          %712 = sbr.rel (%p710) target = $region132
        $region131: #{forward.1} parent=99 // pred_region
          %713 = dma.done [#allocation15], 32
        $region132: #{forward.1} parent=99 // pred_fallthru
          _
        // Predicated region
        $region133: #{forward.1} parent=99 // pred_check
          %p714 = pneg %p397
        $region134: #{forward.1} parent=99 // pred_check_branch
          %716 = sbr.rel (%p714) target = $region136
        $region135: #{forward.1} parent=99 // pred_region
          %717 = dma.done [#allocation15], 32
        $region136: #{forward.1} parent=99 // pred_fallthru
          _
        // Predicated region
        $region137: #{forward.1} parent=99 // pred_check
          %p718 = pneg %p418
        $region138: #{forward.1} parent=99 // pred_check_branch
          %720 = sbr.rel (%p718) target = $region140
        $region139: #{forward.1} parent=99 // pred_region
          %721 = dma.done [#allocation18], 32
        $region140: #{forward.1} parent=99 // pred_fallthru
          _
        // Predicated region
        $region141: #{forward.1} parent=99 // pred_check
          %p722 = pneg %p460
        $region142: #{forward.1} parent=99 // pred_check_branch
          %724 = sbr.rel (%p722) target = $region144
        $region143: #{forward.1} parent=99 // pred_region
          %725 = dma.done [#allocation18], 16
        $region144: #{forward.1} parent=99 // pred_fallthru
          _
        %p726 = scmp.lt.s32.totalorder %s40, 1
        %s727 = scalar_select %p726, %s40, 1
        %s728 = smul.addr %s727, 8
        %s729 = scalar_lea.vmem %s0, %s728
        %p730 = pneg %p61
        %p731 = pneg %p58
        %p732 = pneg %p82
        %p733 = pneg %p79
        %p734 = pneg %p103
        %p735 = pneg %p100
        %p736 = pneg %p124
        %p737 = pneg %p121
        %p738 = pneg %p145
        %p739 = pneg %p142
        %p740 = pneg %p166
        %p741 = pneg %p163
        %p742 = pneg %p187
        %p743 = pneg %p184
        %p744 = pneg %p208
        %p745 = pneg %p205
        %p746 = pneg %p229
        %p747 = pneg %p226
        %p748 = pneg %p250
        %p749 = pneg %p247
        %p750 = pneg %p271
        %p751 = pneg %p268
        %p752 = pneg %p292
        %p753 = pneg %p289
        %p754 = pneg %p313
        %p755 = pneg %p310
        %p756 = pneg %p334
        %p757 = pneg %p331
        %p758 = pneg %p355
        %p759 = pneg %p352
        %p760 = pneg %p376
        %p761 = pneg %p373
        %p762 = pneg %p397
        %p763 = pneg %p394
        %p764 = pneg %p418
        %p765 = pneg %p415
        %p766 = pneg %p439
        %p767 = pneg %p436
        %p768 = pneg %p460
        %p769 = pneg %p457
        %p770 = pneg %p486
        %p771 = pneg %p483
        %s772 = sand.u32 %s473, 1
        %s773 = scalar_lea.sflag [#allocation4], %s772
        %s774 = sand.u32 %s473, 1
        %s775 = scalar_lea.vmem [#allocation20], %s774
        %p776 = scmp.lt.s32.totalorder %s40, 1
        %s777 = scalar_select %p776, %s40, 1
        %s778 = smul.addr %s777, 8
        %s779 = scalar_lea.vmem %s0, %s778
        %v781 = vld [vmem:[%s779] sm:$0xff]
        %v782 = vld [vmem:[%s2] sm:$0x3]
        %v783 = vpack.c.bf16 %v781, %v781
        %v784 = vld [vmem:[#allocation2] sm:$0x1]
        %v786 = vlaneseq
        %v787 = vshrl.u32 %v786, 7
        %v788 = vsub.s32 0, %v787
        %v789 = vrot.slane %v784, %v788
        %vm791 = vcmask 31744
        %v793 = vsel %vm791, %v783, 0
        %vm795 = vcmask 1041408
        %v797 = vsel %vm795, %v782, 0
        %799 = vmatprep.subr.bf16.mxu0 0
        %800 = vmatpush1.bf16.msra.mxu0 %v797
        %801 = vmatprep.subr.bf16.mxu0 0
        %802 = vmatpush1.bf16.msra.mxu0 0
        %803 = vmatprep.subr.bf16.mxu0 0
        %804 = vmatpush1.bf16.msra.mxu0 0
        %805 = vmatprep.subr.bf16.mxu0 0
        %806 = vmatpush1.bf16.msra.mxu0 0
        %807 = vmatprep.subr.bf16.mxu0 0
        %808 = vmatpush1.bf16.msra.mxu0 0
        %809 = vmatprep.subr.bf16.mxu0 0
        %810 = vmatpush1.bf16.msra.mxu0 0
        %811 = vmatprep.subr.bf16.mxu0 0
        %812 = vmatpush1.bf16.msra.mxu0 0
        %813 = vmatprep.subr.bf16.mxu0 0
        %814 = vmatpush1.bf16.msra.mxu0 0
        %815 = vmatprep.subr.bf16.mxu0 0
        %816 = vmatpush1.bf16.msra.mxu0 0
        %817 = vmatprep.subr.bf16.mxu0 0
        %818 = vmatpush1.bf16.msra.mxu0 0
        %819 = vmatprep.subr.bf16.mxu0 0
        %820 = vmatpush1.bf16.msra.mxu0 0
        %821 = vmatprep.subr.bf16.mxu0 0
        %822 = vmatpush1.bf16.msra.mxu0 0
        %823 = vmatprep.subr.bf16.mxu0 0
        %824 = vmatpush1.bf16.msra.mxu0 0
        %825 = vmatprep.subr.bf16.mxu0 0
        %826 = vmatpush1.bf16.msra.mxu0 0
        %827 = vmatprep.subr.bf16.mxu0 0
        %828 = vmatpush1.bf16.msra.mxu0 0
        %829 = vmatprep.subr.bf16.mxu0 0
        %830 = vmatpush1.bf16.msra.mxu0 0
        %831 = vmatprep.mubr.bf16.mxu0 0
        %832 = vmatmul.mubr.bf16.gmra.mrb[0].mxu0 %v793
        %v833 = vpop.f32.mrb[0].mxu0
        %v834 = vadd.f32 %v789, %v833
        %v835 = vpop.f32.mrb[0].mxu0
        %v836 = vpop.f32.mrb[0].mxu0
        %v837 = vpop.f32.mrb[0].mxu0
        %838 = vdwg.mxu0
        %v839 = vld [vmem:[%s1] sm:$0xff]
        %v840 = vadd.f32 %v834, %v839
        %v841 = vld [vmem:[%s4] sm:$0xf]
        %v842 = vld [vmem:[%s4 + $0x4] sm:$0xf]
        %v843 = vld [vmem:[%s4 + $0x8] sm:$0xf]
        %v844 = vld [vmem:[%s4 + $0xc] sm:$0xf]
        %v845 = vpack.c.bf16 %v840, %v840
        %v846 = vld [vmem:[#allocation5] sm:$0x1]
        %v848 = vlaneseq
        %v849 = vshrl.u32 %v848, 7
        %v850 = vsub.s32 0, %v849
        %v851 = vrot.slane %v846, %v850
        %v857 = vunpack.c.l.b16 %v841
        %v858 = vunpack.c.l.b16 %v842
        %v859 = vunpack.c.l.b16 %v843
        %v860 = vunpack.c.l.b16 %v844
        %v861 = vpack.c.b16 %v858, %v857
        %v862 = vpack.c.b16 %v860, %v859
        %vm865 = vcmask 261120
        %v867 = vsel %vm865, %v845, 0
        %869 = vmatprep.subr.bf16.mxu0 0
        %870 = vmatpush1.bf16.msra.mxu0 %v861
        %871 = vmatprep.subr.bf16.mxu0 0
        %872 = vmatpush1.bf16.msra.mxu0 %v862
        %873 = vmatprep.subr.bf16.mxu0 0
        %874 = vmatpush1.bf16.msra.mxu0 0
        %875 = vmatprep.subr.bf16.mxu0 0
        %876 = vmatpush1.bf16.msra.mxu0 0
        %877 = vmatprep.subr.bf16.mxu0 0
        %878 = vmatpush1.bf16.msra.mxu0 0
        %879 = vmatprep.subr.bf16.mxu0 0
        %880 = vmatpush1.bf16.msra.mxu0 0
        %881 = vmatprep.subr.bf16.mxu0 0
        %882 = vmatpush1.bf16.msra.mxu0 0
        %883 = vmatprep.subr.bf16.mxu0 0
        %884 = vmatpush1.bf16.msra.mxu0 0
        %885 = vmatprep.subr.bf16.mxu0 0
        %886 = vmatpush1.bf16.msra.mxu0 0
        %887 = vmatprep.subr.bf16.mxu0 0
        %888 = vmatpush1.bf16.msra.mxu0 0
        %889 = vmatprep.subr.bf16.mxu0 0
        %890 = vmatpush1.bf16.msra.mxu0 0
        %891 = vmatprep.subr.bf16.mxu0 0
        %892 = vmatpush1.bf16.msra.mxu0 0
        %893 = vmatprep.subr.bf16.mxu0 0
        %894 = vmatpush1.bf16.msra.mxu0 0
        %895 = vmatprep.subr.bf16.mxu0 0
        %896 = vmatpush1.bf16.msra.mxu0 0
        %897 = vmatprep.subr.bf16.mxu0 0
        %898 = vmatpush1.bf16.msra.mxu0 0
        %899 = vmatprep.subr.bf16.mxu0 0
        %900 = vmatpush1.bf16.msra.mxu0 0
        %901 = vmatprep.mubr.bf16.mxu0 0
        %902 = vmatmul.mubr.bf16.gmra.mrb[0].mxu0 %v867
        %v903 = vpop.f32.mrb[0].mxu0
        %v904 = vadd.f32 %v851, %v903
        %v905 = vpop.f32.mrb[0].mxu0
        %v906 = vpop.f32.mrb[0].mxu0
        %v907 = vpop.f32.mrb[0].mxu0
        %908 = vdwg.mxu0
        %v909 = vld [vmem:[%s6] sm:$0xf]
        %v910 = vld [vmem:[%s6 + $0x4] sm:$0xf]
        %v911 = vld [vmem:[%s6 + $0x8] sm:$0xf]
        %v912 = vld [vmem:[%s6 + $0xc] sm:$0xf]
        %v913 = vpack.c.bf16 %v904, %v904
        %915 = vrot.lane.b32.xlu0 %v913, 96
        %v916 = vpop.permute.xlu0 %915
        %vm917 = vcmask 64512
        %v919 = vsel %vm917, %v913, 0
        %v922 = vsel %vm917, %v916, 0
        %924 = vmatprep.subr.bf16.mxu0 0
        %925 = vmatpush1.bf16.xpose.msra.mxu0 %v922
        %926 = vmatprep.subr.bf16.mxu0 0
        %927 = vmatpush1.bf16.xpose.msra.mxu0 0
        %928 = vmatprep.subr.bf16.mxu0 0
        %929 = vmatpush1.bf16.xpose.msra.mxu0 0
        %930 = vmatprep.subr.bf16.mxu0 0
        %931 = vmatpush1.bf16.xpose.msra.mxu0 0
        %932 = vmatprep.subr.bf16.mxu0 0
        %933 = vmatpush1.bf16.xpose.msra.mxu0 0
        %934 = vmatprep.subr.bf16.mxu0 0
        %935 = vmatpush1.bf16.xpose.msra.mxu0 0
        %936 = vmatprep.subr.bf16.mxu0 0
        %937 = vmatpush1.bf16.xpose.msra.mxu0 0
        %938 = vmatprep.subr.bf16.mxu0 0
        %939 = vmatpush1.bf16.xpose.msra.mxu0 0
        %940 = vmatprep.subr.bf16.mxu0 0
        %941 = vmatpush1.bf16.xpose.msra.mxu0 0
        %942 = vmatprep.subr.bf16.mxu0 0
        %943 = vmatpush1.bf16.xpose.msra.mxu0 0
        %944 = vmatprep.subr.bf16.mxu0 0
        %945 = vmatpush1.bf16.xpose.msra.mxu0 0
        %946 = vmatprep.subr.bf16.mxu0 0
        %947 = vmatpush1.bf16.xpose.msra.mxu0 0
        %948 = vmatprep.subr.bf16.mxu0 0
        %949 = vmatpush1.bf16.xpose.msra.mxu0 0
        %950 = vmatprep.subr.bf16.mxu0 0
        %951 = vmatpush1.bf16.xpose.msra.mxu0 0
        %952 = vmatprep.subr.bf16.mxu0 0
        %953 = vmatpush1.bf16.xpose.msra.mxu0 0
        %954 = vmatprep.subr.bf16.mxu0 0
        %955 = vmatpush1.bf16.xpose.msra.mxu0 0
        %956 = vmatprep.mubr.bf16.mxu0 0
        %957 = vmatmul.mubr.bf16.gmra.mrb[0].mxu0 %v919
        %v958 = vpop.f32.mrb[0].mxu0
        %v959 = vadd.f32 0.0, %v958
        %v960 = vpop.f32.mrb[0].mxu0
        %v961 = vpop.f32.mrb[0].mxu0
        %v962 = vpop.f32.mrb[0].mxu0
        %963 = vdwg.mxu0
        %v964 = vmul.f32 %v959, 0.35355338
        %v965 = vsel %vm917, %v964, -inf
        %966 = vmax.xlane.f32.xlu0 %v965
        %v967 = vpop.xlane.xlu0 %966
        %v968 = vsub.f32 %v964, %v967
        %v969 = vmul.f32 %v968, 1.442695
        %v970 = vpow.pop %v969
        %v971 = vsel %vm917, %v970, 0.0
        %972 = vadd.xlane.f32.xlu0 %v971
        %v973 = vpop.xlane.xlu0 %972
        %v974 = vrcp.pop %v973
        %v975 = vmul.f32 %v970, %v974
        %v976 = vpack.c.bf16 %v975, %v975
        %977 = vrot.lane.b32.xlu0 %v913, 64
        %v978 = vpop.permute.xlu0 %977
        %v980 = vsel %vm917, %v976, 0
        %vm982 = vcmask 1043456
        %v984 = vsel %vm982, %v978, 0
        %986 = vmatprep.subr.bf16.mxu0 0
        %987 = vmatpush1.bf16.msra.mxu0 %v984
        %988 = vmatprep.subr.bf16.mxu0 0
        %989 = vmatpush1.bf16.msra.mxu0 0
        %990 = vmatprep.subr.bf16.mxu0 0
        %991 = vmatpush1.bf16.msra.mxu0 0
        %992 = vmatprep.subr.bf16.mxu0 0
        %993 = vmatpush1.bf16.msra.mxu0 0
        %994 = vmatprep.subr.bf16.mxu0 0
        %995 = vmatpush1.bf16.msra.mxu0 0
        %996 = vmatprep.subr.bf16.mxu0 0
        %997 = vmatpush1.bf16.msra.mxu0 0
        %998 = vmatprep.subr.bf16.mxu0 0
        %999 = vmatpush1.bf16.msra.mxu0 0
        %1000 = vmatprep.subr.bf16.mxu0 0
        %1001 = vmatpush1.bf16.msra.mxu0 0
        %1002 = vmatprep.subr.bf16.mxu0 0
        %1003 = vmatpush1.bf16.msra.mxu0 0
        %1004 = vmatprep.subr.bf16.mxu0 0
        %1005 = vmatpush1.bf16.msra.mxu0 0
        %1006 = vmatprep.subr.bf16.mxu0 0
        %1007 = vmatpush1.bf16.msra.mxu0 0
        %1008 = vmatprep.subr.bf16.mxu0 0
        %1009 = vmatpush1.bf16.msra.mxu0 0
        %1010 = vmatprep.subr.bf16.mxu0 0
        %1011 = vmatpush1.bf16.msra.mxu0 0
        %1012 = vmatprep.subr.bf16.mxu0 0
        %1013 = vmatpush1.bf16.msra.mxu0 0
        %1014 = vmatprep.subr.bf16.mxu0 0
        %1015 = vmatpush1.bf16.msra.mxu0 0
        %1016 = vmatprep.subr.bf16.mxu0 0
        %1017 = vmatpush1.bf16.msra.mxu0 0
        %1018 = vmatprep.mubr.bf16.mxu0 0
        %1019 = vmatmul.mubr.bf16.gmra.mrb[0].mxu0 %v980
        %v1020 = vpop.f32.mrb[0].mxu0
        %v1021 = vadd.f32 0.0, %v1020
        %v1022 = vpop.f32.mrb[0].mxu0
        %v1023 = vpop.f32.mrb[0].mxu0
        %v1024 = vpop.f32.mrb[0].mxu0
        %1025 = vdwg.mxu0
        %v1026 = vpack.c.bf16 %v1021, %v1021
        %1027 = vrot.lane.b32.xlu0 %v913, 120
        %v1028 = vpop.permute.xlu0 %1027
        %1029 = vrot.lane.b32.xlu0 %v913, 88
        %v1030 = vpop.permute.xlu0 %1029
        %v1032 = vsel %vm917, %v1028, 0
        %v1035 = vsel %vm917, %v1030, 0
        %1037 = vmatprep.subr.bf16.mxu0 0
        %1038 = vmatpush1.bf16.xpose.msra.mxu0 %v1035
        %1039 = vmatprep.subr.bf16.mxu0 0
        %1040 = vmatpush1.bf16.xpose.msra.mxu0 0
        %1041 = vmatprep.subr.bf16.mxu0 0
        %1042 = vmatpush1.bf16.xpose.msra.mxu0 0
        %1043 = vmatprep.subr.bf16.mxu0 0
        %1044 = vmatpush1.bf16.xpose.msra.mxu0 0
        %1045 = vmatprep.subr.bf16.mxu0 0
        %1046 = vmatpush1.bf16.xpose.msra.mxu0 0
        %1047 = vmatprep.subr.bf16.mxu0 0
        %1048 = vmatpush1.bf16.xpose.msra.mxu0 0
        %1049 = vmatprep.subr.bf16.mxu0 0
        %1050 = vmatpush1.bf16.xpose.msra.mxu0 0
        %1051 = vmatprep.subr.bf16.mxu0 0
        %1052 = vmatpush1.bf16.xpose.msra.mxu0 0
        %1053 = vmatprep.subr.bf16.mxu0 0
        %1054 = vmatpush1.bf16.xpose.msra.mxu0 0
        %1055 = vmatprep.subr.bf16.mxu0 0
        %1056 = vmatpush1.bf16.xpose.msra.mxu0 0
        %1057 = vmatprep.subr.bf16.mxu0 0
        %1058 = vmatpush1.bf16.xpose.msra.mxu0 0
        %1059 = vmatprep.subr.bf16.mxu0 0
        %1060 = vmatpush1.bf16.xpose.msra.mxu0 0
        %1061 = vmatprep.subr.bf16.mxu0 0
        %1062 = vmatpush1.bf16.xpose.msra.mxu0 0
        %1063 = vmatprep.subr.bf16.mxu0 0
        %1064 = vmatpush1.bf16.xpose.msra.mxu0 0
        %1065 = vmatprep.subr.bf16.mxu0 0
        %1066 = vmatpush1.bf16.xpose.msra.mxu0 0
        %1067 = vmatprep.subr.bf16.mxu0 0
        %1068 = vmatpush1.bf16.xpose.msra.mxu0 0
        %1069 = vmatprep.mubr.bf16.mxu0 0
        %1070 = vmatmul.mubr.bf16.gmra.mrb[0].mxu0 %v1032
        %v1071 = vpop.f32.mrb[0].mxu0
        %v1072 = vadd.f32 0.0, %v1071
        %v1073 = vpop.f32.mrb[0].mxu0
        %v1074 = vpop.f32.mrb[0].mxu0
        %v1075 = vpop.f32.mrb[0].mxu0
        %1076 = vdwg.mxu0
        %v1077 = vmul.f32 %v1072, 0.35355338
        %v1078 = vsel %vm917, %v1077, -inf
        %1079 = vmax.xlane.f32.xlu0 %v1078
        %v1080 = vpop.xlane.xlu0 %1079
        %v1081 = vsub.f32 %v1077, %v1080
        %v1082 = vmul.f32 %v1081, 1.442695
        %v1083 = vpow.pop %v1082
        %v1084 = vsel %vm917, %v1083, 0.0
        %1085 = vadd.xlane.f32.xlu0 %v1084
        %v1086 = vpop.xlane.xlu0 %1085
        %v1087 = vrcp.pop %v1086
        %v1088 = vmul.f32 %v1083, %v1087
        %v1089 = vpack.c.bf16 %v1088, %v1088
        %1090 = vrot.lane.b32.xlu0 %v913, 56
        %v1091 = vpop.permute.xlu0 %1090
        %v1093 = vsel %vm917, %v1089, 0
        %v1096 = vsel %vm982, %v1091, 0
        %1098 = vmatprep.subr.bf16.mxu0 0
        %1099 = vmatpush1.bf16.msra.mxu0 %v1096
        %1100 = vmatprep.subr.bf16.mxu0 0
        %1101 = vmatpush1.bf16.msra.mxu0 0
        %1102 = vmatprep.subr.bf16.mxu0 0
        %1103 = vmatpush1.bf16.msra.mxu0 0
        %1104 = vmatprep.subr.bf16.mxu0 0
        %1105 = vmatpush1.bf16.msra.mxu0 0
        %1106 = vmatprep.subr.bf16.mxu0 0
        %1107 = vmatpush1.bf16.msra.mxu0 0
        %1108 = vmatprep.subr.bf16.mxu0 0
        %1109 = vmatpush1.bf16.msra.mxu0 0
        %1110 = vmatprep.subr.bf16.mxu0 0
        %1111 = vmatpush1.bf16.msra.mxu0 0
        %1112 = vmatprep.subr.bf16.mxu0 0
        %1113 = vmatpush1.bf16.msra.mxu0 0
        %1114 = vmatprep.subr.bf16.mxu0 0
        %1115 = vmatpush1.bf16.msra.mxu0 0
        %1116 = vmatprep.subr.bf16.mxu0 0
        %1117 = vmatpush1.bf16.msra.mxu0 0
        %1118 = vmatprep.subr.bf16.mxu0 0
        %1119 = vmatpush1.bf16.msra.mxu0 0
        %1120 = vmatprep.subr.bf16.mxu0 0
        %1121 = vmatpush1.bf16.msra.mxu0 0
        %1122 = vmatprep.subr.bf16.mxu0 0
        %1123 = vmatpush1.bf16.msra.mxu0 0
        %1124 = vmatprep.subr.bf16.mxu0 0
        %1125 = vmatpush1.bf16.msra.mxu0 0
        %1126 = vmatprep.subr.bf16.mxu0 0
        %1127 = vmatpush1.bf16.msra.mxu0 0
        %1128 = vmatprep.subr.bf16.mxu0 0
        %1129 = vmatpush1.bf16.msra.mxu0 0
        %1130 = vmatprep.mubr.bf16.mxu0 0
        %1131 = vmatmul.mubr.bf16.gmra.mrb[0].mxu0 %v1093
        %v1132 = vpop.f32.mrb[0].mxu0
        %v1133 = vadd.f32 0.0, %v1132
        %v1134 = vpop.f32.mrb[0].mxu0
        %v1135 = vpop.f32.mrb[0].mxu0
        %v1136 = vpop.f32.mrb[0].mxu0
        %1137 = vdwg.mxu0
        %v1138 = vpack.c.bf16 %v1133, %v1133
        %v1140 = vsel %vm917, %v1138, 0
        %v1143 = vsel %vm982, %v910, 0
        %1145 = vmatprep.subr.bf16.mxu0 0
        %1146 = vmatpush1.bf16.msra.mxu0 %v1143
        %1147 = vmatprep.subr.bf16.mxu0 0
        %1148 = vmatpush1.bf16.msra.mxu0 0
        %1149 = vmatprep.subr.bf16.mxu0 0
        %1150 = vmatpush1.bf16.msra.mxu0 0
        %1151 = vmatprep.subr.bf16.mxu0 0
        %1152 = vmatpush1.bf16.msra.mxu0 0
        %1153 = vmatprep.subr.bf16.mxu0 0
        %1154 = vmatpush1.bf16.msra.mxu0 0
        %1155 = vmatprep.subr.bf16.mxu0 0
        %1156 = vmatpush1.bf16.msra.mxu0 0
        %1157 = vmatprep.subr.bf16.mxu0 0
        %1158 = vmatpush1.bf16.msra.mxu0 0
        %1159 = vmatprep.subr.bf16.mxu0 0
        %1160 = vmatpush1.bf16.msra.mxu0 0
        %1161 = vmatprep.subr.bf16.mxu0 0
        %1162 = vmatpush1.bf16.msra.mxu0 0
        %1163 = vmatprep.subr.bf16.mxu0 0
        %1164 = vmatpush1.bf16.msra.mxu0 0
        %1165 = vmatprep.subr.bf16.mxu0 0
        %1166 = vmatpush1.bf16.msra.mxu0 0
        %1167 = vmatprep.subr.bf16.mxu0 0
        %1168 = vmatpush1.bf16.msra.mxu0 0
        %1169 = vmatprep.subr.bf16.mxu0 0
        %1170 = vmatpush1.bf16.msra.mxu0 0
        %1171 = vmatprep.subr.bf16.mxu0 0
        %1172 = vmatpush1.bf16.msra.mxu0 0
        %1173 = vmatprep.subr.bf16.mxu0 0
        %1174 = vmatpush1.bf16.msra.mxu0 0
        %1175 = vmatprep.subr.bf16.mxu0 0
        %1176 = vmatpush1.bf16.msra.mxu0 0
        %1177 = vmatprep.mubr.bf16.mxu0 0
        %1178 = vmatmul.mubr.bf16.gmra.mrb[0].mxu0 %v1140
        %v1179 = vpop.f32.mrb[0].mxu0
        %v1180 = vadd.f32 0.0, %v1179
        %v1181 = vpop.f32.mrb[0].mxu0
        %v1182 = vpop.f32.mrb[0].mxu0
        %v1183 = vpop.f32.mrb[0].mxu0
        %1184 = vdwg.mxu0
        %v1186 = vsel %vm917, %v1026, 0
        %v1189 = vsel %vm982, %v909, 0
        %1191 = vmatprep.subr.bf16.mxu0 0
        %1192 = vmatpush1.bf16.msra.mxu0 %v1189
        %1193 = vmatprep.subr.bf16.mxu0 0
        %1194 = vmatpush1.bf16.msra.mxu0 0
        %1195 = vmatprep.subr.bf16.mxu0 0
        %1196 = vmatpush1.bf16.msra.mxu0 0
        %1197 = vmatprep.subr.bf16.mxu0 0
        %1198 = vmatpush1.bf16.msra.mxu0 0
        %1199 = vmatprep.subr.bf16.mxu0 0
        %1200 = vmatpush1.bf16.msra.mxu0 0
        %1201 = vmatprep.subr.bf16.mxu0 0
        %1202 = vmatpush1.bf16.msra.mxu0 0
        %1203 = vmatprep.subr.bf16.mxu0 0
        %1204 = vmatpush1.bf16.msra.mxu0 0
        %1205 = vmatprep.subr.bf16.mxu0 0
        %1206 = vmatpush1.bf16.msra.mxu0 0
        %1207 = vmatprep.subr.bf16.mxu0 0
        %1208 = vmatpush1.bf16.msra.mxu0 0
        %1209 = vmatprep.subr.bf16.mxu0 0
        %1210 = vmatpush1.bf16.msra.mxu0 0
        %1211 = vmatprep.subr.bf16.mxu0 0
        %1212 = vmatpush1.bf16.msra.mxu0 0
        %1213 = vmatprep.subr.bf16.mxu0 0
        %1214 = vmatpush1.bf16.msra.mxu0 0
        %1215 = vmatprep.subr.bf16.mxu0 0
        %1216 = vmatpush1.bf16.msra.mxu0 0
        %1217 = vmatprep.subr.bf16.mxu0 0
        %1218 = vmatpush1.bf16.msra.mxu0 0
        %1219 = vmatprep.subr.bf16.mxu0 0
        %1220 = vmatpush1.bf16.msra.mxu0 0
        %1221 = vmatprep.subr.bf16.mxu0 0
        %1222 = vmatpush1.bf16.msra.mxu0 0
        %1223 = vmatprep.mubr.bf16.mxu0 0
        %1224 = vmatmul.mubr.bf16.gmra.mrb[0].mxu0 %v1186
        %v1225 = vpop.f32.mrb[0].mxu0
        %v1226 = vadd.f32 %v1180, %v1225
        %v1227 = vpop.f32.mrb[0].mxu0
        %v1228 = vpop.f32.mrb[0].mxu0
        %v1229 = vpop.f32.mrb[0].mxu0
        %1230 = vdwg.mxu0
        %1231 = vrot.lane.b32.xlu0 %v913, 112
        %v1232 = vpop.permute.xlu0 %1231
        %1233 = vrot.lane.b32.xlu0 %v913, 80
        %v1234 = vpop.permute.xlu0 %1233
        %v1236 = vsel %vm917, %v1232, 0
        %v1239 = vsel %vm917, %v1234, 0
        %1241 = vmatprep.subr.bf16.mxu0 0
        %1242 = vmatpush1.bf16.xpose.msra.mxu0 %v1239
        %1243 = vmatprep.subr.bf16.mxu0 0
        %1244 = vmatpush1.bf16.xpose.msra.mxu0 0
        %1245 = vmatprep.subr.bf16.mxu0 0
        %1246 = vmatpush1.bf16.xpose.msra.mxu0 0
        %1247 = vmatprep.subr.bf16.mxu0 0
        %1248 = vmatpush1.bf16.xpose.msra.mxu0 0
        %1249 = vmatprep.subr.bf16.mxu0 0
        %1250 = vmatpush1.bf16.xpose.msra.mxu0 0
        %1251 = vmatprep.subr.bf16.mxu0 0
        %1252 = vmatpush1.bf16.xpose.msra.mxu0 0
        %1253 = vmatprep.subr.bf16.mxu0 0
        %1254 = vmatpush1.bf16.xpose.msra.mxu0 0
        %1255 = vmatprep.subr.bf16.mxu0 0
        %1256 = vmatpush1.bf16.xpose.msra.mxu0 0
        %1257 = vmatprep.subr.bf16.mxu0 0
        %1258 = vmatpush1.bf16.xpose.msra.mxu0 0
        %1259 = vmatprep.subr.bf16.mxu0 0
        %1260 = vmatpush1.bf16.xpose.msra.mxu0 0
        %1261 = vmatprep.subr.bf16.mxu0 0
        %1262 = vmatpush1.bf16.xpose.msra.mxu0 0
        %1263 = vmatprep.subr.bf16.mxu0 0
        %1264 = vmatpush1.bf16.xpose.msra.mxu0 0
        %1265 = vmatprep.subr.bf16.mxu0 0
        %1266 = vmatpush1.bf16.xpose.msra.mxu0 0
        %1267 = vmatprep.subr.bf16.mxu0 0
        %1268 = vmatpush1.bf16.xpose.msra.mxu0 0
        %1269 = vmatprep.subr.bf16.mxu0 0
        %1270 = vmatpush1.bf16.xpose.msra.mxu0 0
        %1271 = vmatprep.subr.bf16.mxu0 0
        %1272 = vmatpush1.bf16.xpose.msra.mxu0 0
        %1273 = vmatprep.mubr.bf16.mxu0 0
        %1274 = vmatmul.mubr.bf16.gmra.mrb[0].mxu0 %v1236
        %v1275 = vpop.f32.mrb[0].mxu0
        %v1276 = vadd.f32 0.0, %v1275
        %v1277 = vpop.f32.mrb[0].mxu0
        %v1278 = vpop.f32.mrb[0].mxu0
        %v1279 = vpop.f32.mrb[0].mxu0
        %1280 = vdwg.mxu0
        %v1281 = vmul.f32 %v1276, 0.35355338
        %v1282 = vsel %vm917, %v1281, -inf
        %1283 = vmax.xlane.f32.xlu0 %v1282
        %v1284 = vpop.xlane.xlu0 %1283
        %v1285 = vsub.f32 %v1281, %v1284
        %v1286 = vmul.f32 %v1285, 1.442695
        %v1287 = vpow.pop %v1286
        %v1288 = vsel %vm917, %v1287, 0.0
        %1289 = vadd.xlane.f32.xlu0 %v1288
        %v1290 = vpop.xlane.xlu0 %1289
        %v1291 = vrcp.pop %v1290
        %v1292 = vmul.f32 %v1287, %v1291
        %v1293 = vpack.c.bf16 %v1292, %v1292
        %1294 = vrot.lane.b32.xlu0 %v913, 48
        %v1295 = vpop.permute.xlu0 %1294
        %v1297 = vsel %vm917, %v1293, 0
        %v1300 = vsel %vm982, %v1295, 0
        %1302 = vmatprep.subr.bf16.mxu0 0
        %1303 = vmatpush1.bf16.msra.mxu0 %v1300
        %1304 = vmatprep.subr.bf16.mxu0 0
        %1305 = vmatpush1.bf16.msra.mxu0 0
        %1306 = vmatprep.subr.bf16.mxu0 0
        %1307 = vmatpush1.bf16.msra.mxu0 0
        %1308 = vmatprep.subr.bf16.mxu0 0
        %1309 = vmatpush1.bf16.msra.mxu0 0
        %1310 = vmatprep.subr.bf16.mxu0 0
        %1311 = vmatpush1.bf16.msra.mxu0 0
        %1312 = vmatprep.subr.bf16.mxu0 0
        %1313 = vmatpush1.bf16.msra.mxu0 0
        %1314 = vmatprep.subr.bf16.mxu0 0
        %1315 = vmatpush1.bf16.msra.mxu0 0
        %1316 = vmatprep.subr.bf16.mxu0 0
        %1317 = vmatpush1.bf16.msra.mxu0 0
        %1318 = vmatprep.subr.bf16.mxu0 0
        %1319 = vmatpush1.bf16.msra.mxu0 0
        %1320 = vmatprep.subr.bf16.mxu0 0
        %1321 = vmatpush1.bf16.msra.mxu0 0
        %1322 = vmatprep.subr.bf16.mxu0 0
        %1323 = vmatpush1.bf16.msra.mxu0 0
        %1324 = vmatprep.subr.bf16.mxu0 0
        %1325 = vmatpush1.bf16.msra.mxu0 0
        %1326 = vmatprep.subr.bf16.mxu0 0
        %1327 = vmatpush1.bf16.msra.mxu0 0
        %1328 = vmatprep.subr.bf16.mxu0 0
        %1329 = vmatpush1.bf16.msra.mxu0 0
        %1330 = vmatprep.subr.bf16.mxu0 0
        %1331 = vmatpush1.bf16.msra.mxu0 0
        %1332 = vmatprep.subr.bf16.mxu0 0
        %1333 = vmatpush1.bf16.msra.mxu0 0
        %1334 = vmatprep.mubr.bf16.mxu0 0
        %1335 = vmatmul.mubr.bf16.gmra.mrb[0].mxu0 %v1297
        %v1336 = vpop.f32.mrb[0].mxu0
        %v1337 = vadd.f32 0.0, %v1336
        %v1338 = vpop.f32.mrb[0].mxu0
        %v1339 = vpop.f32.mrb[0].mxu0
        %v1340 = vpop.f32.mrb[0].mxu0
        %1341 = vdwg.mxu0
        %v1342 = vpack.c.bf16 %v1337, %v1337
        %v1344 = vsel %vm917, %v1342, 0
        %v1347 = vsel %vm982, %v911, 0
        %1349 = vmatprep.subr.bf16.mxu0 0
        %1350 = vmatpush1.bf16.msra.mxu0 %v1347
        %1351 = vmatprep.subr.bf16.mxu0 0
        %1352 = vmatpush1.bf16.msra.mxu0 0
        %1353 = vmatprep.subr.bf16.mxu0 0
        %1354 = vmatpush1.bf16.msra.mxu0 0
        %1355 = vmatprep.subr.bf16.mxu0 0
        %1356 = vmatpush1.bf16.msra.mxu0 0
        %1357 = vmatprep.subr.bf16.mxu0 0
        %1358 = vmatpush1.bf16.msra.mxu0 0
        %1359 = vmatprep.subr.bf16.mxu0 0
        %1360 = vmatpush1.bf16.msra.mxu0 0
        %1361 = vmatprep.subr.bf16.mxu0 0
        %1362 = vmatpush1.bf16.msra.mxu0 0
        %1363 = vmatprep.subr.bf16.mxu0 0
        %1364 = vmatpush1.bf16.msra.mxu0 0
        %1365 = vmatprep.subr.bf16.mxu0 0
        %1366 = vmatpush1.bf16.msra.mxu0 0
        %1367 = vmatprep.subr.bf16.mxu0 0
        %1368 = vmatpush1.bf16.msra.mxu0 0
        %1369 = vmatprep.subr.bf16.mxu0 0
        %1370 = vmatpush1.bf16.msra.mxu0 0
        %1371 = vmatprep.subr.bf16.mxu0 0
        %1372 = vmatpush1.bf16.msra.mxu0 0
        %1373 = vmatprep.subr.bf16.mxu0 0
        %1374 = vmatpush1.bf16.msra.mxu0 0
        %1375 = vmatprep.subr.bf16.mxu0 0
        %1376 = vmatpush1.bf16.msra.mxu0 0
        %1377 = vmatprep.subr.bf16.mxu0 0
        %1378 = vmatpush1.bf16.msra.mxu0 0
        %1379 = vmatprep.subr.bf16.mxu0 0
        %1380 = vmatpush1.bf16.msra.mxu0 0
        %1381 = vmatprep.mubr.bf16.mxu0 0
        %1382 = vmatmul.mubr.bf16.gmra.mrb[0].mxu0 %v1344
        %v1383 = vpop.f32.mrb[0].mxu0
        %v1384 = vadd.f32 0.0, %v1383
        %v1385 = vpop.f32.mrb[0].mxu0
        %v1386 = vpop.f32.mrb[0].mxu0
        %v1387 = vpop.f32.mrb[0].mxu0
        %1388 = vdwg.mxu0
        %v1389 = vadd.f32 %v1226, %v1384
        %1390 = vrot.lane.b32.xlu0 %v913, 104
        %v1391 = vpop.permute.xlu0 %1390
        %1392 = vrot.lane.b32.xlu0 %v913, 72
        %v1393 = vpop.permute.xlu0 %1392
        %v1395 = vsel %vm917, %v1391, 0
        %v1398 = vsel %vm917, %v1393, 0
        %1400 = vmatprep.subr.bf16.mxu0 0
        %1401 = vmatpush1.bf16.xpose.msra.mxu0 %v1398
        %1402 = vmatprep.subr.bf16.mxu0 0
        %1403 = vmatpush1.bf16.xpose.msra.mxu0 0
        %1404 = vmatprep.subr.bf16.mxu0 0
        %1405 = vmatpush1.bf16.xpose.msra.mxu0 0
        %1406 = vmatprep.subr.bf16.mxu0 0
        %1407 = vmatpush1.bf16.xpose.msra.mxu0 0
        %1408 = vmatprep.subr.bf16.mxu0 0
        %1409 = vmatpush1.bf16.xpose.msra.mxu0 0
        %1410 = vmatprep.subr.bf16.mxu0 0
        %1411 = vmatpush1.bf16.xpose.msra.mxu0 0
        %1412 = vmatprep.subr.bf16.mxu0 0
        %1413 = vmatpush1.bf16.xpose.msra.mxu0 0
        %1414 = vmatprep.subr.bf16.mxu0 0
        %1415 = vmatpush1.bf16.xpose.msra.mxu0 0
        %1416 = vmatprep.subr.bf16.mxu0 0
        %1417 = vmatpush1.bf16.xpose.msra.mxu0 0
        %1418 = vmatprep.subr.bf16.mxu0 0
        %1419 = vmatpush1.bf16.xpose.msra.mxu0 0
        %1420 = vmatprep.subr.bf16.mxu0 0
        %1421 = vmatpush1.bf16.xpose.msra.mxu0 0
        %1422 = vmatprep.subr.bf16.mxu0 0
        %1423 = vmatpush1.bf16.xpose.msra.mxu0 0
        %1424 = vmatprep.subr.bf16.mxu0 0
        %1425 = vmatpush1.bf16.xpose.msra.mxu0 0
        %1426 = vmatprep.subr.bf16.mxu0 0
        %1427 = vmatpush1.bf16.xpose.msra.mxu0 0
        %1428 = vmatprep.subr.bf16.mxu0 0
        %1429 = vmatpush1.bf16.xpose.msra.mxu0 0
        %1430 = vmatprep.subr.bf16.mxu0 0
        %1431 = vmatpush1.bf16.xpose.msra.mxu0 0
        %1432 = vmatprep.mubr.bf16.mxu0 0
        %1433 = vmatmul.mubr.bf16.gmra.mrb[0].mxu0 %v1395
        %v1434 = vpop.f32.mrb[0].mxu0
        %v1435 = vadd.f32 0.0, %v1434
        %v1436 = vpop.f32.mrb[0].mxu0
        %v1437 = vpop.f32.mrb[0].mxu0
        %v1438 = vpop.f32.mrb[0].mxu0
        %1439 = vdwg.mxu0
        %v1440 = vmul.f32 %v1435, 0.35355338
        %v1441 = vsel %vm917, %v1440, -inf
        %1442 = vmax.xlane.f32.xlu0 %v1441
        %v1443 = vpop.xlane.xlu0 %1442
        %v1444 = vsub.f32 %v1440, %v1443
        %v1445 = vmul.f32 %v1444, 1.442695
        %v1446 = vpow.pop %v1445
        %v1447 = vsel %vm917, %v1446, 0.0
        %1448 = vadd.xlane.f32.xlu0 %v1447
        %v1449 = vpop.xlane.xlu0 %1448
        %v1450 = vrcp.pop %v1449
        %v1451 = vmul.f32 %v1446, %v1450
        %v1452 = vpack.c.bf16 %v1451, %v1451
        %1453 = vrot.lane.b32.xlu0 %v913, 40
        %v1454 = vpop.permute.xlu0 %1453
        %v1456 = vsel %vm917, %v1452, 0
        %v1459 = vsel %vm982, %v1454, 0
        %1461 = vmatprep.subr.bf16.mxu0 0
        %1462 = vmatpush1.bf16.msra.mxu0 %v1459
        %1463 = vmatprep.subr.bf16.mxu0 0
        %1464 = vmatpush1.bf16.msra.mxu0 0
        %1465 = vmatprep.subr.bf16.mxu0 0
        %1466 = vmatpush1.bf16.msra.mxu0 0
        %1467 = vmatprep.subr.bf16.mxu0 0
        %1468 = vmatpush1.bf16.msra.mxu0 0
        %1469 = vmatprep.subr.bf16.mxu0 0
        %1470 = vmatpush1.bf16.msra.mxu0 0
        %1471 = vmatprep.subr.bf16.mxu0 0
        %1472 = vmatpush1.bf16.msra.mxu0 0
        %1473 = vmatprep.subr.bf16.mxu0 0
        %1474 = vmatpush1.bf16.msra.mxu0 0
        %1475 = vmatprep.subr.bf16.mxu0 0
        %1476 = vmatpush1.bf16.msra.mxu0 0
        %1477 = vmatprep.subr.bf16.mxu0 0
        %1478 = vmatpush1.bf16.msra.mxu0 0
        %1479 = vmatprep.subr.bf16.mxu0 0
        %1480 = vmatpush1.bf16.msra.mxu0 0
        %1481 = vmatprep.subr.bf16.mxu0 0
        %1482 = vmatpush1.bf16.msra.mxu0 0
        %1483 = vmatprep.subr.bf16.mxu0 0
        %1484 = vmatpush1.bf16.msra.mxu0 0
        %1485 = vmatprep.subr.bf16.mxu0 0
        %1486 = vmatpush1.bf16.msra.mxu0 0
        %1487 = vmatprep.subr.bf16.mxu0 0
        %1488 = vmatpush1.bf16.msra.mxu0 0
        %1489 = vmatprep.subr.bf16.mxu0 0
        %1490 = vmatpush1.bf16.msra.mxu0 0
        %1491 = vmatprep.subr.bf16.mxu0 0
        %1492 = vmatpush1.bf16.msra.mxu0 0
        %1493 = vmatprep.mubr.bf16.mxu0 0
        %1494 = vmatmul.mubr.bf16.gmra.mrb[0].mxu0 %v1456
        %v1495 = vpop.f32.mrb[0].mxu0
        %v1496 = vadd.f32 0.0, %v1495
        %v1497 = vpop.f32.mrb[0].mxu0
        %v1498 = vpop.f32.mrb[0].mxu0
        %v1499 = vpop.f32.mrb[0].mxu0
        %1500 = vdwg.mxu0
        %v1501 = vpack.c.bf16 %v1496, %v1496
        %v1503 = vsel %vm917, %v1501, 0
        %v1506 = vsel %vm982, %v912, 0
        %1508 = vmatprep.subr.bf16.mxu0 0
        %1509 = vmatpush1.bf16.msra.mxu0 %v1506
        %1510 = vmatprep.subr.bf16.mxu0 0
        %1511 = vmatpush1.bf16.msra.mxu0 0
        %1512 = vmatprep.subr.bf16.mxu0 0
        %1513 = vmatpush1.bf16.msra.mxu0 0
        %1514 = vmatprep.subr.bf16.mxu0 0
        %1515 = vmatpush1.bf16.msra.mxu0 0
        %1516 = vmatprep.subr.bf16.mxu0 0
        %1517 = vmatpush1.bf16.msra.mxu0 0
        %1518 = vmatprep.subr.bf16.mxu0 0
        %1519 = vmatpush1.bf16.msra.mxu0 0
        %1520 = vmatprep.subr.bf16.mxu0 0
        %1521 = vmatpush1.bf16.msra.mxu0 0
        %1522 = vmatprep.subr.bf16.mxu0 0
        %1523 = vmatpush1.bf16.msra.mxu0 0
        %1524 = vmatprep.subr.bf16.mxu0 0
        %1525 = vmatpush1.bf16.msra.mxu0 0
        %1526 = vmatprep.subr.bf16.mxu0 0
        %1527 = vmatpush1.bf16.msra.mxu0 0
        %1528 = vmatprep.subr.bf16.mxu0 0
        %1529 = vmatpush1.bf16.msra.mxu0 0
        %1530 = vmatprep.subr.bf16.mxu0 0
        %1531 = vmatpush1.bf16.msra.mxu0 0
        %1532 = vmatprep.subr.bf16.mxu0 0
        %1533 = vmatpush1.bf16.msra.mxu0 0
        %1534 = vmatprep.subr.bf16.mxu0 0
        %1535 = vmatpush1.bf16.msra.mxu0 0
        %1536 = vmatprep.subr.bf16.mxu0 0
        %1537 = vmatpush1.bf16.msra.mxu0 0
        %1538 = vmatprep.subr.bf16.mxu0 0
        %1539 = vmatpush1.bf16.msra.mxu0 0
        %1540 = vmatprep.mubr.bf16.mxu0 0
        %1541 = vmatmul.mubr.bf16.gmra.mrb[0].mxu0 %v1503
        %v1542 = vpop.f32.mrb[0].mxu0
        %v1543 = vadd.f32 0.0, %v1542
        %v1544 = vpop.f32.mrb[0].mxu0
        %v1545 = vpop.f32.mrb[0].mxu0
        %v1546 = vpop.f32.mrb[0].mxu0
        %1547 = vdwg.mxu0
        %v1548 = vadd.f32 %v1389, %v1543
        %v1549 = vld [vmem:[#allocation7] sm:$0x1]
        %v1551 = vlaneseq
        %v1552 = vshrl.u32 %v1551, 7
        %v1553 = vsub.s32 0, %v1552
        %v1554 = vrot.slane %v1549, %v1553
        %v1556 = vadd.f32 %v1548, %v1554
        %v1557 = vadd.f32 %v840, %v1556
        %v1558 = vld [vmem:[#allocation8] sm:$0x1]
        %v1559 = vld [vmem:[#allocation10] sm:$0x1]
        %v1560 = vsel %vm865, %v1557, 0.0
        %1561 = vadd.xlane.f32.xlu0 %v1560
        %v1562 = vpop.xlane.xlu0 %1561
        %v1563 = vrcp.pop 32.0
        %v1564 = vmul.f32 %v1562, %v1563
        %v1565 = vsub.f32 %v1557, %v1564
        %v1566 = vmul.f32 %v1565, %v1565
        %v1567 = vsel %vm865, %v1566, 0.0
        %1568 = vadd.xlane.f32.xlu0 %v1567
        %v1569 = vpop.xlane.xlu0 %1568
        %v1570 = vmul.f32 %v1569, %v1563
        %v1571 = vadd.f32 %v1570, 1e-05
        %v1572 = vrsqrt.pop %v1571
        %v1573 = vmul.f32 %v1565, %v1572
        %v1575 = vlaneseq
        %v1576 = vshrl.u32 %v1575, 7
        %v1577 = vsub.s32 0, %v1576
        %v1578 = vrot.slane %v1558, %v1577
        %v1580 = vmul.f32 %v1573, %v1578
        %v1582 = vlaneseq
        %v1583 = vshrl.u32 %v1582, 7
        %v1584 = vsub.s32 0, %v1583
        %v1585 = vrot.slane %v1559, %v1584
        %v1587 = vadd.f32 %v1580, %v1585
        %v1588 = vld [vmem:[%s10] sm:$0xf]
        %v1589 = vld [vmem:[%s10 + $0x4] sm:$0xf]
        %v1590 = vld [vmem:[%s10 + $0x8] sm:$0xf]
        %v1591 = vld [vmem:[%s10 + $0xc] sm:$0xf]
        %v1592 = vpack.c.bf16 %v1587, %v1587
        %v1593 = vld [vmem:[#allocation11] sm:$0x1]
        %v1595 = vlaneseq
        %v1596 = vshrl.u32 %v1595, 7
        %v1597 = vsub.s32 0, %v1596
        %v1598 = vrot.slane %v1593, %v1597
        %v1604 = vunpack.c.l.b16 %v1588
        %v1605 = vunpack.c.l.b16 %v1589
        %v1606 = vunpack.c.l.b16 %v1590
        %v1607 = vunpack.c.l.b16 %v1591
        %v1608 = vpack.c.b16 %v1605, %v1604
        %v1609 = vpack.c.b16 %v1607, %v1606
        %v1613 = vsel %vm865, %v1592, 0
        %1615 = vmatprep.subr.bf16.mxu0 0
        %1616 = vmatpush1.bf16.msra.mxu0 %v1608
        %1617 = vmatprep.subr.bf16.mxu0 0
        %1618 = vmatpush1.bf16.msra.mxu0 %v1609
        %1619 = vmatprep.subr.bf16.mxu0 0
        %1620 = vmatpush1.bf16.msra.mxu0 0
        %1621 = vmatprep.subr.bf16.mxu0 0
        %1622 = vmatpush1.bf16.msra.mxu0 0
        %1623 = vmatprep.subr.bf16.mxu0 0
        %1624 = vmatpush1.bf16.msra.mxu0 0
        %1625 = vmatprep.subr.bf16.mxu0 0
        %1626 = vmatpush1.bf16.msra.mxu0 0
        %1627 = vmatprep.subr.bf16.mxu0 0
        %1628 = vmatpush1.bf16.msra.mxu0 0
        %1629 = vmatprep.subr.bf16.mxu0 0
        %1630 = vmatpush1.bf16.msra.mxu0 0
        %1631 = vmatprep.subr.bf16.mxu0 0
        %1632 = vmatpush1.bf16.msra.mxu0 0
        %1633 = vmatprep.subr.bf16.mxu0 0
        %1634 = vmatpush1.bf16.msra.mxu0 0
        %1635 = vmatprep.subr.bf16.mxu0 0
        %1636 = vmatpush1.bf16.msra.mxu0 0
        %1637 = vmatprep.subr.bf16.mxu0 0
        %1638 = vmatpush1.bf16.msra.mxu0 0
        %1639 = vmatprep.subr.bf16.mxu0 0
        %1640 = vmatpush1.bf16.msra.mxu0 0
        %1641 = vmatprep.subr.bf16.mxu0 0
        %1642 = vmatpush1.bf16.msra.mxu0 0
        %1643 = vmatprep.subr.bf16.mxu0 0
        %1644 = vmatpush1.bf16.msra.mxu0 0
        %1645 = vmatprep.subr.bf16.mxu0 0
        %1646 = vmatpush1.bf16.msra.mxu0 0
        %1647 = vmatprep.mubr.bf16.mxu0 0
        %1648 = vmatmul.mubr.bf16.gmra.mrb[0].mxu0 %v1613
        %v1649 = vpop.f32.mrb[0].mxu0
        %v1650 = vadd.f32 %v1598, %v1649
        %v1651 = vpop.f32.mrb[0].mxu0
        %v1652 = vpop.f32.mrb[0].mxu0
        %v1653 = vpop.f32.mrb[0].mxu0
        %1654 = vdwg.mxu0
        %v1655 = vand.u32 2147483647, %v1650
        %vm1656 = vcmp.le.f32.partialorder %v1655, 0.7853982
        %vm1657 = vcmp.lt.s32.totalorder %v1650, 0
        %v1658 = vand.u32 %v1650, 2139095040
        %v1659 = vshrl.u32 %v1658, 23
        %v1660 = vsub.s32 %v1659, 127
        %v1661 = vand.u32 2147483647, %v1650
        %v1662 = vand.u32 %v1661, 8388607
        %v1663 = vor.u32 %v1662, 8388608
        %v1664 = vsub.s32 0, %v1663
        %v1665 = vadd.s32 %v1660, 1
        %vm1666 = vcmp.gt.s32.totalorder %v1665, 0
        %v1667 = vsel %vm1666, %v1665, 0
        %v1668 = vshrl.u32 %v1667, 5
        %v1669 = vand.u32 %v1667, 31
        %v1670 = vsub.s32 32, %v1669
        %v1671 = vshrl.u32 683565275, %v1670
        %v1672 = vshll.u32 683565275, %v1669
        %v1673 = vshrl.u32 2475754826, %v1670
        %v1674 = vor.u32 %v1672, %v1673
        %v1675 = vshll.u32 2475754826, %v1669
        %v1676 = vshrl.u32 2131351028, %v1670
        %v1677 = vor.u32 %v1675, %v1676
        %v1678 = vshll.u32 2131351028, %v1669
        %v1679 = vshrl.u32 2102212464, %v1670
        %v1680 = vor.u32 %v1678, %v1679
        %v1681 = vshll.u32 2102212464, %v1669
        %v1682 = vshrl.u32 920167782, %v1670
        %v1683 = vor.u32 %v1681, %v1682
        %v1684 = vshll.u32 920167782, %v1669
        %v1685 = vshrl.u32 1326507024, %v1670
        %v1686 = vor.u32 %v1684, %v1685
        %vm1687 = vcmp.lt.s32.totalorder %v1668, 1
        %vm1688 = vcmp.lt.s32.totalorder %v1668, 2
        %vm1689 = vcmp.lt.s32.totalorder %v1668, 3
        %vm1690 = vcmp.lt.s32.totalorder %v1668, 4
        %v1691 = vsel %vm1687, %v1671, %v1674
        %v1692 = vsel %vm1690, %v1680, 2102212464
        %v1693 = vsel %vm1689, %v1677, %v1692
        %v1694 = vsel %vm1688, %v1691, %v1693
        %v1695 = vsel %vm1687, %v1674, %v1677
        %v1696 = vsel %vm1690, %v1683, 920167782
        %v1697 = vsel %vm1689, %v1680, %v1696
        %v1698 = vsel %vm1688, %v1695, %v1697
        %v1699 = vsel %vm1687, %v1677, %v1680
        %v1700 = vsel %vm1690, %v1686, 1326507024
        %v1701 = vsel %vm1689, %v1683, %v1700
        %v1702 = vsel %vm1688, %v1699, %v1701
        %v1703 = vshll.u32 %v1663, 8
        %v1704 = vmul.u32.u64.compose %v1703, %v1702
        %v1705 = vextract.low.u32 %v1704
        %v1706 = vextract.high.u32 %v1704
        %v1707 = vmul.u32.u64.compose %v1703, %v1698
        %v1708 = vextract.low.u32 %v1707
        %v1709 = vextract.high.u32 %v1707
        %v1710 = vmul.u32 %v1703, %v1694
        %v1711 = vadd.s32 %v1706, %v1708
        %vm1712 = vc.u32 %v1706, %v1708
        %v1713 = vadd.s32 %v1709, 1
        %v1714 = vsel %vm1712, %v1713, %v1709
        %v1715 = vadd.s32 %v1710, %v1714
        %v1716 = vadd.s32 %v1715, 536870912
        %v1717 = vshrl.u32 %v1716, 30
        %v1718 = vshll.u32 %v1717, 30
        %v1719 = vsub.s32 %v1715, %v1718
        %vm1720 = vcmp.lt.s32.totalorder %v1719, 0
        %v1721 = vsub.s32 0, %v1719
        %v1722 = vsel %vm1720, %v1721, %v1719
        %v1723 = vclz %v1722
        %v1724 = vsub.s32 %v1723, 2
        %vm1725 = vcmp.gt.s32.totalorder 0, %v1724
        %v1726 = vsel %vm1725, 0, %v1724
        %v1727 = vsub.s32 32, %v1726
        %v1728 = vshll.u32 %v1719, %v1726
        %v1729 = vshrl.u32 %v1711, %v1727
        %v1730 = vor.u32 %v1728, %v1729
        %v1731 = vsub.s32 4294967266, %v1726
        %v1732 = vadd.s32 %v1731, 127
        %v1733 = vshll.u32 %v1732, 23
        %v1734 = vor.u32 4788187, %v1733
        %v1735 = vand.u32 2147483647, %v1734
        %v1737 = vcvt.s32.f32 %v1730
        %v1738 = vmul.f32 %v1737, %v1735
        %v1739 = vxor.u32 %v1738, 2147483648
        %v1740 = vsel %vm1657, %v1739, %v1738
        %v1741 = vsub.s32 4, %v1717
        %v1742 = vsel %vm1657, %v1741, %v1717
        %v1743 = vsel %vm1656, %v1650, %v1740
        %v1744 = vsel %vm1656, 0, %v1742
        %v1745 = vcosq.f32.pop %v1743
        %v1746 = vsinq.f32.pop %v1743
        %vm1747 = vweird.f32 %v1650
        %v1748 = vand.u32 %v1744, 3
        %vm1749 = vcmp.lt.s32.totalorder %v1748, 2
        %vm1750 = vcmp.eq.s32.totalorder %v1748, 0
        %v1751 = vxor.u32 %v1746, 2147483648
        %v1752 = vsel %vm1750, %v1745, %v1751
        %vm1753 = vcmp.eq.s32.totalorder %v1748, 2
        %v1754 = vxor.u32 %v1745, 2147483648
        %v1755 = vsel %vm1753, %v1754, %v1746
        %v1756 = vsel %vm1749, %v1752, %v1755
        %v1757 = vsel %vm1747, nan, %v1756
        %v1758 = vld [vmem:[#allocation13] sm:$0xf]
        %v1759 = vld [vmem:[#allocation13 + $0x4] sm:$0xf]
        %v1760 = vpack.c.bf16 %v1757, %v1757
        %v1761 = vand.u32 2147483647, %v1650
        %vm1762 = vcmp.le.f32.partialorder %v1761, 0.7853982
        %vm1763 = vcmp.lt.s32.totalorder %v1650, 0
        %v1764 = vand.u32 %v1650, 2139095040
        %v1765 = vshrl.u32 %v1764, 23
        %v1766 = vsub.s32 %v1765, 127
        %v1767 = vand.u32 2147483647, %v1650
        %v1768 = vand.u32 %v1767, 8388607
        %v1769 = vor.u32 %v1768, 8388608
        %v1770 = vsub.s32 0, %v1769
        %v1771 = vadd.s32 %v1766, 1
        %vm1772 = vcmp.gt.s32.totalorder %v1771, 0
        %v1773 = vsel %vm1772, %v1771, 0
        %v1774 = vshrl.u32 %v1773, 5
        %v1775 = vand.u32 %v1773, 31
        %v1776 = vsub.s32 32, %v1775
        %v1777 = vshrl.u32 683565275, %v1776
        %v1778 = vshll.u32 683565275, %v1775
        %v1779 = vshrl.u32 2475754826, %v1776
        %v1780 = vor.u32 %v1778, %v1779
        %v1781 = vshll.u32 2475754826, %v1775
        %v1782 = vshrl.u32 2131351028, %v1776
        %v1783 = vor.u32 %v1781, %v1782
        %v1784 = vshll.u32 2131351028, %v1775
        %v1785 = vshrl.u32 2102212464, %v1776
        %v1786 = vor.u32 %v1784, %v1785
        %v1787 = vshll.u32 2102212464, %v1775
        %v1788 = vshrl.u32 920167782, %v1776
        %v1789 = vor.u32 %v1787, %v1788
        %v1790 = vshll.u32 920167782, %v1775
        %v1791 = vshrl.u32 1326507024, %v1776
        %v1792 = vor.u32 %v1790, %v1791
        %vm1793 = vcmp.lt.s32.totalorder %v1774, 1
        %vm1794 = vcmp.lt.s32.totalorder %v1774, 2
        %vm1795 = vcmp.lt.s32.totalorder %v1774, 3
        %vm1796 = vcmp.lt.s32.totalorder %v1774, 4
        %v1797 = vsel %vm1793, %v1777, %v1780
        %v1798 = vsel %vm1796, %v1786, 2102212464
        %v1799 = vsel %vm1795, %v1783, %v1798
        %v1800 = vsel %vm1794, %v1797, %v1799
        %v1801 = vsel %vm1793, %v1780, %v1783
        %v1802 = vsel %vm1796, %v1789, 920167782
        %v1803 = vsel %vm1795, %v1786, %v1802
        %v1804 = vsel %vm1794, %v1801, %v1803
        %v1805 = vsel %vm1793, %v1783, %v1786
        %v1806 = vsel %vm1796, %v1792, 1326507024
        %v1807 = vsel %vm1795, %v1789, %v1806
        %v1808 = vsel %vm1794, %v1805, %v1807
        %v1809 = vshll.u32 %v1769, 8
        %v1810 = vmul.u32.u64.compose %v1809, %v1808
        %v1811 = vextract.low.u32 %v1810
        %v1812 = vextract.high.u32 %v1810
        %v1813 = vmul.u32.u64.compose %v1809, %v1804
        %v1814 = vextract.low.u32 %v1813
        %v1815 = vextract.high.u32 %v1813
        %v1816 = vmul.u32 %v1809, %v1800
        %v1817 = vadd.s32 %v1812, %v1814
        %vm1818 = vc.u32 %v1812, %v1814
        %v1819 = vadd.s32 %v1815, 1
        %v1820 = vsel %vm1818, %v1819, %v1815
        %v1821 = vadd.s32 %v1816, %v1820
        %v1822 = vadd.s32 %v1821, 536870912
        %v1823 = vshrl.u32 %v1822, 30
        %v1824 = vshll.u32 %v1823, 30
        %v1825 = vsub.s32 %v1821, %v1824
        %vm1826 = vcmp.lt.s32.totalorder %v1825, 0
        %v1827 = vsub.s32 0, %v1825
        %v1828 = vsel %vm1826, %v1827, %v1825
        %v1829 = vclz %v1828
        %v1830 = vsub.s32 %v1829, 2
        %vm1831 = vcmp.gt.s32.totalorder 0, %v1830
        %v1832 = vsel %vm1831, 0, %v1830
        %v1833 = vsub.s32 32, %v1832
        %v1834 = vshll.u32 %v1825, %v1832
        %v1835 = vshrl.u32 %v1817, %v1833
        %v1836 = vor.u32 %v1834, %v1835
        %v1837 = vsub.s32 4294967266, %v1832
        %v1838 = vadd.s32 %v1837, 127
        %v1839 = vshll.u32 %v1838, 23
        %v1840 = vor.u32 4788187, %v1839
        %v1841 = vand.u32 2147483647, %v1840
        %v1843 = vcvt.s32.f32 %v1836
        %v1844 = vmul.f32 %v1843, %v1841
        %v1845 = vxor.u32 %v1844, 2147483648
        %v1846 = vsel %vm1763, %v1845, %v1844
        %v1847 = vsub.s32 4, %v1823
        %v1848 = vsel %vm1763, %v1847, %v1823
        %v1849 = vsel %vm1762, %v1650, %v1846
        %v1850 = vsel %vm1762, 0, %v1848
        %v1851 = vcosq.f32.pop %v1849
        %v1852 = vsinq.f32.pop %v1849
        %vm1853 = vweird.f32 %v1650
        %v1854 = vadd.s32 %v1850, 3
        %v1855 = vand.u32 %v1854, 3
        %vm1856 = vcmp.lt.s32.totalorder %v1855, 2
        %vm1857 = vcmp.eq.s32.totalorder %v1855, 0
        %v1858 = vxor.u32 %v1852, 2147483648
        %v1859 = vsel %vm1857, %v1851, %v1858
        %vm1860 = vcmp.eq.s32.totalorder %v1855, 2
        %v1861 = vxor.u32 %v1851, 2147483648
        %v1862 = vsel %vm1860, %v1861, %v1852
        %v1863 = vsel %vm1856, %v1859, %v1862
        %v1864 = vsel %vm1853, nan, %v1863
        %v1865 = vld [vmem:[%s13] sm:$0xf]
        %v1866 = vld [vmem:[%s13 + $0x4] sm:$0xf]
        %v1867 = vpack.c.bf16 %v1864, %v1864
        %v1870 = vunpack.c.l.b16 %v1865
        %v1871 = vunpack.c.l.b16 %v1866
        %v1872 = vpack.c.b16 %v1871, %v1870
        %vm1874 = vcmask 130048
        %v1876 = vsel %vm1874, %v1867, 0
        %1878 = vmatprep.subr.bf16.mxu0 0
        %1879 = vmatpush1.bf16.msra.mxu0 %v1872
        %1880 = vmatprep.subr.bf16.mxu0 0
        %1881 = vmatpush1.bf16.msra.mxu0 0
        %1882 = vmatprep.subr.bf16.mxu0 0
        %1883 = vmatpush1.bf16.msra.mxu0 0
        %1884 = vmatprep.subr.bf16.mxu0 0
        %1885 = vmatpush1.bf16.msra.mxu0 0
        %1886 = vmatprep.subr.bf16.mxu0 0
        %1887 = vmatpush1.bf16.msra.mxu0 0
        %1888 = vmatprep.subr.bf16.mxu0 0
        %1889 = vmatpush1.bf16.msra.mxu0 0
        %1890 = vmatprep.subr.bf16.mxu0 0
        %1891 = vmatpush1.bf16.msra.mxu0 0
        %1892 = vmatprep.subr.bf16.mxu0 0
        %1893 = vmatpush1.bf16.msra.mxu0 0
        %1894 = vmatprep.subr.bf16.mxu0 0
        %1895 = vmatpush1.bf16.msra.mxu0 0
        %1896 = vmatprep.subr.bf16.mxu0 0
        %1897 = vmatpush1.bf16.msra.mxu0 0
        %1898 = vmatprep.subr.bf16.mxu0 0
        %1899 = vmatpush1.bf16.msra.mxu0 0
        %1900 = vmatprep.subr.bf16.mxu0 0
        %1901 = vmatpush1.bf16.msra.mxu0 0
        %1902 = vmatprep.subr.bf16.mxu0 0
        %1903 = vmatpush1.bf16.msra.mxu0 0
        %1904 = vmatprep.subr.bf16.mxu0 0
        %1905 = vmatpush1.bf16.msra.mxu0 0
        %1906 = vmatprep.subr.bf16.mxu0 0
        %1907 = vmatpush1.bf16.msra.mxu0 0
        %1908 = vmatprep.subr.bf16.mxu0 0
        %1909 = vmatpush1.bf16.msra.mxu0 0
        %1910 = vmatprep.mubr.bf16.mxu0 0
        %1911 = vmatmul.mubr.bf16.gmra.mrb[0].mxu0 %v1876
        %v1912 = vpop.f32.mrb[0].mxu0
        %v1913 = vadd.f32 0.0, %v1912
        %v1914 = vpop.f32.mrb[0].mxu0
        %v1915 = vpop.f32.mrb[0].mxu0
        %v1916 = vpop.f32.mrb[0].mxu0
        %1917 = vdwg.mxu0
        %v1920 = vunpack.c.l.b16 %v1758
        %v1921 = vunpack.c.l.b16 %v1759
        %v1922 = vpack.c.b16 %v1921, %v1920
        %v1925 = vsel %vm1874, %v1760, 0
        %1927 = vmatprep.subr.bf16.mxu0 0
        %1928 = vmatpush1.bf16.msra.mxu0 %v1922
        %1929 = vmatprep.subr.bf16.mxu0 0
        %1930 = vmatpush1.bf16.msra.mxu0 0
        %1931 = vmatprep.subr.bf16.mxu0 0
        %1932 = vmatpush1.bf16.msra.mxu0 0
        %1933 = vmatprep.subr.bf16.mxu0 0
        %1934 = vmatpush1.bf16.msra.mxu0 0
        %1935 = vmatprep.subr.bf16.mxu0 0
        %1936 = vmatpush1.bf16.msra.mxu0 0
        %1937 = vmatprep.subr.bf16.mxu0 0
        %1938 = vmatpush1.bf16.msra.mxu0 0
        %1939 = vmatprep.subr.bf16.mxu0 0
        %1940 = vmatpush1.bf16.msra.mxu0 0
        %1941 = vmatprep.subr.bf16.mxu0 0
        %1942 = vmatpush1.bf16.msra.mxu0 0
        %1943 = vmatprep.subr.bf16.mxu0 0
        %1944 = vmatpush1.bf16.msra.mxu0 0
        %1945 = vmatprep.subr.bf16.mxu0 0
        %1946 = vmatpush1.bf16.msra.mxu0 0
        %1947 = vmatprep.subr.bf16.mxu0 0
        %1948 = vmatpush1.bf16.msra.mxu0 0
        %1949 = vmatprep.subr.bf16.mxu0 0
        %1950 = vmatpush1.bf16.msra.mxu0 0
        %1951 = vmatprep.subr.bf16.mxu0 0
        %1952 = vmatpush1.bf16.msra.mxu0 0
        %1953 = vmatprep.subr.bf16.mxu0 0
        %1954 = vmatpush1.bf16.msra.mxu0 0
        %1955 = vmatprep.subr.bf16.mxu0 0
        %1956 = vmatpush1.bf16.msra.mxu0 0
        %1957 = vmatprep.subr.bf16.mxu0 0
        %1958 = vmatpush1.bf16.msra.mxu0 0
        %1959 = vmatprep.mubr.bf16.mxu0 0
        %1960 = vmatmul.mubr.bf16.gmra.mrb[0].mxu0 %v1925
        %v1961 = vpop.f32.mrb[0].mxu0
        %v1962 = vadd.f32 %v1913, %v1961
        %v1963 = vpop.f32.mrb[0].mxu0
        %v1964 = vpop.f32.mrb[0].mxu0
        %v1965 = vpop.f32.mrb[0].mxu0
        %1966 = vdwg.mxu0
        %v1967 = vmax.f32 %v1650, 0.0
        %v1968 = vld [vmem:[%s14] sm:$0xf]
        %v1969 = vld [vmem:[%s14 + $0x4] sm:$0xf]
        %v1970 = vld [vmem:[%s14 + $0x8] sm:$0xf]
        %v1971 = vld [vmem:[%s14 + $0xc] sm:$0xf]
        %v1972 = vpack.c.bf16 %v1967, %v1967
        %1974 = vrot.lane.b32.xlu0 %v1972, 112
        %v1975 = vpop.permute.xlu0 %1974
        %v1980 = vunpack.c.l.b16 %v1968
        %v1981 = vunpack.c.l.b16 %v1969
        %v1982 = vunpack.c.l.b16 %v1970
        %v1983 = vunpack.c.l.b16 %v1971
        %v1984 = vpack.c.b16 %v1981, %v1980
        %v1985 = vpack.c.b16 %v1983, %v1982
        %v1989 = vsel %vm865, %v1975, 0
        %1991 = vmatprep.subr.bf16.mxu0 0
        %1992 = vmatpush1.bf16.msra.mxu0 %v1984
        %1993 = vmatprep.subr.bf16.mxu0 0
        %1994 = vmatpush1.bf16.msra.mxu0 %v1985
        %1995 = vmatprep.subr.bf16.mxu0 0
        %1996 = vmatpush1.bf16.msra.mxu0 0
        %1997 = vmatprep.subr.bf16.mxu0 0
        %1998 = vmatpush1.bf16.msra.mxu0 0
        %1999 = vmatprep.subr.bf16.mxu0 0
        %2000 = vmatpush1.bf16.msra.mxu0 0
        %2001 = vmatprep.subr.bf16.mxu0 0
        %2002 = vmatpush1.bf16.msra.mxu0 0
        %2003 = vmatprep.subr.bf16.mxu0 0
        %2004 = vmatpush1.bf16.msra.mxu0 0
        %2005 = vmatprep.subr.bf16.mxu0 0
        %2006 = vmatpush1.bf16.msra.mxu0 0
        %2007 = vmatprep.subr.bf16.mxu0 0
        %2008 = vmatpush1.bf16.msra.mxu0 0
        %2009 = vmatprep.subr.bf16.mxu0 0
        %2010 = vmatpush1.bf16.msra.mxu0 0
        %2011 = vmatprep.subr.bf16.mxu0 0
        %2012 = vmatpush1.bf16.msra.mxu0 0
        %2013 = vmatprep.subr.bf16.mxu0 0
        %2014 = vmatpush1.bf16.msra.mxu0 0
        %2015 = vmatprep.subr.bf16.mxu0 0
        %2016 = vmatpush1.bf16.msra.mxu0 0
        %2017 = vmatprep.subr.bf16.mxu0 0
        %2018 = vmatpush1.bf16.msra.mxu0 0
        %2019 = vmatprep.subr.bf16.mxu0 0
        %2020 = vmatpush1.bf16.msra.mxu0 0
        %2021 = vmatprep.subr.bf16.mxu0 0
        %2022 = vmatpush1.bf16.msra.mxu0 0
        %2023 = vmatprep.mubr.bf16.mxu0 0
        %2024 = vmatmul.mubr.bf16.gmra.mrb[0].mxu0 %v1989
        %v2025 = vpop.f32.mrb[0].mxu0
        %v2026 = vadd.f32 0.0, %v2025
        %v2027 = vpop.f32.mrb[0].mxu0
        %v2028 = vpop.f32.mrb[0].mxu0
        %v2029 = vpop.f32.mrb[0].mxu0
        %2030 = vdwg.mxu0
        %v2031 = vadd.f32 %v1962, %v2026
        %v2032 = vld [vmem:[#allocation14] sm:$0x1]
        %v2034 = vlaneseq
        %v2035 = vshrl.u32 %v2034, 7
        %v2036 = vsub.s32 0, %v2035
        %v2037 = vrot.slane %v2032, %v2036
        %v2039 = vadd.f32 %v2031, %v2037
        %v2040 = vadd.f32 %v1587, %v2039
        %v2041 = vld [vmem:[#allocation16] sm:$0x1]
        %v2042 = vld [vmem:[#allocation17] sm:$0x1]
        %v2043 = vsel %vm865, %v2040, 0.0
        %2044 = vadd.xlane.f32.xlu0 %v2043
        %v2045 = vpop.xlane.xlu0 %2044
        %v2046 = vmul.f32 %v2045, %v1563
        %v2047 = vsub.f32 %v2040, %v2046
        %v2048 = vmul.f32 %v2047, %v2047
        %v2049 = vsel %vm865, %v2048, 0.0
        %2050 = vadd.xlane.f32.xlu0 %v2049
        %v2051 = vpop.xlane.xlu0 %2050
        %v2052 = vmul.f32 %v2051, %v1563
        %v2053 = vadd.f32 %v2052, 1e-05
        %v2054 = vrsqrt.pop %v2053
        %v2055 = vmul.f32 %v2047, %v2054
        %v2057 = vlaneseq
        %v2058 = vshrl.u32 %v2057, 7
        %v2059 = vsub.s32 0, %v2058
        %v2060 = vrot.slane %v2041, %v2059
        %v2062 = vmul.f32 %v2055, %v2060
        %v2064 = vlaneseq
        %v2065 = vshrl.u32 %v2064, 7
        %v2066 = vsub.s32 0, %v2065
        %v2067 = vrot.slane %v2042, %v2066
        %v2069 = vadd.f32 %v2062, %v2067
        %s2070 = scalar_lea.vmem %s4, 16
        %v2071 = vld [vmem:[%s2070] sm:$0xf]
        %v2072 = vld [vmem:[%s2070 + $0x4] sm:$0xf]
        %v2073 = vld [vmem:[%s2070 + $0x8] sm:$0xf]
        %v2074 = vld [vmem:[%s2070 + $0xc] sm:$0xf]
        %v2075 = vpack.c.bf16 %v2069, %v2069
        %s2076 = scalar_lea.vmem [#allocation5], 1
        %v2077 = vld [vmem:[%s2076] sm:$0x1]
        %v2079 = vlaneseq
        %v2080 = vshrl.u32 %v2079, 7
        %v2081 = vsub.s32 0, %v2080
        %v2082 = vrot.slane %v2077, %v2081
        %v2088 = vunpack.c.l.b16 %v2071
        %v2089 = vunpack.c.l.b16 %v2072
        %v2090 = vunpack.c.l.b16 %v2073
        %v2091 = vunpack.c.l.b16 %v2074
        %v2092 = vpack.c.b16 %v2089, %v2088
        %v2093 = vpack.c.b16 %v2091, %v2090
        %v2097 = vsel %vm865, %v2075, 0
        %2099 = vmatprep.subr.bf16.mxu0 0
        %2100 = vmatpush1.bf16.msra.mxu0 %v2092
        %2101 = vmatprep.subr.bf16.mxu0 0
        %2102 = vmatpush1.bf16.msra.mxu0 %v2093
        %2103 = vmatprep.subr.bf16.mxu0 0
        %2104 = vmatpush1.bf16.msra.mxu0 0
        %2105 = vmatprep.subr.bf16.mxu0 0
        %2106 = vmatpush1.bf16.msra.mxu0 0
        %2107 = vmatprep.subr.bf16.mxu0 0
        %2108 = vmatpush1.bf16.msra.mxu0 0
        %2109 = vmatprep.subr.bf16.mxu0 0
        %2110 = vmatpush1.bf16.msra.mxu0 0
        %2111 = vmatprep.subr.bf16.mxu0 0
        %2112 = vmatpush1.bf16.msra.mxu0 0
        %2113 = vmatprep.subr.bf16.mxu0 0
        %2114 = vmatpush1.bf16.msra.mxu0 0
        %2115 = vmatprep.subr.bf16.mxu0 0
        %2116 = vmatpush1.bf16.msra.mxu0 0
        %2117 = vmatprep.subr.bf16.mxu0 0
        %2118 = vmatpush1.bf16.msra.mxu0 0
        %2119 = vmatprep.subr.bf16.mxu0 0
        %2120 = vmatpush1.bf16.msra.mxu0 0
        %2121 = vmatprep.subr.bf16.mxu0 0
        %2122 = vmatpush1.bf16.msra.mxu0 0
        %2123 = vmatprep.subr.bf16.mxu0 0
        %2124 = vmatpush1.bf16.msra.mxu0 0
        %2125 = vmatprep.subr.bf16.mxu0 0
        %2126 = vmatpush1.bf16.msra.mxu0 0
        %2127 = vmatprep.subr.bf16.mxu0 0
        %2128 = vmatpush1.bf16.msra.mxu0 0
        %2129 = vmatprep.subr.bf16.mxu0 0
        %2130 = vmatpush1.bf16.msra.mxu0 0
        %2131 = vmatprep.mubr.bf16.mxu0 0
        %2132 = vmatmul.mubr.bf16.gmra.mrb[0].mxu0 %v2097
        %v2133 = vpop.f32.mrb[0].mxu0
        %v2134 = vadd.f32 %v2082, %v2133
        %v2135 = vpop.f32.mrb[0].mxu0
        %v2136 = vpop.f32.mrb[0].mxu0
        %v2137 = vpop.f32.mrb[0].mxu0
        %2138 = vdwg.mxu0
        %s2139 = scalar_lea.vmem %s6, 16
        %v2140 = vld [vmem:[%s2139] sm:$0xf]
        %v2141 = vld [vmem:[%s2139 + $0x4] sm:$0xf]
        %v2142 = vld [vmem:[%s2139 + $0x8] sm:$0xf]
        %v2143 = vld [vmem:[%s2139 + $0xc] sm:$0xf]
        %v2144 = vpack.c.bf16 %v2134, %v2134
        %2146 = vrot.lane.b32.xlu0 %v2144, 96
        %v2147 = vpop.permute.xlu0 %2146
        %v2149 = vsel %vm917, %v2144, 0
        %v2152 = vsel %vm917, %v2147, 0
        %2154 = vmatprep.subr.bf16.mxu0 0
        %2155 = vmatpush1.bf16.xpose.msra.mxu0 %v2152
        %2156 = vmatprep.subr.bf16.mxu0 0
        %2157 = vmatpush1.bf16.xpose.msra.mxu0 0
        %2158 = vmatprep.subr.bf16.mxu0 0
        %2159 = vmatpush1.bf16.xpose.msra.mxu0 0
        %2160 = vmatprep.subr.bf16.mxu0 0
        %2161 = vmatpush1.bf16.xpose.msra.mxu0 0
        %2162 = vmatprep.subr.bf16.mxu0 0
        %2163 = vmatpush1.bf16.xpose.msra.mxu0 0
        %2164 = vmatprep.subr.bf16.mxu0 0
        %2165 = vmatpush1.bf16.xpose.msra.mxu0 0
        %2166 = vmatprep.subr.bf16.mxu0 0
        %2167 = vmatpush1.bf16.xpose.msra.mxu0 0
        %2168 = vmatprep.subr.bf16.mxu0 0
        %2169 = vmatpush1.bf16.xpose.msra.mxu0 0
        %2170 = vmatprep.subr.bf16.mxu0 0
        %2171 = vmatpush1.bf16.xpose.msra.mxu0 0
        %2172 = vmatprep.subr.bf16.mxu0 0
        %2173 = vmatpush1.bf16.xpose.msra.mxu0 0
        %2174 = vmatprep.subr.bf16.mxu0 0
        %2175 = vmatpush1.bf16.xpose.msra.mxu0 0
        %2176 = vmatprep.subr.bf16.mxu0 0
        %2177 = vmatpush1.bf16.xpose.msra.mxu0 0
        %2178 = vmatprep.subr.bf16.mxu0 0
        %2179 = vmatpush1.bf16.xpose.msra.mxu0 0
        %2180 = vmatprep.subr.bf16.mxu0 0
        %2181 = vmatpush1.bf16.xpose.msra.mxu0 0
        %2182 = vmatprep.subr.bf16.mxu0 0
        %2183 = vmatpush1.bf16.xpose.msra.mxu0 0
        %2184 = vmatprep.subr.bf16.mxu0 0
        %2185 = vmatpush1.bf16.xpose.msra.mxu0 0
        %2186 = vmatprep.mubr.bf16.mxu0 0
        %2187 = vmatmul.mubr.bf16.gmra.mrb[0].mxu0 %v2149
        %v2188 = vpop.f32.mrb[0].mxu0
        %v2189 = vadd.f32 0.0, %v2188
        %v2190 = vpop.f32.mrb[0].mxu0
        %v2191 = vpop.f32.mrb[0].mxu0
        %v2192 = vpop.f32.mrb[0].mxu0
        %2193 = vdwg.mxu0
        %v2194 = vmul.f32 %v2189, 0.35355338
        %v2195 = vsel %vm917, %v2194, -inf
        %2196 = vmax.xlane.f32.xlu0 %v2195
        %v2197 = vpop.xlane.xlu0 %2196
        %v2198 = vsub.f32 %v2194, %v2197
        %v2199 = vmul.f32 %v2198, 1.442695
        %v2200 = vpow.pop %v2199
        %v2201 = vsel %vm917, %v2200, 0.0
        %2202 = vadd.xlane.f32.xlu0 %v2201
        %v2203 = vpop.xlane.xlu0 %2202
        %v2204 = vrcp.pop %v2203
        %v2205 = vmul.f32 %v2200, %v2204
        %v2206 = vpack.c.bf16 %v2205, %v2205
        %2207 = vrot.lane.b32.xlu0 %v2144, 64
        %v2208 = vpop.permute.xlu0 %2207
        %v2210 = vsel %vm917, %v2206, 0
        %v2213 = vsel %vm982, %v2208, 0
        %2215 = vmatprep.subr.bf16.mxu0 0
        %2216 = vmatpush1.bf16.msra.mxu0 %v2213
        %2217 = vmatprep.subr.bf16.mxu0 0
        %2218 = vmatpush1.bf16.msra.mxu0 0
        %2219 = vmatprep.subr.bf16.mxu0 0
        %2220 = vmatpush1.bf16.msra.mxu0 0
        %2221 = vmatprep.subr.bf16.mxu0 0
        %2222 = vmatpush1.bf16.msra.mxu0 0
        %2223 = vmatprep.subr.bf16.mxu0 0
        %2224 = vmatpush1.bf16.msra.mxu0 0
        %2225 = vmatprep.subr.bf16.mxu0 0
        %2226 = vmatpush1.bf16.msra.mxu0 0
        %2227 = vmatprep.subr.bf16.mxu0 0
        %2228 = vmatpush1.bf16.msra.mxu0 0
        %2229 = vmatprep.subr.bf16.mxu0 0
        %2230 = vmatpush1.bf16.msra.mxu0 0
        %2231 = vmatprep.subr.bf16.mxu0 0
        %2232 = vmatpush1.bf16.msra.mxu0 0
        %2233 = vmatprep.subr.bf16.mxu0 0
        %2234 = vmatpush1.bf16.msra.mxu0 0
        %2235 = vmatprep.subr.bf16.mxu0 0
        %2236 = vmatpush1.bf16.msra.mxu0 0
        %2237 = vmatprep.subr.bf16.mxu0 0
        %2238 = vmatpush1.bf16.msra.mxu0 0
        %2239 = vmatprep.subr.bf16.mxu0 0
        %2240 = vmatpush1.bf16.msra.mxu0 0
        %2241 = vmatprep.subr.bf16.mxu0 0
        %2242 = vmatpush1.bf16.msra.mxu0 0
        %2243 = vmatprep.subr.bf16.mxu0 0
        %2244 = vmatpush1.bf16.msra.mxu0 0
        %2245 = vmatprep.subr.bf16.mxu0 0
        %2246 = vmatpush1.bf16.msra.mxu0 0
        %2247 = vmatprep.mubr.bf16.mxu0 0
        %2248 = vmatmul.mubr.bf16.gmra.mrb[0].mxu0 %v2210
        %v2249 = vpop.f32.mrb[0].mxu0
        %v2250 = vadd.f32 0.0, %v2249
        %v2251 = vpop.f32.mrb[0].mxu0
        %v2252 = vpop.f32.mrb[0].mxu0
        %v2253 = vpop.f32.mrb[0].mxu0
        %2254 = vdwg.mxu0
        %v2255 = vpack.c.bf16 %v2250, %v2250
        %2256 = vrot.lane.b32.xlu0 %v2144, 120
        %v2257 = vpop.permute.xlu0 %2256
        %2258 = vrot.lane.b32.xlu0 %v2144, 88
        %v2259 = vpop.permute.xlu0 %2258
        %v2261 = vsel %vm917, %v2257, 0
        %v2264 = vsel %vm917, %v2259, 0
        %2266 = vmatprep.subr.bf16.mxu0 0
        %2267 = vmatpush1.bf16.xpose.msra.mxu0 %v2264
        %2268 = vmatprep.subr.bf16.mxu0 0
        %2269 = vmatpush1.bf16.xpose.msra.mxu0 0
        %2270 = vmatprep.subr.bf16.mxu0 0
        %2271 = vmatpush1.bf16.xpose.msra.mxu0 0
        %2272 = vmatprep.subr.bf16.mxu0 0
        %2273 = vmatpush1.bf16.xpose.msra.mxu0 0
        %2274 = vmatprep.subr.bf16.mxu0 0
        %2275 = vmatpush1.bf16.xpose.msra.mxu0 0
        %2276 = vmatprep.subr.bf16.mxu0 0
        %2277 = vmatpush1.bf16.xpose.msra.mxu0 0
        %2278 = vmatprep.subr.bf16.mxu0 0
        %2279 = vmatpush1.bf16.xpose.msra.mxu0 0
        %2280 = vmatprep.subr.bf16.mxu0 0
        %2281 = vmatpush1.bf16.xpose.msra.mxu0 0
        %2282 = vmatprep.subr.bf16.mxu0 0
        %2283 = vmatpush1.bf16.xpose.msra.mxu0 0
        %2284 = vmatprep.subr.bf16.mxu0 0
        %2285 = vmatpush1.bf16.xpose.msra.mxu0 0
        %2286 = vmatprep.subr.bf16.mxu0 0
        %2287 = vmatpush1.bf16.xpose.msra.mxu0 0
        %2288 = vmatprep.subr.bf16.mxu0 0
        %2289 = vmatpush1.bf16.xpose.msra.mxu0 0
        %2290 = vmatprep.subr.bf16.mxu0 0
        %2291 = vmatpush1.bf16.xpose.msra.mxu0 0
        %2292 = vmatprep.subr.bf16.mxu0 0
        %2293 = vmatpush1.bf16.xpose.msra.mxu0 0
        %2294 = vmatprep.subr.bf16.mxu0 0
        %2295 = vmatpush1.bf16.xpose.msra.mxu0 0
        %2296 = vmatprep.subr.bf16.mxu0 0
        %2297 = vmatpush1.bf16.xpose.msra.mxu0 0
        %2298 = vmatprep.mubr.bf16.mxu0 0
        %2299 = vmatmul.mubr.bf16.gmra.mrb[0].mxu0 %v2261
        %v2300 = vpop.f32.mrb[0].mxu0
        %v2301 = vadd.f32 0.0, %v2300
        %v2302 = vpop.f32.mrb[0].mxu0
        %v2303 = vpop.f32.mrb[0].mxu0
        %v2304 = vpop.f32.mrb[0].mxu0
        %2305 = vdwg.mxu0
        %v2306 = vmul.f32 %v2301, 0.35355338
        %v2307 = vsel %vm917, %v2306, -inf
        %2308 = vmax.xlane.f32.xlu0 %v2307
        %v2309 = vpop.xlane.xlu0 %2308
        %v2310 = vsub.f32 %v2306, %v2309
        %v2311 = vmul.f32 %v2310, 1.442695
        %v2312 = vpow.pop %v2311
        %v2313 = vsel %vm917, %v2312, 0.0
        %2314 = vadd.xlane.f32.xlu0 %v2313
        %v2315 = vpop.xlane.xlu0 %2314
        %v2316 = vrcp.pop %v2315
        %v2317 = vmul.f32 %v2312, %v2316
        %v2318 = vpack.c.bf16 %v2317, %v2317
        %2319 = vrot.lane.b32.xlu0 %v2144, 56
        %v2320 = vpop.permute.xlu0 %2319
        %v2322 = vsel %vm917, %v2318, 0
        %v2325 = vsel %vm982, %v2320, 0
        %2327 = vmatprep.subr.bf16.mxu0 0
        %2328 = vmatpush1.bf16.msra.mxu0 %v2325
        %2329 = vmatprep.subr.bf16.mxu0 0
        %2330 = vmatpush1.bf16.msra.mxu0 0
        %2331 = vmatprep.subr.bf16.mxu0 0
        %2332 = vmatpush1.bf16.msra.mxu0 0
        %2333 = vmatprep.subr.bf16.mxu0 0
        %2334 = vmatpush1.bf16.msra.mxu0 0
        %2335 = vmatprep.subr.bf16.mxu0 0
        %2336 = vmatpush1.bf16.msra.mxu0 0
        %2337 = vmatprep.subr.bf16.mxu0 0
        %2338 = vmatpush1.bf16.msra.mxu0 0
        %2339 = vmatprep.subr.bf16.mxu0 0
        %2340 = vmatpush1.bf16.msra.mxu0 0
        %2341 = vmatprep.subr.bf16.mxu0 0
        %2342 = vmatpush1.bf16.msra.mxu0 0
        %2343 = vmatprep.subr.bf16.mxu0 0
        %2344 = vmatpush1.bf16.msra.mxu0 0
        %2345 = vmatprep.subr.bf16.mxu0 0
        %2346 = vmatpush1.bf16.msra.mxu0 0
        %2347 = vmatprep.subr.bf16.mxu0 0
        %2348 = vmatpush1.bf16.msra.mxu0 0
        %2349 = vmatprep.subr.bf16.mxu0 0
        %2350 = vmatpush1.bf16.msra.mxu0 0
        %2351 = vmatprep.subr.bf16.mxu0 0
        %2352 = vmatpush1.bf16.msra.mxu0 0
        %2353 = vmatprep.subr.bf16.mxu0 0
        %2354 = vmatpush1.bf16.msra.mxu0 0
        %2355 = vmatprep.subr.bf16.mxu0 0
        %2356 = vmatpush1.bf16.msra.mxu0 0
        %2357 = vmatprep.subr.bf16.mxu0 0
        %2358 = vmatpush1.bf16.msra.mxu0 0
        %2359 = vmatprep.mubr.bf16.mxu0 0
        %2360 = vmatmul.mubr.bf16.gmra.mrb[0].mxu0 %v2322
        %v2361 = vpop.f32.mrb[0].mxu0
        %v2362 = vadd.f32 0.0, %v2361
        %v2363 = vpop.f32.mrb[0].mxu0
        %v2364 = vpop.f32.mrb[0].mxu0
        %v2365 = vpop.f32.mrb[0].mxu0
        %2366 = vdwg.mxu0
        %v2367 = vpack.c.bf16 %v2362, %v2362
        %v2369 = vsel %vm917, %v2367, 0
        %v2372 = vsel %vm982, %v2141, 0
        %2374 = vmatprep.subr.bf16.mxu0 0
        %2375 = vmatpush1.bf16.msra.mxu0 %v2372
        %2376 = vmatprep.subr.bf16.mxu0 0
        %2377 = vmatpush1.bf16.msra.mxu0 0
        %2378 = vmatprep.subr.bf16.mxu0 0
        %2379 = vmatpush1.bf16.msra.mxu0 0
        %2380 = vmatprep.subr.bf16.mxu0 0
        %2381 = vmatpush1.bf16.msra.mxu0 0
        %2382 = vmatprep.subr.bf16.mxu0 0
        %2383 = vmatpush1.bf16.msra.mxu0 0
        %2384 = vmatprep.subr.bf16.mxu0 0
        %2385 = vmatpush1.bf16.msra.mxu0 0
        %2386 = vmatprep.subr.bf16.mxu0 0
        %2387 = vmatpush1.bf16.msra.mxu0 0
        %2388 = vmatprep.subr.bf16.mxu0 0
        %2389 = vmatpush1.bf16.msra.mxu0 0
        %2390 = vmatprep.subr.bf16.mxu0 0
        %2391 = vmatpush1.bf16.msra.mxu0 0
        %2392 = vmatprep.subr.bf16.mxu0 0
        %2393 = vmatpush1.bf16.msra.mxu0 0
        %2394 = vmatprep.subr.bf16.mxu0 0
        %2395 = vmatpush1.bf16.msra.mxu0 0
        %2396 = vmatprep.subr.bf16.mxu0 0
        %2397 = vmatpush1.bf16.msra.mxu0 0
        %2398 = vmatprep.subr.bf16.mxu0 0
        %2399 = vmatpush1.bf16.msra.mxu0 0
        %2400 = vmatprep.subr.bf16.mxu0 0
        %2401 = vmatpush1.bf16.msra.mxu0 0
        %2402 = vmatprep.subr.bf16.mxu0 0
        %2403 = vmatpush1.bf16.msra.mxu0 0
        %2404 = vmatprep.subr.bf16.mxu0 0
        %2405 = vmatpush1.bf16.msra.mxu0 0
        %2406 = vmatprep.mubr.bf16.mxu0 0
        %2407 = vmatmul.mubr.bf16.gmra.mrb[0].mxu0 %v2369
        %v2408 = vpop.f32.mrb[0].mxu0
        %v2409 = vadd.f32 0.0, %v2408
        %v2410 = vpop.f32.mrb[0].mxu0
        %v2411 = vpop.f32.mrb[0].mxu0
        %v2412 = vpop.f32.mrb[0].mxu0
        %2413 = vdwg.mxu0
        %v2415 = vsel %vm917, %v2255, 0
        %v2418 = vsel %vm982, %v2140, 0
        %2420 = vmatprep.subr.bf16.mxu0 0
        %2421 = vmatpush1.bf16.msra.mxu0 %v2418
        %2422 = vmatprep.subr.bf16.mxu0 0
        %2423 = vmatpush1.bf16.msra.mxu0 0
        %2424 = vmatprep.subr.bf16.mxu0 0
        %2425 = vmatpush1.bf16.msra.mxu0 0
        %2426 = vmatprep.subr.bf16.mxu0 0
        %2427 = vmatpush1.bf16.msra.mxu0 0
        %2428 = vmatprep.subr.bf16.mxu0 0
        %2429 = vmatpush1.bf16.msra.mxu0 0
        %2430 = vmatprep.subr.bf16.mxu0 0
        %2431 = vmatpush1.bf16.msra.mxu0 0
        %2432 = vmatprep.subr.bf16.mxu0 0
        %2433 = vmatpush1.bf16.msra.mxu0 0
        %2434 = vmatprep.subr.bf16.mxu0 0
        %2435 = vmatpush1.bf16.msra.mxu0 0
        %2436 = vmatprep.subr.bf16.mxu0 0
        %2437 = vmatpush1.bf16.msra.mxu0 0
        %2438 = vmatprep.subr.bf16.mxu0 0
        %2439 = vmatpush1.bf16.msra.mxu0 0
        %2440 = vmatprep.subr.bf16.mxu0 0
        %2441 = vmatpush1.bf16.msra.mxu0 0
        %2442 = vmatprep.subr.bf16.mxu0 0
        %2443 = vmatpush1.bf16.msra.mxu0 0
        %2444 = vmatprep.subr.bf16.mxu0 0
        %2445 = vmatpush1.bf16.msra.mxu0 0
        %2446 = vmatprep.subr.bf16.mxu0 0
        %2447 = vmatpush1.bf16.msra.mxu0 0
        %2448 = vmatprep.subr.bf16.mxu0 0
        %2449 = vmatpush1.bf16.msra.mxu0 0
        %2450 = vmatprep.subr.bf16.mxu0 0
        %2451 = vmatpush1.bf16.msra.mxu0 0
        %2452 = vmatprep.mubr.bf16.mxu0 0
        %2453 = vmatmul.mubr.bf16.gmra.mrb[0].mxu0 %v2415
        %v2454 = vpop.f32.mrb[0].mxu0
        %v2455 = vadd.f32 %v2409, %v2454
        %v2456 = vpop.f32.mrb[0].mxu0
        %v2457 = vpop.f32.mrb[0].mxu0
        %v2458 = vpop.f32.mrb[0].mxu0
        %2459 = vdwg.mxu0
        %2460 = vrot.lane.b32.xlu0 %v2144, 112
        %v2461 = vpop.permute.xlu0 %2460
        %2462 = vrot.lane.b32.xlu0 %v2144, 80
        %v2463 = vpop.permute.xlu0 %2462
        %v2465 = vsel %vm917, %v2461, 0
        %v2468 = vsel %vm917, %v2463, 0
        %2470 = vmatprep.subr.bf16.mxu0 0
        %2471 = vmatpush1.bf16.xpose.msra.mxu0 %v2468
        %2472 = vmatprep.subr.bf16.mxu0 0
        %2473 = vmatpush1.bf16.xpose.msra.mxu0 0
        %2474 = vmatprep.subr.bf16.mxu0 0
        %2475 = vmatpush1.bf16.xpose.msra.mxu0 0
        %2476 = vmatprep.subr.bf16.mxu0 0
        %2477 = vmatpush1.bf16.xpose.msra.mxu0 0
        %2478 = vmatprep.subr.bf16.mxu0 0
        %2479 = vmatpush1.bf16.xpose.msra.mxu0 0
        %2480 = vmatprep.subr.bf16.mxu0 0
        %2481 = vmatpush1.bf16.xpose.msra.mxu0 0
        %2482 = vmatprep.subr.bf16.mxu0 0
        %2483 = vmatpush1.bf16.xpose.msra.mxu0 0
        %2484 = vmatprep.subr.bf16.mxu0 0
        %2485 = vmatpush1.bf16.xpose.msra.mxu0 0
        %2486 = vmatprep.subr.bf16.mxu0 0
        %2487 = vmatpush1.bf16.xpose.msra.mxu0 0
        %2488 = vmatprep.subr.bf16.mxu0 0
        %2489 = vmatpush1.bf16.xpose.msra.mxu0 0
        %2490 = vmatprep.subr.bf16.mxu0 0
        %2491 = vmatpush1.bf16.xpose.msra.mxu0 0
        %2492 = vmatprep.subr.bf16.mxu0 0
        %2493 = vmatpush1.bf16.xpose.msra.mxu0 0
        %2494 = vmatprep.subr.bf16.mxu0 0
        %2495 = vmatpush1.bf16.xpose.msra.mxu0 0
        %2496 = vmatprep.subr.bf16.mxu0 0
        %2497 = vmatpush1.bf16.xpose.msra.mxu0 0
        %2498 = vmatprep.subr.bf16.mxu0 0
        %2499 = vmatpush1.bf16.xpose.msra.mxu0 0
        %2500 = vmatprep.subr.bf16.mxu0 0
        %2501 = vmatpush1.bf16.xpose.msra.mxu0 0
        %2502 = vmatprep.mubr.bf16.mxu0 0
        %2503 = vmatmul.mubr.bf16.gmra.mrb[0].mxu0 %v2465
        %v2504 = vpop.f32.mrb[0].mxu0
        %v2505 = vadd.f32 0.0, %v2504
        %v2506 = vpop.f32.mrb[0].mxu0
        %v2507 = vpop.f32.mrb[0].mxu0
        %v2508 = vpop.f32.mrb[0].mxu0
        %2509 = vdwg.mxu0
        %v2510 = vmul.f32 %v2505, 0.35355338
        %v2511 = vsel %vm917, %v2510, -inf
        %2512 = vmax.xlane.f32.xlu0 %v2511
        %v2513 = vpop.xlane.xlu0 %2512
        %v2514 = vsub.f32 %v2510, %v2513
        %v2515 = vmul.f32 %v2514, 1.442695
        %v2516 = vpow.pop %v2515
        %v2517 = vsel %vm917, %v2516, 0.0
        %2518 = vadd.xlane.f32.xlu0 %v2517
        %v2519 = vpop.xlane.xlu0 %2518
        %v2520 = vrcp.pop %v2519
        %v2521 = vmul.f32 %v2516, %v2520
        %v2522 = vpack.c.bf16 %v2521, %v2521
        %2523 = vrot.lane.b32.xlu0 %v2144, 48
        %v2524 = vpop.permute.xlu0 %2523
        %v2526 = vsel %vm917, %v2522, 0
        %v2529 = vsel %vm982, %v2524, 0
        %2531 = vmatprep.subr.bf16.mxu0 0
        %2532 = vmatpush1.bf16.msra.mxu0 %v2529
        %2533 = vmatprep.subr.bf16.mxu0 0
        %2534 = vmatpush1.bf16.msra.mxu0 0
        %2535 = vmatprep.subr.bf16.mxu0 0
        %2536 = vmatpush1.bf16.msra.mxu0 0
        %2537 = vmatprep.subr.bf16.mxu0 0
        %2538 = vmatpush1.bf16.msra.mxu0 0
        %2539 = vmatprep.subr.bf16.mxu0 0
        %2540 = vmatpush1.bf16.msra.mxu0 0
        %2541 = vmatprep.subr.bf16.mxu0 0
        %2542 = vmatpush1.bf16.msra.mxu0 0
        %2543 = vmatprep.subr.bf16.mxu0 0
        %2544 = vmatpush1.bf16.msra.mxu0 0
        %2545 = vmatprep.subr.bf16.mxu0 0
        %2546 = vmatpush1.bf16.msra.mxu0 0
        %2547 = vmatprep.subr.bf16.mxu0 0
        %2548 = vmatpush1.bf16.msra.mxu0 0
        %2549 = vmatprep.subr.bf16.mxu0 0
        %2550 = vmatpush1.bf16.msra.mxu0 0
        %2551 = vmatprep.subr.bf16.mxu0 0
        %2552 = vmatpush1.bf16.msra.mxu0 0
        %2553 = vmatprep.subr.bf16.mxu0 0
        %2554 = vmatpush1.bf16.msra.mxu0 0
        %2555 = vmatprep.subr.bf16.mxu0 0
        %2556 = vmatpush1.bf16.msra.mxu0 0
        %2557 = vmatprep.subr.bf16.mxu0 0
        %2558 = vmatpush1.bf16.msra.mxu0 0
        %2559 = vmatprep.subr.bf16.mxu0 0
        %2560 = vmatpush1.bf16.msra.mxu0 0
        %2561 = vmatprep.subr.bf16.mxu0 0
        %2562 = vmatpush1.bf16.msra.mxu0 0
        %2563 = vmatprep.mubr.bf16.mxu0 0
        %2564 = vmatmul.mubr.bf16.gmra.mrb[0].mxu0 %v2526
        %v2565 = vpop.f32.mrb[0].mxu0
        %v2566 = vadd.f32 0.0, %v2565
        %v2567 = vpop.f32.mrb[0].mxu0
        %v2568 = vpop.f32.mrb[0].mxu0
        %v2569 = vpop.f32.mrb[0].mxu0
        %2570 = vdwg.mxu0
        %v2571 = vpack.c.bf16 %v2566, %v2566
        %v2573 = vsel %vm917, %v2571, 0
        %v2576 = vsel %vm982, %v2142, 0
        %2578 = vmatprep.subr.bf16.mxu0 0
        %2579 = vmatpush1.bf16.msra.mxu0 %v2576
        %2580 = vmatprep.subr.bf16.mxu0 0
        %2581 = vmatpush1.bf16.msra.mxu0 0
        %2582 = vmatprep.subr.bf16.mxu0 0
        %2583 = vmatpush1.bf16.msra.mxu0 0
        %2584 = vmatprep.subr.bf16.mxu0 0
        %2585 = vmatpush1.bf16.msra.mxu0 0
        %2586 = vmatprep.subr.bf16.mxu0 0
        %2587 = vmatpush1.bf16.msra.mxu0 0
        %2588 = vmatprep.subr.bf16.mxu0 0
        %2589 = vmatpush1.bf16.msra.mxu0 0
        %2590 = vmatprep.subr.bf16.mxu0 0
        %2591 = vmatpush1.bf16.msra.mxu0 0
        %2592 = vmatprep.subr.bf16.mxu0 0
        %2593 = vmatpush1.bf16.msra.mxu0 0
        %2594 = vmatprep.subr.bf16.mxu0 0
        %2595 = vmatpush1.bf16.msra.mxu0 0
        %2596 = vmatprep.subr.bf16.mxu0 0
        %2597 = vmatpush1.bf16.msra.mxu0 0
        %2598 = vmatprep.subr.bf16.mxu0 0
        %2599 = vmatpush1.bf16.msra.mxu0 0
        %2600 = vmatprep.subr.bf16.mxu0 0
        %2601 = vmatpush1.bf16.msra.mxu0 0
        %2602 = vmatprep.subr.bf16.mxu0 0
        %2603 = vmatpush1.bf16.msra.mxu0 0
        %2604 = vmatprep.subr.bf16.mxu0 0
        %2605 = vmatpush1.bf16.msra.mxu0 0
        %2606 = vmatprep.subr.bf16.mxu0 0
        %2607 = vmatpush1.bf16.msra.mxu0 0
        %2608 = vmatprep.subr.bf16.mxu0 0
        %2609 = vmatpush1.bf16.msra.mxu0 0
        %2610 = vmatprep.mubr.bf16.mxu0 0
        %2611 = vmatmul.mubr.bf16.gmra.mrb[0].mxu0 %v2573
        %v2612 = vpop.f32.mrb[0].mxu0
        %v2613 = vadd.f32 0.0, %v2612
        %v2614 = vpop.f32.mrb[0].mxu0
        %v2615 = vpop.f32.mrb[0].mxu0
        %v2616 = vpop.f32.mrb[0].mxu0
        %2617 = vdwg.mxu0
        %v2618 = vadd.f32 %v2455, %v2613
        %2619 = vrot.lane.b32.xlu0 %v2144, 104
        %v2620 = vpop.permute.xlu0 %2619
        %2621 = vrot.lane.b32.xlu0 %v2144, 72
        %v2622 = vpop.permute.xlu0 %2621
        %v2624 = vsel %vm917, %v2620, 0
        %v2627 = vsel %vm917, %v2622, 0
        %2629 = vmatprep.subr.bf16.mxu0 0
        %2630 = vmatpush1.bf16.xpose.msra.mxu0 %v2627
        %2631 = vmatprep.subr.bf16.mxu0 0
        %2632 = vmatpush1.bf16.xpose.msra.mxu0 0
        %2633 = vmatprep.subr.bf16.mxu0 0
        %2634 = vmatpush1.bf16.xpose.msra.mxu0 0
        %2635 = vmatprep.subr.bf16.mxu0 0
        %2636 = vmatpush1.bf16.xpose.msra.mxu0 0
        %2637 = vmatprep.subr.bf16.mxu0 0
        %2638 = vmatpush1.bf16.xpose.msra.mxu0 0
        %2639 = vmatprep.subr.bf16.mxu0 0
        %2640 = vmatpush1.bf16.xpose.msra.mxu0 0
        %2641 = vmatprep.subr.bf16.mxu0 0
        %2642 = vmatpush1.bf16.xpose.msra.mxu0 0
        %2643 = vmatprep.subr.bf16.mxu0 0
        %2644 = vmatpush1.bf16.xpose.msra.mxu0 0
        %2645 = vmatprep.subr.bf16.mxu0 0
        %2646 = vmatpush1.bf16.xpose.msra.mxu0 0
        %2647 = vmatprep.subr.bf16.mxu0 0
        %2648 = vmatpush1.bf16.xpose.msra.mxu0 0
        %2649 = vmatprep.subr.bf16.mxu0 0
        %2650 = vmatpush1.bf16.xpose.msra.mxu0 0
        %2651 = vmatprep.subr.bf16.mxu0 0
        %2652 = vmatpush1.bf16.xpose.msra.mxu0 0
        %2653 = vmatprep.subr.bf16.mxu0 0
        %2654 = vmatpush1.bf16.xpose.msra.mxu0 0
        %2655 = vmatprep.subr.bf16.mxu0 0
        %2656 = vmatpush1.bf16.xpose.msra.mxu0 0
        %2657 = vmatprep.subr.bf16.mxu0 0
        %2658 = vmatpush1.bf16.xpose.msra.mxu0 0
        %2659 = vmatprep.subr.bf16.mxu0 0
        %2660 = vmatpush1.bf16.xpose.msra.mxu0 0
        %2661 = vmatprep.mubr.bf16.mxu0 0
        %2662 = vmatmul.mubr.bf16.gmra.mrb[0].mxu0 %v2624
        %v2663 = vpop.f32.mrb[0].mxu0
        %v2664 = vadd.f32 0.0, %v2663
        %v2665 = vpop.f32.mrb[0].mxu0
        %v2666 = vpop.f32.mrb[0].mxu0
        %v2667 = vpop.f32.mrb[0].mxu0
        %2668 = vdwg.mxu0
        %v2669 = vmul.f32 %v2664, 0.35355338
        %v2670 = vsel %vm917, %v2669, -inf
        %2671 = vmax.xlane.f32.xlu0 %v2670
        %v2672 = vpop.xlane.xlu0 %2671
        %v2673 = vsub.f32 %v2669, %v2672
        %v2674 = vmul.f32 %v2673, 1.442695
        %v2675 = vpow.pop %v2674
        %v2676 = vsel %vm917, %v2675, 0.0
        %2677 = vadd.xlane.f32.xlu0 %v2676
        %v2678 = vpop.xlane.xlu0 %2677
        %v2679 = vrcp.pop %v2678
        %v2680 = vmul.f32 %v2675, %v2679
        %v2681 = vpack.c.bf16 %v2680, %v2680
        %2682 = vrot.lane.b32.xlu0 %v2144, 40
        %v2683 = vpop.permute.xlu0 %2682
        %v2685 = vsel %vm917, %v2681, 0
        %v2688 = vsel %vm982, %v2683, 0
        %2690 = vmatprep.subr.bf16.mxu0 0
        %2691 = vmatpush1.bf16.msra.mxu0 %v2688
        %2692 = vmatprep.subr.bf16.mxu0 0
        %2693 = vmatpush1.bf16.msra.mxu0 0
        %2694 = vmatprep.subr.bf16.mxu0 0
        %2695 = vmatpush1.bf16.msra.mxu0 0
        %2696 = vmatprep.subr.bf16.mxu0 0
        %2697 = vmatpush1.bf16.msra.mxu0 0
        %2698 = vmatprep.subr.bf16.mxu0 0
        %2699 = vmatpush1.bf16.msra.mxu0 0
        %2700 = vmatprep.subr.bf16.mxu0 0
        %2701 = vmatpush1.bf16.msra.mxu0 0
        %2702 = vmatprep.subr.bf16.mxu0 0
        %2703 = vmatpush1.bf16.msra.mxu0 0
        %2704 = vmatprep.subr.bf16.mxu0 0
        %2705 = vmatpush1.bf16.msra.mxu0 0
        %2706 = vmatprep.subr.bf16.mxu0 0
        %2707 = vmatpush1.bf16.msra.mxu0 0
        %2708 = vmatprep.subr.bf16.mxu0 0
        %2709 = vmatpush1.bf16.msra.mxu0 0
        %2710 = vmatprep.subr.bf16.mxu0 0
        %2711 = vmatpush1.bf16.msra.mxu0 0
        %2712 = vmatprep.subr.bf16.mxu0 0
        %2713 = vmatpush1.bf16.msra.mxu0 0
        %2714 = vmatprep.subr.bf16.mxu0 0
        %2715 = vmatpush1.bf16.msra.mxu0 0
        %2716 = vmatprep.subr.bf16.mxu0 0
        %2717 = vmatpush1.bf16.msra.mxu0 0
        %2718 = vmatprep.subr.bf16.mxu0 0
        %2719 = vmatpush1.bf16.msra.mxu0 0
        %2720 = vmatprep.subr.bf16.mxu0 0
        %2721 = vmatpush1.bf16.msra.mxu0 0
        %2722 = vmatprep.mubr.bf16.mxu0 0
        %2723 = vmatmul.mubr.bf16.gmra.mrb[0].mxu0 %v2685
        %v2724 = vpop.f32.mrb[0].mxu0
        %v2725 = vadd.f32 0.0, %v2724
        %v2726 = vpop.f32.mrb[0].mxu0
        %v2727 = vpop.f32.mrb[0].mxu0
        %v2728 = vpop.f32.mrb[0].mxu0
        %2729 = vdwg.mxu0
        %v2730 = vpack.c.bf16 %v2725, %v2725
        %v2732 = vsel %vm917, %v2730, 0
        %v2735 = vsel %vm982, %v2143, 0
        %2737 = vmatprep.subr.bf16.mxu0 0
        %2738 = vmatpush1.bf16.msra.mxu0 %v2735
        %2739 = vmatprep.subr.bf16.mxu0 0
        %2740 = vmatpush1.bf16.msra.mxu0 0
        %2741 = vmatprep.subr.bf16.mxu0 0
        %2742 = vmatpush1.bf16.msra.mxu0 0
        %2743 = vmatprep.subr.bf16.mxu0 0
        %2744 = vmatpush1.bf16.msra.mxu0 0
        %2745 = vmatprep.subr.bf16.mxu0 0
        %2746 = vmatpush1.bf16.msra.mxu0 0
        %2747 = vmatprep.subr.bf16.mxu0 0
        %2748 = vmatpush1.bf16.msra.mxu0 0
        %2749 = vmatprep.subr.bf16.mxu0 0
        %2750 = vmatpush1.bf16.msra.mxu0 0
        %2751 = vmatprep.subr.bf16.mxu0 0
        %2752 = vmatpush1.bf16.msra.mxu0 0
        %2753 = vmatprep.subr.bf16.mxu0 0
        %2754 = vmatpush1.bf16.msra.mxu0 0
        %2755 = vmatprep.subr.bf16.mxu0 0
        %2756 = vmatpush1.bf16.msra.mxu0 0
        %2757 = vmatprep.subr.bf16.mxu0 0
        %2758 = vmatpush1.bf16.msra.mxu0 0
        %2759 = vmatprep.subr.bf16.mxu0 0
        %2760 = vmatpush1.bf16.msra.mxu0 0
        %2761 = vmatprep.subr.bf16.mxu0 0
        %2762 = vmatpush1.bf16.msra.mxu0 0
        %2763 = vmatprep.subr.bf16.mxu0 0
        %2764 = vmatpush1.bf16.msra.mxu0 0
        %2765 = vmatprep.subr.bf16.mxu0 0
        %2766 = vmatpush1.bf16.msra.mxu0 0
        %2767 = vmatprep.subr.bf16.mxu0 0
        %2768 = vmatpush1.bf16.msra.mxu0 0
        %2769 = vmatprep.mubr.bf16.mxu0 0
        %2770 = vmatmul.mubr.bf16.gmra.mrb[0].mxu0 %v2732
        %v2771 = vpop.f32.mrb[0].mxu0
        %v2772 = vadd.f32 0.0, %v2771
        %v2773 = vpop.f32.mrb[0].mxu0
        %v2774 = vpop.f32.mrb[0].mxu0
        %v2775 = vpop.f32.mrb[0].mxu0
        %2776 = vdwg.mxu0
        %v2777 = vadd.f32 %v2618, %v2772
        %s2778 = scalar_lea.vmem [#allocation7], 1
        %v2779 = vld [vmem:[%s2778] sm:$0x1]
        %v2781 = vlaneseq
        %v2782 = vshrl.u32 %v2781, 7
        %v2783 = vsub.s32 0, %v2782
        %v2784 = vrot.slane %v2779, %v2783
        %v2786 = vadd.f32 %v2777, %v2784
        %v2787 = vadd.f32 %v2069, %v2786
        %s2788 = scalar_lea.vmem [#allocation8], 1
        %v2789 = vld [vmem:[%s2788] sm:$0x1]
        %s2790 = scalar_lea.vmem [#allocation10], 1
        %v2791 = vld [vmem:[%s2790] sm:$0x1]
        %v2792 = vsel %vm865, %v2787, 0.0
        %2793 = vadd.xlane.f32.xlu0 %v2792
        %v2794 = vpop.xlane.xlu0 %2793
        %v2795 = vmul.f32 %v2794, %v1563
        %v2796 = vsub.f32 %v2787, %v2795
        %v2797 = vmul.f32 %v2796, %v2796
        %v2798 = vsel %vm865, %v2797, 0.0
        %2799 = vadd.xlane.f32.xlu0 %v2798
        %v2800 = vpop.xlane.xlu0 %2799
        %v2801 = vmul.f32 %v2800, %v1563
        %v2802 = vadd.f32 %v2801, 1e-05
        %v2803 = vrsqrt.pop %v2802
        %v2804 = vmul.f32 %v2796, %v2803
        %v2806 = vlaneseq
        %v2807 = vshrl.u32 %v2806, 7
        %v2808 = vsub.s32 0, %v2807
        %v2809 = vrot.slane %v2789, %v2808
        %v2811 = vmul.f32 %v2804, %v2809
        %v2813 = vlaneseq
        %v2814 = vshrl.u32 %v2813, 7
        %v2815 = vsub.s32 0, %v2814
        %v2816 = vrot.slane %v2791, %v2815
        %v2818 = vadd.f32 %v2811, %v2816
        %s2819 = scalar_lea.vmem %s10, 16
        %v2820 = vld [vmem:[%s2819] sm:$0xf]
        %v2821 = vld [vmem:[%s2819 + $0x4] sm:$0xf]
        %v2822 = vld [vmem:[%s2819 + $0x8] sm:$0xf]
        %v2823 = vld [vmem:[%s2819 + $0xc] sm:$0xf]
        %v2824 = vpack.c.bf16 %v2818, %v2818
        %s2825 = scalar_lea.vmem [#allocation11], 1
        %v2826 = vld [vmem:[%s2825] sm:$0x1]
        %v2828 = vlaneseq
        %v2829 = vshrl.u32 %v2828, 7
        %v2830 = vsub.s32 0, %v2829
        %v2831 = vrot.slane %v2826, %v2830
        %v2837 = vunpack.c.l.b16 %v2820
        %v2838 = vunpack.c.l.b16 %v2821
        %v2839 = vunpack.c.l.b16 %v2822
        %v2840 = vunpack.c.l.b16 %v2823
        %v2841 = vpack.c.b16 %v2838, %v2837
        %v2842 = vpack.c.b16 %v2840, %v2839
        %v2846 = vsel %vm865, %v2824, 0
        %2848 = vmatprep.subr.bf16.mxu0 0
        %2849 = vmatpush1.bf16.msra.mxu0 %v2841
        %2850 = vmatprep.subr.bf16.mxu0 0
        %2851 = vmatpush1.bf16.msra.mxu0 %v2842
        %2852 = vmatprep.subr.bf16.mxu0 0
        %2853 = vmatpush1.bf16.msra.mxu0 0
        %2854 = vmatprep.subr.bf16.mxu0 0
        %2855 = vmatpush1.bf16.msra.mxu0 0
        %2856 = vmatprep.subr.bf16.mxu0 0
        %2857 = vmatpush1.bf16.msra.mxu0 0
        %2858 = vmatprep.subr.bf16.mxu0 0
        %2859 = vmatpush1.bf16.msra.mxu0 0
        %2860 = vmatprep.subr.bf16.mxu0 0
        %2861 = vmatpush1.bf16.msra.mxu0 0
        %2862 = vmatprep.subr.bf16.mxu0 0
        %2863 = vmatpush1.bf16.msra.mxu0 0
        %2864 = vmatprep.subr.bf16.mxu0 0
        %2865 = vmatpush1.bf16.msra.mxu0 0
        %2866 = vmatprep.subr.bf16.mxu0 0
        %2867 = vmatpush1.bf16.msra.mxu0 0
        %2868 = vmatprep.subr.bf16.mxu0 0
        %2869 = vmatpush1.bf16.msra.mxu0 0
        %2870 = vmatprep.subr.bf16.mxu0 0
        %2871 = vmatpush1.bf16.msra.mxu0 0
        %2872 = vmatprep.subr.bf16.mxu0 0
        %2873 = vmatpush1.bf16.msra.mxu0 0
        %2874 = vmatprep.subr.bf16.mxu0 0
        %2875 = vmatpush1.bf16.msra.mxu0 0
        %2876 = vmatprep.subr.bf16.mxu0 0
        %2877 = vmatpush1.bf16.msra.mxu0 0
        %2878 = vmatprep.subr.bf16.mxu0 0
        %2879 = vmatpush1.bf16.msra.mxu0 0
        %2880 = vmatprep.mubr.bf16.mxu0 0
        %2881 = vmatmul.mubr.bf16.gmra.mrb[0].mxu0 %v2846
        %v2882 = vpop.f32.mrb[0].mxu0
        %v2883 = vadd.f32 %v2831, %v2882
        %v2884 = vpop.f32.mrb[0].mxu0
        %v2885 = vpop.f32.mrb[0].mxu0
        %v2886 = vpop.f32.mrb[0].mxu0
        %2887 = vdwg.mxu0
        %v2888 = vand.u32 2147483647, %v2883
        %vm2889 = vcmp.le.f32.partialorder %v2888, 0.7853982
        %vm2890 = vcmp.lt.s32.totalorder %v2883, 0
        %v2891 = vand.u32 %v2883, 2139095040
        %v2892 = vshrl.u32 %v2891, 23
        %v2893 = vsub.s32 %v2892, 127
        %v2894 = vand.u32 2147483647, %v2883
        %v2895 = vand.u32 %v2894, 8388607
        %v2896 = vor.u32 %v2895, 8388608
        %v2897 = vsub.s32 0, %v2896
        %v2898 = vadd.s32 %v2893, 1
        %vm2899 = vcmp.gt.s32.totalorder %v2898, 0
        %v2900 = vsel %vm2899, %v2898, 0
        %v2901 = vshrl.u32 %v2900, 5
        %v2902 = vand.u32 %v2900, 31
        %v2903 = vsub.s32 32, %v2902
        %v2904 = vshrl.u32 683565275, %v2903
        %v2905 = vshll.u32 683565275, %v2902
        %v2906 = vshrl.u32 2475754826, %v2903
        %v2907 = vor.u32 %v2905, %v2906
        %v2908 = vshll.u32 2475754826, %v2902
        %v2909 = vshrl.u32 2131351028, %v2903
        %v2910 = vor.u32 %v2908, %v2909
        %v2911 = vshll.u32 2131351028, %v2902
        %v2912 = vshrl.u32 2102212464, %v2903
        %v2913 = vor.u32 %v2911, %v2912
        %v2914 = vshll.u32 2102212464, %v2902
        %v2915 = vshrl.u32 920167782, %v2903
        %v2916 = vor.u32 %v2914, %v2915
        %v2917 = vshll.u32 920167782, %v2902
        %v2918 = vshrl.u32 1326507024, %v2903
        %v2919 = vor.u32 %v2917, %v2918
        %vm2920 = vcmp.lt.s32.totalorder %v2901, 1
        %vm2921 = vcmp.lt.s32.totalorder %v2901, 2
        %vm2922 = vcmp.lt.s32.totalorder %v2901, 3
        %vm2923 = vcmp.lt.s32.totalorder %v2901, 4
        %v2924 = vsel %vm2920, %v2904, %v2907
        %v2925 = vsel %vm2923, %v2913, 2102212464
        %v2926 = vsel %vm2922, %v2910, %v2925
        %v2927 = vsel %vm2921, %v2924, %v2926
        %v2928 = vsel %vm2920, %v2907, %v2910
        %v2929 = vsel %vm2923, %v2916, 920167782
        %v2930 = vsel %vm2922, %v2913, %v2929
        %v2931 = vsel %vm2921, %v2928, %v2930
        %v2932 = vsel %vm2920, %v2910, %v2913
        %v2933 = vsel %vm2923, %v2919, 1326507024
        %v2934 = vsel %vm2922, %v2916, %v2933
        %v2935 = vsel %vm2921, %v2932, %v2934
        %v2936 = vshll.u32 %v2896, 8
        %v2937 = vmul.u32.u64.compose %v2936, %v2935
        %v2938 = vextract.low.u32 %v2937
        %v2939 = vextract.high.u32 %v2937
        %v2940 = vmul.u32.u64.compose %v2936, %v2931
        %v2941 = vextract.low.u32 %v2940
        %v2942 = vextract.high.u32 %v2940
        %v2943 = vmul.u32 %v2936, %v2927
        %v2944 = vadd.s32 %v2939, %v2941
        %vm2945 = vc.u32 %v2939, %v2941
        %v2946 = vadd.s32 %v2942, 1
        %v2947 = vsel %vm2945, %v2946, %v2942
        %v2948 = vadd.s32 %v2943, %v2947
        %v2949 = vadd.s32 %v2948, 536870912
        %v2950 = vshrl.u32 %v2949, 30
        %v2951 = vshll.u32 %v2950, 30
        %v2952 = vsub.s32 %v2948, %v2951
        %vm2953 = vcmp.lt.s32.totalorder %v2952, 0
        %v2954 = vsub.s32 0, %v2952
        %v2955 = vsel %vm2953, %v2954, %v2952
        %v2956 = vclz %v2955
        %v2957 = vsub.s32 %v2956, 2
        %vm2958 = vcmp.gt.s32.totalorder 0, %v2957
        %v2959 = vsel %vm2958, 0, %v2957
        %v2960 = vsub.s32 32, %v2959
        %v2961 = vshll.u32 %v2952, %v2959
        %v2962 = vshrl.u32 %v2944, %v2960
        %v2963 = vor.u32 %v2961, %v2962
        %v2964 = vsub.s32 4294967266, %v2959
        %v2965 = vadd.s32 %v2964, 127
        %v2966 = vshll.u32 %v2965, 23
        %v2967 = vor.u32 4788187, %v2966
        %v2968 = vand.u32 2147483647, %v2967
        %v2970 = vcvt.s32.f32 %v2963
        %v2971 = vmul.f32 %v2970, %v2968
        %v2972 = vxor.u32 %v2971, 2147483648
        %v2973 = vsel %vm2890, %v2972, %v2971
        %v2974 = vsub.s32 4, %v2950
        %v2975 = vsel %vm2890, %v2974, %v2950
        %v2976 = vsel %vm2889, %v2883, %v2973
        %v2977 = vsel %vm2889, 0, %v2975
        %v2978 = vcosq.f32.pop %v2976
        %v2979 = vsinq.f32.pop %v2976
        %vm2980 = vweird.f32 %v2883
        %v2981 = vand.u32 %v2977, 3
        %vm2982 = vcmp.lt.s32.totalorder %v2981, 2
        %vm2983 = vcmp.eq.s32.totalorder %v2981, 0
        %v2984 = vxor.u32 %v2979, 2147483648
        %v2985 = vsel %vm2983, %v2978, %v2984
        %vm2986 = vcmp.eq.s32.totalorder %v2981, 2
        %v2987 = vxor.u32 %v2978, 2147483648
        %v2988 = vsel %vm2986, %v2987, %v2979
        %v2989 = vsel %vm2982, %v2985, %v2988
        %v2990 = vsel %vm2980, nan, %v2989
        %s2991 = scalar_lea.vmem [#allocation13], 8
        %v2992 = vld [vmem:[%s2991] sm:$0xf]
        %v2993 = vld [vmem:[%s2991 + $0x4] sm:$0xf]
        %v2994 = vpack.c.bf16 %v2990, %v2990
        %v2995 = vand.u32 2147483647, %v2883
        %vm2996 = vcmp.le.f32.partialorder %v2995, 0.7853982
        %vm2997 = vcmp.lt.s32.totalorder %v2883, 0
        %v2998 = vand.u32 %v2883, 2139095040
        %v2999 = vshrl.u32 %v2998, 23
        %v3000 = vsub.s32 %v2999, 127
        %v3001 = vand.u32 2147483647, %v2883
        %v3002 = vand.u32 %v3001, 8388607
        %v3003 = vor.u32 %v3002, 8388608
        %v3004 = vsub.s32 0, %v3003
        %v3005 = vadd.s32 %v3000, 1
        %vm3006 = vcmp.gt.s32.totalorder %v3005, 0
        %v3007 = vsel %vm3006, %v3005, 0
        %v3008 = vshrl.u32 %v3007, 5
        %v3009 = vand.u32 %v3007, 31
        %v3010 = vsub.s32 32, %v3009
        %v3011 = vshrl.u32 683565275, %v3010
        %v3012 = vshll.u32 683565275, %v3009
        %v3013 = vshrl.u32 2475754826, %v3010
        %v3014 = vor.u32 %v3012, %v3013
        %v3015 = vshll.u32 2475754826, %v3009
        %v3016 = vshrl.u32 2131351028, %v3010
        %v3017 = vor.u32 %v3015, %v3016
        %v3018 = vshll.u32 2131351028, %v3009
        %v3019 = vshrl.u32 2102212464, %v3010
        %v3020 = vor.u32 %v3018, %v3019
        %v3021 = vshll.u32 2102212464, %v3009
        %v3022 = vshrl.u32 920167782, %v3010
        %v3023 = vor.u32 %v3021, %v3022
        %v3024 = vshll.u32 920167782, %v3009
        %v3025 = vshrl.u32 1326507024, %v3010
        %v3026 = vor.u32 %v3024, %v3025
        %vm3027 = vcmp.lt.s32.totalorder %v3008, 1
        %vm3028 = vcmp.lt.s32.totalorder %v3008, 2
        %vm3029 = vcmp.lt.s32.totalorder %v3008, 3
        %vm3030 = vcmp.lt.s32.totalorder %v3008, 4
        %v3031 = vsel %vm3027, %v3011, %v3014
        %v3032 = vsel %vm3030, %v3020, 2102212464
        %v3033 = vsel %vm3029, %v3017, %v3032
        %v3034 = vsel %vm3028, %v3031, %v3033
        %v3035 = vsel %vm3027, %v3014, %v3017
        %v3036 = vsel %vm3030, %v3023, 920167782
        %v3037 = vsel %vm3029, %v3020, %v3036
        %v3038 = vsel %vm3028, %v3035, %v3037
        %v3039 = vsel %vm3027, %v3017, %v3020
        %v3040 = vsel %vm3030, %v3026, 1326507024
        %v3041 = vsel %vm3029, %v3023, %v3040
        %v3042 = vsel %vm3028, %v3039, %v3041
        %v3043 = vshll.u32 %v3003, 8
        %v3044 = vmul.u32.u64.compose %v3043, %v3042
        %v3045 = vextract.low.u32 %v3044
        %v3046 = vextract.high.u32 %v3044
        %v3047 = vmul.u32.u64.compose %v3043, %v3038
        %v3048 = vextract.low.u32 %v3047
        %v3049 = vextract.high.u32 %v3047
        %v3050 = vmul.u32 %v3043, %v3034
        %v3051 = vadd.s32 %v3046, %v3048
        %vm3052 = vc.u32 %v3046, %v3048
        %v3053 = vadd.s32 %v3049, 1
        %v3054 = vsel %vm3052, %v3053, %v3049
        %v3055 = vadd.s32 %v3050, %v3054
        %v3056 = vadd.s32 %v3055, 536870912
        %v3057 = vshrl.u32 %v3056, 30
        %v3058 = vshll.u32 %v3057, 30
        %v3059 = vsub.s32 %v3055, %v3058
        %vm3060 = vcmp.lt.s32.totalorder %v3059, 0
        %v3061 = vsub.s32 0, %v3059
        %v3062 = vsel %vm3060, %v3061, %v3059
        %v3063 = vclz %v3062
        %v3064 = vsub.s32 %v3063, 2
        %vm3065 = vcmp.gt.s32.totalorder 0, %v3064
        %v3066 = vsel %vm3065, 0, %v3064
        %v3067 = vsub.s32 32, %v3066
        %v3068 = vshll.u32 %v3059, %v3066
        %v3069 = vshrl.u32 %v3051, %v3067
        %v3070 = vor.u32 %v3068, %v3069
        %v3071 = vsub.s32 4294967266, %v3066
        %v3072 = vadd.s32 %v3071, 127
        %v3073 = vshll.u32 %v3072, 23
        %v3074 = vor.u32 4788187, %v3073
        %v3075 = vand.u32 2147483647, %v3074
        %v3077 = vcvt.s32.f32 %v3070
        %v3078 = vmul.f32 %v3077, %v3075
        %v3079 = vxor.u32 %v3078, 2147483648
        %v3080 = vsel %vm2997, %v3079, %v3078
        %v3081 = vsub.s32 4, %v3057
        %v3082 = vsel %vm2997, %v3081, %v3057
        %v3083 = vsel %vm2996, %v2883, %v3080
        %v3084 = vsel %vm2996, 0, %v3082
        %v3085 = vcosq.f32.pop %v3083
        %v3086 = vsinq.f32.pop %v3083
        %vm3087 = vweird.f32 %v2883
        %v3088 = vadd.s32 %v3084, 3
        %v3089 = vand.u32 %v3088, 3
        %vm3090 = vcmp.lt.s32.totalorder %v3089, 2
        %vm3091 = vcmp.eq.s32.totalorder %v3089, 0
        %v3092 = vxor.u32 %v3086, 2147483648
        %v3093 = vsel %vm3091, %v3085, %v3092
        %vm3094 = vcmp.eq.s32.totalorder %v3089, 2
        %v3095 = vxor.u32 %v3085, 2147483648
        %v3096 = vsel %vm3094, %v3095, %v3086
        %v3097 = vsel %vm3090, %v3093, %v3096
        %v3098 = vsel %vm3087, nan, %v3097
        %s3099 = scalar_lea.vmem %s13, 8
        %v3100 = vld [vmem:[%s3099] sm:$0xf]
        %v3101 = vld [vmem:[%s3099 + $0x4] sm:$0xf]
        %v3102 = vpack.c.bf16 %v3098, %v3098
        %v3105 = vunpack.c.l.b16 %v3100
        %v3106 = vunpack.c.l.b16 %v3101
        %v3107 = vpack.c.b16 %v3106, %v3105
        %v3110 = vsel %vm1874, %v3102, 0
        %3112 = vmatprep.subr.bf16.mxu0 0
        %3113 = vmatpush1.bf16.msra.mxu0 %v3107
        %3114 = vmatprep.subr.bf16.mxu0 0
        %3115 = vmatpush1.bf16.msra.mxu0 0
        %3116 = vmatprep.subr.bf16.mxu0 0
        %3117 = vmatpush1.bf16.msra.mxu0 0
        %3118 = vmatprep.subr.bf16.mxu0 0
        %3119 = vmatpush1.bf16.msra.mxu0 0
        %3120 = vmatprep.subr.bf16.mxu0 0
        %3121 = vmatpush1.bf16.msra.mxu0 0
        %3122 = vmatprep.subr.bf16.mxu0 0
        %3123 = vmatpush1.bf16.msra.mxu0 0
        %3124 = vmatprep.subr.bf16.mxu0 0
        %3125 = vmatpush1.bf16.msra.mxu0 0
        %3126 = vmatprep.subr.bf16.mxu0 0
        %3127 = vmatpush1.bf16.msra.mxu0 0
        %3128 = vmatprep.subr.bf16.mxu0 0
        %3129 = vmatpush1.bf16.msra.mxu0 0
        %3130 = vmatprep.subr.bf16.mxu0 0
        %3131 = vmatpush1.bf16.msra.mxu0 0
        %3132 = vmatprep.subr.bf16.mxu0 0
        %3133 = vmatpush1.bf16.msra.mxu0 0
        %3134 = vmatprep.subr.bf16.mxu0 0
        %3135 = vmatpush1.bf16.msra.mxu0 0
        %3136 = vmatprep.subr.bf16.mxu0 0
        %3137 = vmatpush1.bf16.msra.mxu0 0
        %3138 = vmatprep.subr.bf16.mxu0 0
        %3139 = vmatpush1.bf16.msra.mxu0 0
        %3140 = vmatprep.subr.bf16.mxu0 0
        %3141 = vmatpush1.bf16.msra.mxu0 0
        %3142 = vmatprep.subr.bf16.mxu0 0
        %3143 = vmatpush1.bf16.msra.mxu0 0
        %3144 = vmatprep.mubr.bf16.mxu0 0
        %3145 = vmatmul.mubr.bf16.gmra.mrb[0].mxu0 %v3110
        %v3146 = vpop.f32.mrb[0].mxu0
        %v3147 = vadd.f32 0.0, %v3146
        %v3148 = vpop.f32.mrb[0].mxu0
        %v3149 = vpop.f32.mrb[0].mxu0
        %v3150 = vpop.f32.mrb[0].mxu0
        %3151 = vdwg.mxu0
        %v3154 = vunpack.c.l.b16 %v2992
        %v3155 = vunpack.c.l.b16 %v2993
        %v3156 = vpack.c.b16 %v3155, %v3154
        %v3159 = vsel %vm1874, %v2994, 0
        %3161 = vmatprep.subr.bf16.mxu0 0
        %3162 = vmatpush1.bf16.msra.mxu0 %v3156
        %3163 = vmatprep.subr.bf16.mxu0 0
        %3164 = vmatpush1.bf16.msra.mxu0 0
        %3165 = vmatprep.subr.bf16.mxu0 0
        %3166 = vmatpush1.bf16.msra.mxu0 0
        %3167 = vmatprep.subr.bf16.mxu0 0
        %3168 = vmatpush1.bf16.msra.mxu0 0
        %3169 = vmatprep.subr.bf16.mxu0 0
        %3170 = vmatpush1.bf16.msra.mxu0 0
        %3171 = vmatprep.subr.bf16.mxu0 0
        %3172 = vmatpush1.bf16.msra.mxu0 0
        %3173 = vmatprep.subr.bf16.mxu0 0
        %3174 = vmatpush1.bf16.msra.mxu0 0
        %3175 = vmatprep.subr.bf16.mxu0 0
        %3176 = vmatpush1.bf16.msra.mxu0 0
        %3177 = vmatprep.subr.bf16.mxu0 0
        %3178 = vmatpush1.bf16.msra.mxu0 0
        %3179 = vmatprep.subr.bf16.mxu0 0
        %3180 = vmatpush1.bf16.msra.mxu0 0
        %3181 = vmatprep.subr.bf16.mxu0 0
        %3182 = vmatpush1.bf16.msra.mxu0 0
        %3183 = vmatprep.subr.bf16.mxu0 0
        %3184 = vmatpush1.bf16.msra.mxu0 0
        %3185 = vmatprep.subr.bf16.mxu0 0
        %3186 = vmatpush1.bf16.msra.mxu0 0
        %3187 = vmatprep.subr.bf16.mxu0 0
        %3188 = vmatpush1.bf16.msra.mxu0 0
        %3189 = vmatprep.subr.bf16.mxu0 0
        %3190 = vmatpush1.bf16.msra.mxu0 0
        %3191 = vmatprep.subr.bf16.mxu0 0
        %3192 = vmatpush1.bf16.msra.mxu0 0
        %3193 = vmatprep.mubr.bf16.mxu0 0
        %3194 = vmatmul.mubr.bf16.gmra.mrb[0].mxu0 %v3159
        %v3195 = vpop.f32.mrb[0].mxu0
        %v3196 = vadd.f32 %v3147, %v3195
        %v3197 = vpop.f32.mrb[0].mxu0
        %v3198 = vpop.f32.mrb[0].mxu0
        %v3199 = vpop.f32.mrb[0].mxu0
        %3200 = vdwg.mxu0
        %v3201 = vmax.f32 %v2883, 0.0
        %s3202 = scalar_lea.vmem %s14, 16
        %v3203 = vld [vmem:[%s3202] sm:$0xf]
        %v3204 = vld [vmem:[%s3202 + $0x4] sm:$0xf]
        %v3205 = vld [vmem:[%s3202 + $0x8] sm:$0xf]
        %v3206 = vld [vmem:[%s3202 + $0xc] sm:$0xf]
        %v3207 = vpack.c.bf16 %v3201, %v3201
        %3209 = vrot.lane.b32.xlu0 %v3207, 112
        %v3210 = vpop.permute.xlu0 %3209
        %v3215 = vunpack.c.l.b16 %v3203
        %v3216 = vunpack.c.l.b16 %v3204
        %v3217 = vunpack.c.l.b16 %v3205
        %v3218 = vunpack.c.l.b16 %v3206
        %v3219 = vpack.c.b16 %v3216, %v3215
        %v3220 = vpack.c.b16 %v3218, %v3217
        %v3224 = vsel %vm865, %v3210, 0
        %3226 = vmatprep.subr.bf16.mxu0 0
        %3227 = vmatpush1.bf16.msra.mxu0 %v3219
        %3228 = vmatprep.subr.bf16.mxu0 0
        %3229 = vmatpush1.bf16.msra.mxu0 %v3220
        %3230 = vmatprep.subr.bf16.mxu0 0
        %3231 = vmatpush1.bf16.msra.mxu0 0
        %3232 = vmatprep.subr.bf16.mxu0 0
        %3233 = vmatpush1.bf16.msra.mxu0 0
        %3234 = vmatprep.subr.bf16.mxu0 0
        %3235 = vmatpush1.bf16.msra.mxu0 0
        %3236 = vmatprep.subr.bf16.mxu0 0
        %3237 = vmatpush1.bf16.msra.mxu0 0
        %3238 = vmatprep.subr.bf16.mxu0 0
        %3239 = vmatpush1.bf16.msra.mxu0 0
        %3240 = vmatprep.subr.bf16.mxu0 0
        %3241 = vmatpush1.bf16.msra.mxu0 0
        %3242 = vmatprep.subr.bf16.mxu0 0
        %3243 = vmatpush1.bf16.msra.mxu0 0
        %3244 = vmatprep.subr.bf16.mxu0 0
        %3245 = vmatpush1.bf16.msra.mxu0 0
        %3246 = vmatprep.subr.bf16.mxu0 0
        %3247 = vmatpush1.bf16.msra.mxu0 0
        %3248 = vmatprep.subr.bf16.mxu0 0
        %3249 = vmatpush1.bf16.msra.mxu0 0
        %3250 = vmatprep.subr.bf16.mxu0 0
        %3251 = vmatpush1.bf16.msra.mxu0 0
        %3252 = vmatprep.subr.bf16.mxu0 0
        %3253 = vmatpush1.bf16.msra.mxu0 0
        %3254 = vmatprep.subr.bf16.mxu0 0
        %3255 = vmatpush1.bf16.msra.mxu0 0
        %3256 = vmatprep.subr.bf16.mxu0 0
        %3257 = vmatpush1.bf16.msra.mxu0 0
        %3258 = vmatprep.mubr.bf16.mxu0 0
        %3259 = vmatmul.mubr.bf16.gmra.mrb[0].mxu0 %v3224
        %v3260 = vpop.f32.mrb[0].mxu0
        %v3261 = vadd.f32 0.0, %v3260
        %v3262 = vpop.f32.mrb[0].mxu0
        %v3263 = vpop.f32.mrb[0].mxu0
        %v3264 = vpop.f32.mrb[0].mxu0
        %3265 = vdwg.mxu0
        %v3266 = vadd.f32 %v3196, %v3261
        %s3267 = scalar_lea.vmem [#allocation14], 1
        %v3268 = vld [vmem:[%s3267] sm:$0x1]
        %v3270 = vlaneseq
        %v3271 = vshrl.u32 %v3270, 7
        %v3272 = vsub.s32 0, %v3271
        %v3273 = vrot.slane %v3268, %v3272
        %v3275 = vadd.f32 %v3266, %v3273
        %v3276 = vadd.f32 %v2818, %v3275
        %s3277 = scalar_lea.vmem [#allocation16], 1
        %v3278 = vld [vmem:[%s3277] sm:$0x1]
        %s3279 = scalar_lea.vmem [#allocation17], 1
        %v3280 = vld [vmem:[%s3279] sm:$0x1]
        %v3281 = vsel %vm865, %v3276, 0.0
        %3282 = vadd.xlane.f32.xlu0 %v3281
        %v3283 = vpop.xlane.xlu0 %3282
        %v3284 = vmul.f32 %v3283, %v1563
        %v3285 = vsub.f32 %v3276, %v3284
        %v3286 = vmul.f32 %v3285, %v3285
        %v3287 = vsel %vm865, %v3286, 0.0
        %3288 = vadd.xlane.f32.xlu0 %v3287
        %v3289 = vpop.xlane.xlu0 %3288
        %v3290 = vmul.f32 %v3289, %v1563
        %v3291 = vadd.f32 %v3290, 1e-05
        %v3292 = vrsqrt.pop %v3291
        %v3293 = vmul.f32 %v3285, %v3292
        %v3295 = vlaneseq
        %v3296 = vshrl.u32 %v3295, 7
        %v3297 = vsub.s32 0, %v3296
        %v3298 = vrot.slane %v3278, %v3297
        %v3300 = vmul.f32 %v3293, %v3298
        %v3302 = vlaneseq
        %v3303 = vshrl.u32 %v3302, 7
        %v3304 = vsub.s32 0, %v3303
        %v3305 = vrot.slane %v3280, %v3304
        %v3307 = vadd.f32 %v3300, %v3305
        %v3308 = vld [vmem:[%s18] sm:$0xf]
        %v3309 = vld [vmem:[%s18 + $0x4] sm:$0xf]
        %v3310 = vld [vmem:[%s18 + $0x8] sm:$0xf]
        %v3311 = vld [vmem:[%s18 + $0xc] sm:$0xf]
        %v3312 = vpack.c.bf16 %v3307, %v3307
        %v3313 = vld [vmem:[#allocation19] sm:$0x1]
        %v3315 = vshrl.u32 %v3312, 16
        %v3317 = vrot.slane %v3315, 3
        %v3322 = vunpack.c.l.b16 %v3308
        %v3323 = vunpack.c.l.b16 %v3309
        %v3324 = vunpack.c.l.b16 %v3310
        %v3325 = vunpack.c.l.b16 %v3311
        %v3326 = vpack.c.b16 %v3323, %v3322
        %v3327 = vpack.c.b16 %v3325, %v3324
        %v3331 = vsel %vm865, %v3317, 0
        %3333 = vmatprep.subr.bf16.mxu0 0
        %3334 = vmatpush1.bf16.msra.mxu0 %v3326
        %3335 = vmatprep.subr.bf16.mxu0 0
        %3336 = vmatpush1.bf16.msra.mxu0 %v3327
        %3337 = vmatprep.subr.bf16.mxu0 0
        %3338 = vmatpush1.bf16.msra.mxu0 0
        %3339 = vmatprep.subr.bf16.mxu0 0
        %3340 = vmatpush1.bf16.msra.mxu0 0
        %3341 = vmatprep.subr.bf16.mxu0 0
        %3342 = vmatpush1.bf16.msra.mxu0 0
        %3343 = vmatprep.subr.bf16.mxu0 0
        %3344 = vmatpush1.bf16.msra.mxu0 0
        %3345 = vmatprep.subr.bf16.mxu0 0
        %3346 = vmatpush1.bf16.msra.mxu0 0
        %3347 = vmatprep.subr.bf16.mxu0 0
        %3348 = vmatpush1.bf16.msra.mxu0 0
        %3349 = vmatprep.subr.bf16.mxu0 0
        %3350 = vmatpush1.bf16.msra.mxu0 0
        %3351 = vmatprep.subr.bf16.mxu0 0
        %3352 = vmatpush1.bf16.msra.mxu0 0
        %3353 = vmatprep.subr.bf16.mxu0 0
        %3354 = vmatpush1.bf16.msra.mxu0 0
        %3355 = vmatprep.subr.bf16.mxu0 0
        %3356 = vmatpush1.bf16.msra.mxu0 0
        %3357 = vmatprep.subr.bf16.mxu0 0
        %3358 = vmatpush1.bf16.msra.mxu0 0
        %3359 = vmatprep.subr.bf16.mxu0 0
        %3360 = vmatpush1.bf16.msra.mxu0 0
        %3361 = vmatprep.subr.bf16.mxu0 0
        %3362 = vmatpush1.bf16.msra.mxu0 0
        %3363 = vmatprep.subr.bf16.mxu0 0
        %3364 = vmatpush1.bf16.msra.mxu0 0
        %3365 = vmatprep.mubr.bf16.mxu0 0
        %3366 = vmatmul.mubr.bf16.gmra.mrb[0].mxu0 %v3331
        %v3367 = vpop.f32.mrb[0].mxu0
        %v3368 = vadd.f32 %v3313, %v3367
        %v3369 = vpop.f32.mrb[0].mxu0
        %v3370 = vpop.f32.mrb[0].mxu0
        %v3371 = vpop.f32.mrb[0].mxu0
        %3372 = vdwg.mxu0
        %vm3373 = vcmask 24576
        %3374 = vst.msk [vmem:[%s775] sm:$0x1] %vm3373, %v3368
        %s3375 = sand.u32 %s473, 1
        %s3376 = scalar_lea.sflag [#allocation4], %s3375
        %s3377 = sand.u32 %s473, 1
        %s3378 = scalar_lea.vmem [#allocation20], %s3377
        // Predicated region
        $region145: #{forward.1} parent=99 // pred_check
          %p3379 = pneg %p483
        $region146: #{forward.1} parent=99 // pred_check_branch
          %3381 = sbr.rel (%p3379) target = $region148
        $region147: #{forward.1} parent=99 // pred_region
          %s3383 = ssub.s32 16, 16
          %3384 = vsyncadd %s3376, %s3383
          %s3385 = smul.addr %s40, 16
          %s3386 = scalar_lea.hbm %s20, %s3385
          %s3388 = sshll.u32 %s3378, 4
          %s3389 = int_to_ptr.vmem [resolvable:$true] %s3388
          %3391 = dma.vmem_to_hbm [thread:$0]  %s3389, 16, %s3386, %s3376
        $region148: #{forward.1} parent=99 // pred_fallthru
          _
      $region100: #{forward.1} parent=5 // pred_fallthru
        _
      %p3392 = scmp.le.s32.totalorder 2, %s35
      // Predicated region
      $region149: #{forward.1} parent=5 // pred_check
        %p3393 = pneg %p3392
      $region150: #{forward.1} parent=5 // pred_check_branch
        %3395 = sbr.rel (%p3393) target = $region152
      $region151: #{forward.1} parent=5 // pred_region
        %s3396 = ssub.s32 %s35, 2
        // Predicated region
        $region153: #{forward.1} parent=151 // pred_check
          %p3397 = pneg %p489
        $region154: #{forward.1} parent=151 // pred_check_branch
          %3399 = sbr.rel (%p3397) target = $region156
        $region155: #{forward.1} parent=151 // pred_region
          %s3400 = sand.u32 %s474, 1
          %s3401 = scalar_lea.sflag [#allocation4], %s3400
          %s3402 = sand.u32 %s474, 1
          %s3403 = scalar_lea.vmem [#allocation20], %s3402
          %3404 = dma.done %s3401, 16
        $region156: #{forward.1} parent=151 // pred_fallthru
          _
      $region152: #{forward.1} parent=5 // pred_fallthru
        _
    $region6: #{forward.1} parent=1 // loop_footer
      %s39 = sadd.s32 1, %s35
    $region7: #{forward.1} parent=1 // loop_footer_branch
      %34 = sbr.rel target = $region3
    $region8: #{forward.1} parent=1 // loop_exit
      _
    %3405 = vsyncpa [#allocation3], 1
    %s3406 = scalar_lea.sflag [#allocation3], 1
    %3407 = vsyncpa %s3406, 1
    %3408 = vsyncpa [#allocation6], 1
    %3409 = vsyncpa [#allocation9], 1
    %3410 = vsyncpa [#allocation12], 1
    %3411 = vsyncpa [#allocation15], 1
    %3412 = vsyncpa [#allocation18], 1
    %3413 = vsyncpa [#allocation4], 1
    %s3414 = scalar_lea.sflag [#allocation4], 1
    %3415 = vsyncpa %s3414, 1

</llo_original>
